<compile_context>
chip_gen: v7x
topology: tpu7x:2x2x1
jax: 0.10.0
libtpu: 0.0.40
codegen_flags: <defaults>
</compile_context>

<pallas_src>
import functools
import math

import jax
import jax.numpy as jnp
import numpy as np
from jax.experimental import pallas as pl
from jax.experimental.pallas import tpu as pltpu

EPS = 1e-6          # LayerNormalization eps
NEG_INF = -1e9      # masked_fill value


def _layer_norm(x, alpha, bias):
    # PyTorch LayerNormalization: mean and *unbiased* std (/(d-1)) over the
    # last dim, scalar alpha / bias, divide by (std + eps).  Keep the
    # (std + eps) formulation; use an EUP reciprocal instead of a VPU divide.
    d = x.shape[-1]
    mean = jnp.mean(x, axis=-1, keepdims=True)
    var = jnp.sum((x - mean) ** 2, axis=-1, keepdims=True) / (d - 1)
    inv = pl.reciprocal(jnp.sqrt(var) + EPS, approx=True)
    return alpha * (x - mean) * inv + bias


def _attention(q, k, v, bias, h):
    """Batched-head attention for ONE batch element.

    q: (Sq, D) fp32, already scaled by 1/sqrt(dk).  k, v: (Sk, D) fp32.
    bias: (Sq, Sk) or (1, Sk) fp32 additive mask.  Returns (Sq, D) fp32.
    """
    Sq, D = q.shape
    Sk = k.shape[0]
    dk = D // h
    bf16 = jnp.bfloat16
    qh = jnp.transpose(q.reshape(Sq, h, dk), (1, 0, 2)).astype(bf16)  # (h,Sq,dk)
    kh = jnp.transpose(k.reshape(Sk, h, dk), (1, 0, 2)).astype(bf16)  # (h,Sk,dk)
    vh = jnp.transpose(v.reshape(Sk, h, dk), (1, 0, 2)).astype(bf16)  # (h,Sk,dk)
    s = jnp.einsum('hqd,hkd->hqk', qh, kh,
                   preferred_element_type=jnp.float32)                # fp32 scores
    s = s + bias[None]
    m = jnp.max(s, axis=-1, keepdims=True)
    p = jnp.exp(s - m)
    denom = jnp.sum(p, axis=-1, keepdims=True)
    p = p * pl.reciprocal(denom, approx=True)                         # EUP, no divide
    ctx = jnp.einsum('hqk,hkd->hqd', p.astype(bf16), vh,
                     preferred_element_type=jnp.float32)              # (h,Sq,dk)
    return jnp.transpose(ctx, (1, 0, 2)).reshape(Sq, D)


def decoder_kernel(ln_a_ref, ln_b_ref, fin_ref,               # SMEM scalars
                   x_ref, enc_ref, smask_ref, tmask_ref,      # per-chunk blocks
                   wqkv_s_ref, wo_s_ref, wq_x_ref, wkv_x_ref, wo_x_ref,
                   w1b_ref, w2b_ref,                          # per-layer blocks (bf16)
                   out_ref,
                   x_vm, enc_bf_vm, sbias_vm, cbias_vm, *, h):
    l = pl.program_id(1)
    n_layers = pl.num_programs(1)
    bb, S, D = x_ref.shape
    s_src = enc_ref.shape[1]
    dk = D // h
    scale = 1.0 / math.sqrt(dk)
    bf16 = jnp.bfloat16
    f32 = jnp.float32

    @pl.when(l == 0)
    def _init():
        x_vm[...] = x_ref[...].reshape(bb * S, D)
        # Encoder output cast to bf16 once and kept resident for all layers.
        enc_bf_vm[...] = enc_ref[...].reshape(bb * s_src, D).astype(bf16)
        # Hoisted mask handling: additive biases computed once per chunk.
        sbias_vm[...] = jnp.where(tmask_ref[...] == 0.0, NEG_INF, 0.0)
        cbias_vm[...] = jnp.where(smask_ref[...] == 0.0, NEG_INF, 0.0)

    x = x_vm[...]                                       # (bb*S, D) fp32, VMEM-resident

    # ---- residual block 0: masked self-attention ----
    xn = _layer_norm(x, ln_a_ref[l, 0], ln_b_ref[l, 0])
    qkv = jnp.dot(xn.astype(bf16), wqkv_s_ref[0],
                  preferred_element_type=f32)           # (bb*S, 3D), one GEMM for chunk
    q_all = qkv[:, 0:D] * scale                         # fold 1/sqrt(dk) into q
    ctxs = []
    for b in range(bb):                                 # static unroll: mask differs per b
        r0, r1 = b * S, (b + 1) * S
        ctxs.append(_attention(q_all[r0:r1],
                               qkv[r0:r1, D:2 * D],
                               qkv[r0:r1, 2 * D:3 * D],
                               sbias_vm[b], h))
    ctx = jnp.concatenate(ctxs, axis=0)                 # (bb*S, D)
    x = x + jnp.dot(ctx.astype(bf16), wo_s_ref[0], preferred_element_type=f32)

    # ---- residual block 1: cross-attention (K/V from raw encoder output) ----
    xn = _layer_norm(x, ln_a_ref[l, 1], ln_b_ref[l, 1])
    q = jnp.dot(xn.astype(bf16), wq_x_ref[0], preferred_element_type=f32) * scale
    kv = jnp.dot(enc_bf_vm[...], wkv_x_ref[0],
                 preferred_element_type=f32)            # (bb*S_src, 2D), one GEMM
    ctxs = []
    for b in range(bb):
        r0, r1 = b * S, (b + 1) * S
        e0, e1 = b * s_src, (b + 1) * s_src
        ctxs.append(_attention(q[r0:r1],
                               kv[e0:e1, 0:D], kv[e0:e1, D:2 * D],
                               cbias_vm[b], h))
    ctx = jnp.concatenate(ctxs, axis=0)
    x = x + jnp.dot(ctx.astype(bf16), wo_x_ref[0], preferred_element_type=f32)

    # ---- residual block 2: feed-forward (biases packed in the weight block) ----
    xn = _layer_norm(x, ln_a_ref[l, 2], ln_b_ref[l, 2])
    w1b = w1b_ref[0]                                    # (D+1, DFF) bf16
    w2b = w2b_ref[0]                                    # (DFF+1, D) bf16
    dff = w2b.shape[0] - 1
    h1 = jnp.maximum(
        jnp.dot(xn.astype(bf16), w1b[:D], preferred_element_type=f32)
        + w1b[D:D + 1].astype(f32), 0.0)
    y = jnp.dot(h1.astype(bf16), w2b[:dff], preferred_element_type=f32) \
        + w2b[dff:dff + 1].astype(f32)
    x = x + y

    x_vm[...] = x                                       # carry to next layer

    @pl.when(l == n_layers - 1)
    def _finalize():
        out_ref[...] = _layer_norm(x, fin_ref[0], fin_ref[1]).reshape(bb, S, D)


def decoder_forward(x, enc, src_mask, trg_mask, params, h, *, batch_block=None):
    """x:(B,S,D)  enc:(B,S_src,D)  src_mask:(B,1,S_src)  trg_mask:(B,S,S)."""
    B, S, D = x.shape
    S_src = enc.shape[1]
    L = params['wqkv_self'].shape[0]
    bb = B if batch_block is None else min(batch_block, B)
    assert B % bb == 0

    bf16 = jnp.bfloat16
    # Weights streamed through HBM in bf16; FFN biases packed into the weight
    # blocks (one DMA per FFN matrix instead of two).
    wqkv_s = params['wqkv_self'].astype(bf16)
    wo_s = params['wo_self'].astype(bf16)
    wq_x = params['wq_cross'].astype(bf16)
    wkv_x = params['wkv_cross'].astype(bf16)
    wo_x = params['wo_cross'].astype(bf16)
    w1b = jnp.concatenate([params['w1'], params['b1']], axis=1).astype(bf16)  # (L, D+1, DFF)
    w2b = jnp.concatenate([params['w2'], params['b2']], axis=1).astype(bf16)  # (L, DFF+1, D)

    smem = pl.BlockSpec(memory_space=pltpu.MemorySpace.SMEM)

    def per_chunk(shape):
        nd = len(shape)
        return pl.BlockSpec((bb,) + tuple(shape[1:]),
                            lambda c, l, nd=nd: (c,) + (0,) * (nd - 1))

    def per_layer(shape):
        nd = len(shape)
        return pl.BlockSpec((1,) + tuple(shape[1:]),
                            lambda c, l, nd=nd: (l,) + (0,) * (nd - 1))

    call = pl.pallas_call(
        functools.partial(decoder_kernel, h=h),
        out_shape=jax.ShapeDtypeStruct((B, S, D), x.dtype),
        grid=(B // bb, L),
        in_specs=[smem, smem, smem,
                  per_chunk(x.shape), per_chunk(enc.shape),
                  per_chunk(src_mask.shape), per_chunk(trg_mask.shape),
                  per_layer(wqkv_s.shape), per_layer(wo_s.shape),
                  per_layer(wq_x.shape), per_layer(wkv_x.shape),
                  per_layer(wo_x.shape),
                  per_layer(w1b.shape), per_layer(w2b.shape)],
        out_specs=per_chunk((B, S, D)),
        scratch_shapes=[pltpu.VMEM((bb * S, D), jnp.float32),       # carried activation
                        pltpu.VMEM((bb * S_src, D), jnp.bfloat16),  # bf16 encoder output
                        pltpu.VMEM((bb, S, S), jnp.float32),        # self-attn mask bias
                        pltpu.VMEM((bb, 1, S_src), jnp.float32)],   # cross-attn mask bias
        compiler_params=pltpu.CompilerParams(
            dimension_semantics=("parallel", "arbitrary"),
            vmem_limit_bytes=48 * 1024 * 1024),
    )
    return call(params['ln_alpha'], params['ln_bias'], params['final_ln'],
                x, enc, src_mask, trg_mask,
                wqkv_s, wo_s, wq_x, wkv_x, wo_x, w1b, w2b)


# ----------------------------------------------------------------------------
# Pure-JAX reference mirroring the PyTorch forward (dropout = identity)
# ----------------------------------------------------------------------------
def decoder_ref(x, enc, src_mask, trg_mask, p, h):
    D = x.shape[-1]
    L = p['wqkv_self'].shape[0]

    def ln(z, a, b):
        d = z.shape[-1]
        m = jnp.mean(z, -1, keepdims=True)
        std = jnp.sqrt(jnp.sum((z - m) ** 2, -1, keepdims=True) / (d - 1))
        return a * (z - m) / (std + EPS) + b

    def mha(q_in, kv_in, mask, wq, wk, wv, wo):
        B, Sq, _ = q_in.shape
        Sk = kv_in.shape[1]
        dk = D // h
        q = q_in @ wq; k = kv_in @ wk; v = kv_in @ wv
        qh = q.reshape(B, Sq, h, dk).transpose(0, 2, 1, 3)
        kh = k.reshape(B, Sk, h, dk).transpose(0, 2, 1, 3)
        vh = v.reshape(B, Sk, h, dk).transpose(0, 2, 1, 3)
        s = (qh @ kh.transpose(0, 1, 3, 2)) / math.sqrt(dk)
        s = jnp.where(mask[:, None] == 0, NEG_INF, s)
        pr = jax.nn.softmax(s, axis=-1)
        ctx = (pr @ vh).transpose(0, 2, 1, 3).reshape(B, Sq, D)
        return ctx @ wo

    for l in range(L):
        wqkv = p['wqkv_self'][l]
        xn = ln(x, p['ln_alpha'][l, 0], p['ln_bias'][l, 0])
        x = x + mha(xn, xn, trg_mask,
                    wqkv[:, 0:D], wqkv[:, D:2 * D], wqkv[:, 2 * D:3 * D],
                    p['wo_self'][l])
        xn = ln(x, p['ln_alpha'][l, 1], p['ln_bias'][l, 1])
        wkv = p['wkv_cross'][l]
        x = x + mha(xn, enc, src_mask,
                    p['wq_cross'][l], wkv[:, 0:D], wkv[:, D:2 * D],
                    p['wo_cross'][l])
        xn = ln(x, p['ln_alpha'][l, 2], p['ln_bias'][l, 2])
        y = jnp.maximum(xn @ p['w1'][l] + p['b1'][l], 0.0) @ p['w2'][l] + p['b2'][l]
        x = x + y
    return ln(x, p['final_ln'][0], p['final_ln'][1])


if __name__ == "__main__":
    B, S, S_SRC, D, H, DFF, L = 2, 8, 8, 32, 4, 64, 2
    key = jax.random.PRNGKey(0)
    ks = jax.random.split(key, 12 * L + 2)

    sD = 1.0 / math.sqrt(D)
    sF = 1.0 / math.sqrt(DFF)

    def nrm(k, shape, s):
        return jax.random.normal(k, shape, jnp.float32) * s

    wqkv_s, wo_s, wq_x, wkv_x, wo_x = [], [], [], [], []
    w1, b1, w2, b2 = [], [], [], []
    for i in range(L):
        kk = ks[12 * i:12 * (i + 1)]
        wqkv_s.append(jnp.concatenate([nrm(kk[0], (D, D), sD),
                                       nrm(kk[1], (D, D), sD),
                                       nrm(kk[2], (D, D), sD)], axis=1))
        wo_s.append(nrm(kk[3], (D, D), sD))
        wq_x.append(nrm(kk[4], (D, D), sD))
        wkv_x.append(jnp.concatenate([nrm(kk[5], (D, D), sD),
                                      nrm(kk[6], (D, D), sD)], axis=1))
        wo_x.append(nrm(kk[7], (D, D), sD))
        w1.append(nrm(kk[8], (D, DFF), sD))
        b1.append(nrm(kk[9], (1, DFF), 0.02))
        w2.append(nrm(kk[10], (DFF, D), sF))
        b2.append(nrm(kk[11], (1, D), 0.02))

    params = {
        'wqkv_self': jnp.stack(wqkv_s),
        'wo_self': jnp.stack(wo_s),
        'wq_cross': jnp.stack(wq_x),
        'wkv_cross': jnp.stack(wkv_x),
        'wo_cross': jnp.stack(wo_x),
        'w1': jnp.stack(w1), 'b1': jnp.stack(b1),
        'w2': jnp.stack(w2), 'b2': jnp.stack(b2),
        # 3 residual-connection LayerNorms per layer (scalar alpha/bias each)
        'ln_alpha': 1.0 + 0.05 * jnp.arange(L * 3, dtype=jnp.float32).reshape(L, 3),
        'ln_bias': 0.02 * jnp.arange(L * 3, dtype=jnp.float32).reshape(L, 3),
        # final Decoder.norm: [alpha, bias]
        'final_ln': jnp.array([1.1, -0.03], jnp.float32),
    }

    x = jax.random.normal(ks[12 * L], (B, S, D), jnp.float32)
    enc = jax.random.normal(ks[12 * L + 1], (B, S_SRC, D), jnp.float32)

    # src_mask: (B,1,S_src), 0 = masked source key; trg_mask: (B,S,S) causal+pad
    src_mask = jnp.ones((B, 1, S_SRC), jnp.float32).at[1, 0, -2:].set(0.0)
    causal = jnp.tril(jnp.ones((S, S), jnp.float32))
    trg_mask = jnp.broadcast_to(causal, (B, S, S)).at[1, :, -2:].set(0.0)

    out = decoder_forward(x, enc, src_mask, trg_mask, params, H)
    out = jax.block_until_ready(out)
    assert out.shape == (B, S, D)

    # The kernel stores weights in bf16 (deployment precision); compare against
    # the fp32 reference evaluated with the same bf16-rounded weights so the
    # check isolates the kernel's activation / softmax / LayerNorm math.
    q16 = lambda a: a.astype(jnp.bfloat16).astype(jnp.float32)
    params_ref = dict(params)
    for name in ['wqkv_self', 'wo_self', 'wq_cross', 'wkv_cross', 'wo_cross',
                 'w1', 'b1', 'w2', 'b2']:
        params_ref[name] = q16(params[name])
    ref = decoder_ref(x, enc, src_mask, trg_mask, params_ref, H)

    np.testing.assert_allclose(np.asarray(out), np.asarray(ref),
                               rtol=4e-2, atol=4e-2)
    print("KERNEL_OK")
</pallas_src>

<mosaic_0001>
module attributes {stable_mosaic.version = 11 : i64} {
  func.func @decoder_kernel(%arg0: i32, %arg1: i32, %arg2: memref<2x3xf32, #tpu.memory_space<smem>>, %arg3: memref<2x3xf32, #tpu.memory_space<smem>>, %arg4: memref<2xf32, #tpu.memory_space<smem>>, %arg5: memref<2x8x32xf32, #tpu.memory_space<vmem>>, %arg6: memref<2x8x32xf32, #tpu.memory_space<vmem>>, %arg7: memref<2x1x8xf32, #tpu.memory_space<vmem>>, %arg8: memref<2x8x8xf32, #tpu.memory_space<vmem>>, %arg9: memref<1x32x96xbf16, #tpu.memory_space<vmem>>, %arg10: memref<1x32x32xbf16, #tpu.memory_space<vmem>>, %arg11: memref<1x32x32xbf16, #tpu.memory_space<vmem>>, %arg12: memref<1x32x64xbf16, #tpu.memory_space<vmem>>, %arg13: memref<1x32x32xbf16, #tpu.memory_space<vmem>>, %arg14: memref<1x33x64xbf16, #tpu.memory_space<vmem>>, %arg15: memref<1x65x32xbf16, #tpu.memory_space<vmem>>, %arg16: memref<2x8x32xf32, #tpu.memory_space<vmem>>, %arg17: memref<16x32xf32, #tpu.memory_space<vmem>>, %arg18: memref<16x32xbf16, #tpu.memory_space<vmem>>, %arg19: memref<2x8x8xf32, #tpu.memory_space<vmem>>, %arg20: memref<2x1x8xf32, #tpu.memory_space<vmem>>) attributes {dimension_semantics = [#tpu.dimension_semantics<parallel>, #tpu.dimension_semantics<arbitrary>], iteration_bounds = array<i64: 1, 2>, scalar_prefetch = 0 : i64, scratch_operands = 4 : i64, tpu.core_type = #tpu.core_type<tc>, window_params = [{transform_indices = @transform_0, window_bounds = array<i64: 2, 3>}, {transform_indices = @transform_1, window_bounds = array<i64: 2, 3>}, {transform_indices = @transform_2, window_bounds = array<i64: 2>}, {transform_indices = @transform_3, window_bounds = array<i64: 2, 8, 32>}, {transform_indices = @transform_4, window_bounds = array<i64: 2, 8, 32>}, {transform_indices = @transform_5, window_bounds = array<i64: 2, 1, 8>}, {transform_indices = @transform_6, window_bounds = array<i64: 2, 8, 8>}, {transform_indices = @transform_7, window_bounds = array<i64: 1, 32, 96>}, {transform_indices = @transform_8, window_bounds = array<i64: 1, 32, 32>}, {transform_indices = @transform_9, window_bounds = array<i64: 1, 32, 32>}, {transform_indices = @transform_10, window_bounds = array<i64: 1, 32, 64>}, {transform_indices = @transform_11, window_bounds = array<i64: 1, 32, 32>}, {transform_indices = @transform_12, window_bounds = array<i64: 1, 33, 64>}, {transform_indices = @transform_13, window_bounds = array<i64: 1, 65, 32>}, {transform_indices = @transform_14, window_bounds = array<i64: 2, 8, 32>}]} {
    %c0_i32 = arith.constant 0 : i32
    %0 = arith.cmpi eq, %arg1, %c0_i32 : i32
    %1 = arith.extui %0 : i1 to i32
    %c0_i32_0 = arith.constant 0 : i32
    %2 = arith.cmpi ne, %1, %c0_i32_0 : i32
    scf.if %2 {
      %c0_84 = arith.constant 0 : index
      %c0_85 = arith.constant 0 : index
      %c0_86 = arith.constant 0 : index
      %267 = vector.load %arg5[%c0_84, %c0_85, %c0_86] : memref<2x8x32xf32, #tpu.memory_space<vmem>>, vector<2x8x32xf32>
      %268 = vector.shape_cast %267 : vector<2x8x32xf32> to vector<16x32xf32>
      %c0_87 = arith.constant 0 : index
      %c0_88 = arith.constant 0 : index
      %269 = vector.load %arg17[%c0_87, %c0_88] : memref<16x32xf32, #tpu.memory_space<vmem>>, vector<16x32xf32>
      tpu.vector_store %arg17[%c0_87, %c0_88], %268 {strides = array<i32>} : memref<16x32xf32, #tpu.memory_space<vmem>>, vector<16x32xf32>,
      %c0_89 = arith.constant 0 : index
      %c0_90 = arith.constant 0 : index
      %c0_91 = arith.constant 0 : index
      %270 = vector.load %arg6[%c0_89, %c0_90, %c0_91] : memref<2x8x32xf32, #tpu.memory_space<vmem>>, vector<2x8x32xf32>
      %271 = vector.shape_cast %270 : vector<2x8x32xf32> to vector<16x32xf32>
      %272 = arith.truncf %271 : vector<16x32xf32> to vector<16x32xbf16>
      %c0_92 = arith.constant 0 : index
      %c0_93 = arith.constant 0 : index
      %273 = vector.load %arg18[%c0_92, %c0_93] : memref<16x32xbf16, #tpu.memory_space<vmem>>, vector<16x32xbf16>
      tpu.vector_store %arg18[%c0_92, %c0_93], %272 {strides = array<i32>} : memref<16x32xbf16, #tpu.memory_space<vmem>>, vector<16x32xbf16>,
      %c0_94 = arith.constant 0 : index
      %c0_95 = arith.constant 0 : index
      %c0_96 = arith.constant 0 : index
      %274 = vector.load %arg8[%c0_94, %c0_95, %c0_96] : memref<2x8x8xf32, #tpu.memory_space<vmem>>, vector<2x8x8xf32>
      %cst_97 = arith.constant 0.000000e+00 : f32
      %275 = vector.broadcast %cst_97 : f32 to vector<2x8x8xf32>
      %276 = arith.cmpf oeq, %274, %275 : vector<2x8x8xf32>
      %cst_98 = arith.constant -1.000000e+09 : f32
      %cst_99 = arith.constant 0.000000e+00 : f32
      %277 = vector.broadcast %cst_98 : f32 to vector<2x8x8xf32>
      %278 = vector.broadcast %cst_99 : f32 to vector<2x8x8xf32>
      %279 = arith.select %276, %277, %278 : vector<2x8x8xi1>, vector<2x8x8xf32>
      %c0_100 = arith.constant 0 : index
      %c0_101 = arith.constant 0 : index
      %c0_102 = arith.constant 0 : index
      %280 = vector.load %arg19[%c0_100, %c0_101, %c0_102] : memref<2x8x8xf32, #tpu.memory_space<vmem>>, vector<2x8x8xf32>
      tpu.vector_store %arg19[%c0_100, %c0_101, %c0_102], %279 {strides = array<i32>} : memref<2x8x8xf32, #tpu.memory_space<vmem>>, vector<2x8x8xf32>,
      %c0_103 = arith.constant 0 : index
      %c0_104 = arith.constant 0 : index
      %c0_105 = arith.constant 0 : index
      %281 = vector.load %arg7[%c0_103, %c0_104, %c0_105] : memref<2x1x8xf32, #tpu.memory_space<vmem>>, vector<2x1x8xf32>
      %cst_106 = arith.constant 0.000000e+00 : f32
      %282 = vector.broadcast %cst_106 : f32 to vector<2x1x8xf32>
      %283 = arith.cmpf oeq, %281, %282 : vector<2x1x8xf32>
      %cst_107 = arith.constant -1.000000e+09 : f32
      %cst_108 = arith.constant 0.000000e+00 : f32
      %284 = vector.broadcast %cst_107 : f32 to vector<2x1x8xf32>
      %285 = vector.broadcast %cst_108 : f32 to vector<2x1x8xf32>
      %286 = arith.select %283, %284, %285 : vector<2x1x8xi1>, vector<2x1x8xf32>
      %c0_109 = arith.constant 0 : index
      %c0_110 = arith.constant 0 : index
      %c0_111 = arith.constant 0 : index
      %287 = vector.load %arg20[%c0_109, %c0_110, %c0_111] : memref<2x1x8xf32, #tpu.memory_space<vmem>>, vector<2x1x8xf32>
      tpu.vector_store %arg20[%c0_109, %c0_110, %c0_111], %286 {strides = array<i32>} : memref<2x1x8xf32, #tpu.memory_space<vmem>>, vector<2x1x8xf32>,
    } else {
    }
    %c0 = arith.constant 0 : index
    %c0_1 = arith.constant 0 : index
    %3 = vector.load %arg17[%c0, %c0_1] : memref<16x32xf32, #tpu.memory_space<vmem>>, vector<16x32xf32>
    %4 = arith.index_cast %arg1 : i32 to index
    %c0_2 = arith.constant 0 : index
    %5 = memref.load %arg2[%4, %c0_2] : memref<2x3xf32, #tpu.memory_space<smem>>
    %6 = arith.index_cast %arg1 : i32 to index
    %c0_3 = arith.constant 0 : index
    %7 = memref.load %arg3[%6, %c0_3] : memref<2x3xf32, #tpu.memory_space<smem>>
    %cst = arith.constant dense<0.000000e+00> : vector<16xf32>
    %8 = vector.multi_reduction <add>, %3, %cst [1] : vector<16x32xf32> to vector<16xf32>
    %9 = vector.shape_cast %8 : vector<16xf32> to vector<16x1xf32>
    %cst_4 = arith.constant 3.200000e+01 : f32
    %10 = vector.broadcast %cst_4 : f32 to vector<16x1xf32>
    %11 = arith.divf %9, %10 : vector<16x1xf32>
    %12 = vector.broadcast %11 : vector<16x1xf32> to vector<16x32xf32>
    %13 = arith.subf %3, %12 : vector<16x32xf32>
    %14 = arith.mulf %13, %13 : vector<16x32xf32>
    %cst_5 = arith.constant dense<0.000000e+00> : vector<16xf32>
    %15 = vector.multi_reduction <add>, %14, %cst_5 [1] : vector<16x32xf32> to vector<16xf32>
    %16 = vector.shape_cast %15 : vector<16xf32> to vector<16x1xf32>
    %cst_6 = arith.constant 3.100000e+01 : f32
    %17 = vector.broadcast %cst_6 : f32 to vector<16x1xf32>
    %18 = arith.divf %16, %17 : vector<16x1xf32>
    %19 = math.sqrt %18 : vector<16x1xf32>
    %cst_7 = arith.constant 9.99999997E-7 : f32
    %20 = vector.broadcast %cst_7 : f32 to vector<16x1xf32>
    %21 = arith.addf %19, %20 : vector<16x1xf32>
    %22 = tpu.reciprocal %21 {approx = true} : vector<16x1xf32> -> vector<16x1xf32>
    %23 = vector.broadcast %11 : vector<16x1xf32> to vector<16x32xf32>
    %24 = arith.subf %3, %23 : vector<16x32xf32>
    %25 = vector.broadcast %5 : f32 to vector<16x32xf32>
    %26 = arith.mulf %25, %24 : vector<16x32xf32>
    %27 = vector.broadcast %22 : vector<16x1xf32> to vector<16x32xf32>
    %28 = arith.mulf %26, %27 : vector<16x32xf32>
    %29 = vector.broadcast %7 : f32 to vector<16x32xf32>
    %30 = arith.addf %28, %29 : vector<16x32xf32>
    %31 = arith.truncf %30 : vector<16x32xf32> to vector<16x32xbf16>
    %c0_8 = arith.constant 0 : index
    %c0_9 = arith.constant 0 : index
    %c0_10 = arith.constant 0 : index
    %32 = vector.load %arg9[%c0_8, %c0_9, %c0_10] : memref<1x32x96xbf16, #tpu.memory_space<vmem>>, vector<1x32x96xbf16>
    %33 = vector.shape_cast %32 : vector<1x32x96xbf16> to vector<32x96xbf16>
    %cst_11 = arith.constant dense<0.000000e+00> : vector<16x96xf32>
    %34 = tpu.matmul %31, %33, %cst_11 {dimension_numbers = #tpu.dot_dimension_numbers<[1], [0], [0], [1], [0, 0, 1, 1], [], []>} : vector<16x32xbf16>, vector<32x96xbf16>, vector<16x96xf32> -> vector<16x96xf32>
    %35 = vector.extract_strided_slice %34 {offsets = [0, 0], sizes = [16, 32], strides = [1, 1]} : vector<16x96xf32> to vector<16x32xf32>
    %cst_12 = arith.constant 0.353553385 : f32
    %36 = vector.broadcast %cst_12 : f32 to vector<16x32xf32>
    %37 = arith.mulf %35, %36 : vector<16x32xf32>
    %38 = vector.extract_strided_slice %37 {offsets = [0, 0], sizes = [8, 32], strides = [1, 1]} : vector<16x32xf32> to vector<8x32xf32>
    %39 = vector.extract_strided_slice %34 {offsets = [0, 32], sizes = [8, 32], strides = [1, 1]} : vector<16x96xf32> to vector<8x32xf32>
    %40 = vector.extract_strided_slice %34 {offsets = [0, 64], sizes = [8, 32], strides = [1, 1]} : vector<16x96xf32> to vector<8x32xf32>
    %c0_13 = arith.constant 0 : index
    %c0_14 = arith.constant 0 : index
    %c0_15 = arith.constant 0 : index
    %41 = vector.load %arg19[%c0_13, %c0_14, %c0_15] : memref<2x8x8xf32, #tpu.memory_space<vmem>>, vector<1x8x8xf32>
    %42 = vector.shape_cast %41 : vector<1x8x8xf32> to vector<8x8xf32>
    %43 = vector.shape_cast %38 : vector<8x32xf32> to vector<8x4x8xf32>
    %44 = tpu.transpose %43, [1, 0, 2] : vector<8x4x8xf32> -> vector<4x8x8xf32>
    %45 = arith.truncf %44 : vector<4x8x8xf32> to vector<4x8x8xbf16>
    %46 = vector.shape_cast %39 : vector<8x32xf32> to vector<8x4x8xf32>
    %47 = tpu.transpose %46, [1, 0, 2] : vector<8x4x8xf32> -> vector<4x8x8xf32>
    %48 = arith.truncf %47 : vector<4x8x8xf32> to vector<4x8x8xbf16>
    %49 = vector.shape_cast %40 : vector<8x32xf32> to vector<8x4x8xf32>
    %50 = tpu.transpose %49, [1, 0, 2] : vector<8x4x8xf32> -> vector<4x8x8xf32>
    %51 = arith.truncf %50 : vector<4x8x8xf32> to vector<4x8x8xbf16>
    "tpu.trace_start"() <{level = 10 : i32, message = "hqd,hkd->hqk"}> : () -> ()
    %cst_16 = arith.constant dense<0.000000e+00> : vector<4x8x8xf32>
    %52 = tpu.matmul %45, %48, %cst_16 {dimension_numbers = #tpu.dot_dimension_numbers<[2], [2], [1], [1], [0, 0, 0, 1, 1, 1], [0], [0]>} : vector<4x8x8xbf16>, vector<4x8x8xbf16>, vector<4x8x8xf32> -> vector<4x8x8xf32>
    "tpu.trace_stop"() : () -> ()
    %53 = vector.shape_cast %42 : vector<8x8xf32> to vector<1x8x8xf32>
    %54 = vector.broadcast %53 : vector<1x8x8xf32> to vector<4x8x8xf32>
    %55 = arith.addf %52, %54 : vector<4x8x8xf32>
    %cst_17 = arith.constant dense<0xFF800000> : vector<4x8xf32>
    %56 = vector.multi_reduction <maximumf>, %55, %cst_17 [2] : vector<4x8x8xf32> to vector<4x8xf32>
    %57 = vector.shape_cast %56 : vector<4x8xf32> to vector<4x8x1xf32>
    %58 = vector.broadcast %57 : vector<4x8x1xf32> to vector<4x8x8xf32>
    %59 = arith.subf %55, %58 : vector<4x8x8xf32>
    %60 = math.exp %59 : vector<4x8x8xf32>
    %cst_18 = arith.constant dense<0.000000e+00> : vector<4x8xf32>
    %61 = vector.multi_reduction <add>, %60, %cst_18 [2] : vector<4x8x8xf32> to vector<4x8xf32>
    %62 = vector.shape_cast %61 : vector<4x8xf32> to vector<4x8x1xf32>
    %63 = tpu.reciprocal %62 {approx = true} : vector<4x8x1xf32> -> vector<4x8x1xf32>
    %64 = vector.broadcast %63 : vector<4x8x1xf32> to vector<4x8x8xf32>
    %65 = arith.mulf %60, %64 : vector<4x8x8xf32>
    %66 = arith.truncf %65 : vector<4x8x8xf32> to vector<4x8x8xbf16>
    "tpu.trace_start"() <{level = 10 : i32, message = "hqk,hkd->hqd"}> : () -> ()
    %cst_19 = arith.constant dense<0.000000e+00> : vector<4x8x8xf32>
    %67 = tpu.matmul %66, %51, %cst_19 {dimension_numbers = #tpu.dot_dimension_numbers<[2], [1], [1], [2], [0, 0, 0, 1, 1, 2], [0], [0]>} : vector<4x8x8xbf16>, vector<4x8x8xbf16>, vector<4x8x8xf32> -> vector<4x8x8xf32>
    "tpu.trace_stop"() : () -> ()
    %68 = tpu.transpose %67, [1, 0, 2] : vector<4x8x8xf32> -> vector<8x4x8xf32>
    %69 = vector.shape_cast %68 : vector<8x4x8xf32> to vector<8x32xf32>
    %70 = vector.extract_strided_slice %37 {offsets = [8, 0], sizes = [8, 32], strides = [1, 1]} : vector<16x32xf32> to vector<8x32xf32>
    %71 = vector.extract_strided_slice %34 {offsets = [8, 32], sizes = [8, 32], strides = [1, 1]} : vector<16x96xf32> to vector<8x32xf32>
    %72 = vector.extract_strided_slice %34 {offsets = [8, 64], sizes = [8, 32], strides = [1, 1]} : vector<16x96xf32> to vector<8x32xf32>
    %c1 = arith.constant 1 : index
    %c0_20 = arith.constant 0 : index
    %c0_21 = arith.constant 0 : index
    %73 = vector.load %arg19[%c1, %c0_20, %c0_21] : memref<2x8x8xf32, #tpu.memory_space<vmem>>, vector<1x8x8xf32>
    %74 = vector.shape_cast %73 : vector<1x8x8xf32> to vector<8x8xf32>
    %75 = vector.shape_cast %70 : vector<8x32xf32> to vector<8x4x8xf32>
    %76 = tpu.transpose %75, [1, 0, 2] : vector<8x4x8xf32> -> vector<4x8x8xf32>
    %77 = arith.truncf %76 : vector<4x8x8xf32> to vector<4x8x8xbf16>
    %78 = vector.shape_cast %71 : vector<8x32xf32> to vector<8x4x8xf32>
    %79 = tpu.transpose %78, [1, 0, 2] : vector<8x4x8xf32> -> vector<4x8x8xf32>
    %80 = arith.truncf %79 : vector<4x8x8xf32> to vector<4x8x8xbf16>
    %81 = vector.shape_cast %72 : vector<8x32xf32> to vector<8x4x8xf32>
    %82 = tpu.transpose %81, [1, 0, 2] : vector<8x4x8xf32> -> vector<4x8x8xf32>
    %83 = arith.truncf %82 : vector<4x8x8xf32> to vector<4x8x8xbf16>
    "tpu.trace_start"() <{level = 10 : i32, message = "hqd,hkd->hqk"}> : () -> ()
    %cst_22 = arith.constant dense<0.000000e+00> : vector<4x8x8xf32>
    %84 = tpu.matmul %77, %80, %cst_22 {dimension_numbers = #tpu.dot_dimension_numbers<[2], [2], [1], [1], [0, 0, 0, 1, 1, 1], [0], [0]>} : vector<4x8x8xbf16>, vector<4x8x8xbf16>, vector<4x8x8xf32> -> vector<4x8x8xf32>
    "tpu.trace_stop"() : () -> ()
    %85 = vector.shape_cast %74 : vector<8x8xf32> to vector<1x8x8xf32>
    %86 = vector.broadcast %85 : vector<1x8x8xf32> to vector<4x8x8xf32>
    %87 = arith.addf %84, %86 : vector<4x8x8xf32>
    %cst_23 = arith.constant dense<0xFF800000> : vector<4x8xf32>
    %88 = vector.multi_reduction <maximumf>, %87, %cst_23 [2] : vector<4x8x8xf32> to vector<4x8xf32>
    %89 = vector.shape_cast %88 : vector<4x8xf32> to vector<4x8x1xf32>
    %90 = vector.broadcast %89 : vector<4x8x1xf32> to vector<4x8x8xf32>
    %91 = arith.subf %87, %90 : vector<4x8x8xf32>
    %92 = math.exp %91 : vector<4x8x8xf32>
    %cst_24 = arith.constant dense<0.000000e+00> : vector<4x8xf32>
    %93 = vector.multi_reduction <add>, %92, %cst_24 [2] : vector<4x8x8xf32> to vector<4x8xf32>
    %94 = vector.shape_cast %93 : vector<4x8xf32> to vector<4x8x1xf32>
    %95 = tpu.reciprocal %94 {approx = true} : vector<4x8x1xf32> -> vector<4x8x1xf32>
    %96 = vector.broadcast %95 : vector<4x8x1xf32> to vector<4x8x8xf32>
    %97 = arith.mulf %92, %96 : vector<4x8x8xf32>
    %98 = arith.truncf %97 : vector<4x8x8xf32> to vector<4x8x8xbf16>
    "tpu.trace_start"() <{level = 10 : i32, message = "hqk,hkd->hqd"}> : () -> ()
    %cst_25 = arith.constant dense<0.000000e+00> : vector<4x8x8xf32>
    %99 = tpu.matmul %98, %83, %cst_25 {dimension_numbers = #tpu.dot_dimension_numbers<[2], [1], [1], [2], [0, 0, 0, 1, 1, 2], [0], [0]>} : vector<4x8x8xbf16>, vector<4x8x8xbf16>, vector<4x8x8xf32> -> vector<4x8x8xf32>
    "tpu.trace_stop"() : () -> ()
    %100 = tpu.transpose %99, [1, 0, 2] : vector<4x8x8xf32> -> vector<8x4x8xf32>
    %101 = vector.shape_cast %100 : vector<8x4x8xf32> to vector<8x32xf32>
    %102 = tpu.concatenate %69, %101 in 0 : vector<8x32xf32>, vector<8x32xf32> -> vector<16x32xf32>
    %103 = arith.truncf %102 : vector<16x32xf32> to vector<16x32xbf16>
    %c0_26 = arith.constant 0 : index
    %c0_27 = arith.constant 0 : index
    %c0_28 = arith.constant 0 : index
    %104 = vector.load %arg10[%c0_26, %c0_27, %c0_28] : memref<1x32x32xbf16, #tpu.memory_space<vmem>>, vector<1x32x32xbf16>
    %105 = vector.shape_cast %104 : vector<1x32x32xbf16> to vector<32x32xbf16>
    %cst_29 = arith.constant dense<0.000000e+00> : vector<16x32xf32>
    %106 = tpu.matmul %103, %105, %cst_29 {dimension_numbers = #tpu.dot_dimension_numbers<[1], [0], [0], [1], [0, 0, 1, 1], [], []>} : vector<16x32xbf16>, vector<32x32xbf16>, vector<16x32xf32> -> vector<16x32xf32>
    %107 = arith.addf %3, %106 : vector<16x32xf32>
    %108 = arith.index_cast %arg1 : i32 to index
    %c1_30 = arith.constant 1 : index
    %109 = memref.load %arg2[%108, %c1_30] : memref<2x3xf32, #tpu.memory_space<smem>>
    %110 = arith.index_cast %arg1 : i32 to index
    %c1_31 = arith.constant 1 : index
    %111 = memref.load %arg3[%110, %c1_31] : memref<2x3xf32, #tpu.memory_space<smem>>
    %cst_32 = arith.constant dense<0.000000e+00> : vector<16xf32>
    %112 = vector.multi_reduction <add>, %107, %cst_32 [1] : vector<16x32xf32> to vector<16xf32>
    %113 = vector.shape_cast %112 : vector<16xf32> to vector<16x1xf32>
    %cst_33 = arith.constant 3.200000e+01 : f32
    %114 = vector.broadcast %cst_33 : f32 to vector<16x1xf32>
    %115 = arith.divf %113, %114 : vector<16x1xf32>
    %116 = vector.broadcast %115 : vector<16x1xf32> to vector<16x32xf32>
    %117 = arith.subf %107, %116 : vector<16x32xf32>
    %118 = arith.mulf %117, %117 : vector<16x32xf32>
    %cst_34 = arith.constant dense<0.000000e+00> : vector<16xf32>
    %119 = vector.multi_reduction <add>, %118, %cst_34 [1] : vector<16x32xf32> to vector<16xf32>
    %120 = vector.shape_cast %119 : vector<16xf32> to vector<16x1xf32>
    %cst_35 = arith.constant 3.100000e+01 : f32
    %121 = vector.broadcast %cst_35 : f32 to vector<16x1xf32>
    %122 = arith.divf %120, %121 : vector<16x1xf32>
    %123 = math.sqrt %122 : vector<16x1xf32>
    %cst_36 = arith.constant 9.99999997E-7 : f32
    %124 = vector.broadcast %cst_36 : f32 to vector<16x1xf32>
    %125 = arith.addf %123, %124 : vector<16x1xf32>
    %126 = tpu.reciprocal %125 {approx = true} : vector<16x1xf32> -> vector<16x1xf32>
    %127 = vector.broadcast %115 : vector<16x1xf32> to vector<16x32xf32>
    %128 = arith.subf %107, %127 : vector<16x32xf32>
    %129 = vector.broadcast %109 : f32 to vector<16x32xf32>
    %130 = arith.mulf %129, %128 : vector<16x32xf32>
    %131 = vector.broadcast %126 : vector<16x1xf32> to vector<16x32xf32>
    %132 = arith.mulf %130, %131 : vector<16x32xf32>
    %133 = vector.broadcast %111 : f32 to vector<16x32xf32>
    %134 = arith.addf %132, %133 : vector<16x32xf32>
    %135 = arith.truncf %134 : vector<16x32xf32> to vector<16x32xbf16>
    %c0_37 = arith.constant 0 : index
    %c0_38 = arith.constant 0 : index
    %c0_39 = arith.constant 0 : index
    %136 = vector.load %arg11[%c0_37, %c0_38, %c0_39] : memref<1x32x32xbf16, #tpu.memory_space<vmem>>, vector<1x32x32xbf16>
    %137 = vector.shape_cast %136 : vector<1x32x32xbf16> to vector<32x32xbf16>
    %cst_40 = arith.constant dense<0.000000e+00> : vector<16x32xf32>
    %138 = tpu.matmul %135, %137, %cst_40 {dimension_numbers = #tpu.dot_dimension_numbers<[1], [0], [0], [1], [0, 0, 1, 1], [], []>} : vector<16x32xbf16>, vector<32x32xbf16>, vector<16x32xf32> -> vector<16x32xf32>
    %cst_41 = arith.constant 0.353553385 : f32
    %139 = vector.broadcast %cst_41 : f32 to vector<16x32xf32>
    %140 = arith.mulf %138, %139 : vector<16x32xf32>
    %c0_42 = arith.constant 0 : index
    %c0_43 = arith.constant 0 : index
    %141 = vector.load %arg18[%c0_42, %c0_43] : memref<16x32xbf16, #tpu.memory_space<vmem>>, vector<16x32xbf16>
    %c0_44 = arith.constant 0 : index
    %c0_45 = arith.constant 0 : index
    %c0_46 = arith.constant 0 : index
    %142 = vector.load %arg12[%c0_44, %c0_45, %c0_46] : memref<1x32x64xbf16, #tpu.memory_space<vmem>>, vector<1x32x64xbf16>
    %143 = vector.shape_cast %142 : vector<1x32x64xbf16> to vector<32x64xbf16>
    %cst_47 = arith.constant dense<0.000000e+00> : vector<16x64xf32>
    %144 = tpu.matmul %141, %143, %cst_47 {dimension_numbers = #tpu.dot_dimension_numbers<[1], [0], [0], [1], [0, 0, 1, 1], [], []>} : vector<16x32xbf16>, vector<32x64xbf16>, vector<16x64xf32> -> vector<16x64xf32>
    %145 = vector.extract_strided_slice %140 {offsets = [0, 0], sizes = [8, 32], strides = [1, 1]} : vector<16x32xf32> to vector<8x32xf32>
    %146 = vector.extract_strided_slice %144 {offsets = [0, 0], sizes = [8, 32], strides = [1, 1]} : vector<16x64xf32> to vector<8x32xf32>
    %147 = vector.extract_strided_slice %144 {offsets = [0, 32], sizes = [8, 32], strides = [1, 1]} : vector<16x64xf32> to vector<8x32xf32>
    %c0_48 = arith.constant 0 : index
    %c0_49 = arith.constant 0 : index
    %c0_50 = arith.constant 0 : index
    %148 = vector.load %arg20[%c0_48, %c0_49, %c0_50] : memref<2x1x8xf32, #tpu.memory_space<vmem>>, vector<1x1x8xf32>
    %149 = vector.shape_cast %148 : vector<1x1x8xf32> to vector<1x8xf32>
    %150 = vector.shape_cast %145 : vector<8x32xf32> to vector<8x4x8xf32>
    %151 = tpu.transpose %150, [1, 0, 2] : vector<8x4x8xf32> -> vector<4x8x8xf32>
    %152 = arith.truncf %151 : vector<4x8x8xf32> to vector<4x8x8xbf16>
    %153 = vector.shape_cast %146 : vector<8x32xf32> to vector<8x4x8xf32>
    %154 = tpu.transpose %153, [1, 0, 2] : vector<8x4x8xf32> -> vector<4x8x8xf32>
    %155 = arith.truncf %154 : vector<4x8x8xf32> to vector<4x8x8xbf16>
    %156 = vector.shape_cast %147 : vector<8x32xf32> to vector<8x4x8xf32>
    %157 = tpu.transpose %156, [1, 0, 2] : vector<8x4x8xf32> -> vector<4x8x8xf32>
    %158 = arith.truncf %157 : vector<4x8x8xf32> to vector<4x8x8xbf16>
    "tpu.trace_start"() <{level = 10 : i32, message = "hqd,hkd->hqk"}> : () -> ()
    %cst_51 = arith.constant dense<0.000000e+00> : vector<4x8x8xf32>
    %159 = tpu.matmul %152, %155, %cst_51 {dimension_numbers = #tpu.dot_dimension_numbers<[2], [2], [1], [1], [0, 0, 0, 1, 1, 1], [0], [0]>} : vector<4x8x8xbf16>, vector<4x8x8xbf16>, vector<4x8x8xf32> -> vector<4x8x8xf32>
    "tpu.trace_stop"() : () -> ()
    %160 = vector.shape_cast %149 : vector<1x8xf32> to vector<1x1x8xf32>
    %161 = vector.broadcast %160 : vector<1x1x8xf32> to vector<4x8x8xf32>
    %162 = arith.addf %159, %161 : vector<4x8x8xf32>
    %cst_52 = arith.constant dense<0xFF800000> : vector<4x8xf32>
    %163 = vector.multi_reduction <maximumf>, %162, %cst_52 [2] : vector<4x8x8xf32> to vector<4x8xf32>
    %164 = vector.shape_cast %163 : vector<4x8xf32> to vector<4x8x1xf32>
    %165 = vector.broadcast %164 : vector<4x8x1xf32> to vector<4x8x8xf32>
    %166 = arith.subf %162, %165 : vector<4x8x8xf32>
    %167 = math.exp %166 : vector<4x8x8xf32>
    %cst_53 = arith.constant dense<0.000000e+00> : vector<4x8xf32>
    %168 = vector.multi_reduction <add>, %167, %cst_53 [2] : vector<4x8x8xf32> to vector<4x8xf32>
    %169 = vector.shape_cast %168 : vector<4x8xf32> to vector<4x8x1xf32>
    %170 = tpu.reciprocal %169 {approx = true} : vector<4x8x1xf32> -> vector<4x8x1xf32>
    %171 = vector.broadcast %170 : vector<4x8x1xf32> to vector<4x8x8xf32>
    %172 = arith.mulf %167, %171 : vector<4x8x8xf32>
    %173 = arith.truncf %172 : vector<4x8x8xf32> to vector<4x8x8xbf16>
    "tpu.trace_start"() <{level = 10 : i32, message = "hqk,hkd->hqd"}> : () -> ()
    %cst_54 = arith.constant dense<0.000000e+00> : vector<4x8x8xf32>
    %174 = tpu.matmul %173, %158, %cst_54 {dimension_numbers = #tpu.dot_dimension_numbers<[2], [1], [1], [2], [0, 0, 0, 1, 1, 2], [0], [0]>} : vector<4x8x8xbf16>, vector<4x8x8xbf16>, vector<4x8x8xf32> -> vector<4x8x8xf32>
    "tpu.trace_stop"() : () -> ()
    %175 = tpu.transpose %174, [1, 0, 2] : vector<4x8x8xf32> -> vector<8x4x8xf32>
    %176 = vector.shape_cast %175 : vector<8x4x8xf32> to vector<8x32xf32>
    %177 = vector.extract_strided_slice %140 {offsets = [8, 0], sizes = [8, 32], strides = [1, 1]} : vector<16x32xf32> to vector<8x32xf32>
    %178 = vector.extract_strided_slice %144 {offsets = [8, 0], sizes = [8, 32], strides = [1, 1]} : vector<16x64xf32> to vector<8x32xf32>
    %179 = vector.extract_strided_slice %144 {offsets = [8, 32], sizes = [8, 32], strides = [1, 1]} : vector<16x64xf32> to vector<8x32xf32>
    %c1_55 = arith.constant 1 : index
    %c0_56 = arith.constant 0 : index
    %c0_57 = arith.constant 0 : index
    %180 = vector.load %arg20[%c1_55, %c0_56, %c0_57] : memref<2x1x8xf32, #tpu.memory_space<vmem>>, vector<1x1x8xf32>
    %181 = vector.shape_cast %180 : vector<1x1x8xf32> to vector<1x8xf32>
    %182 = vector.shape_cast %177 : vector<8x32xf32> to vector<8x4x8xf32>
    %183 = tpu.transpose %182, [1, 0, 2] : vector<8x4x8xf32> -> vector<4x8x8xf32>
    %184 = arith.truncf %183 : vector<4x8x8xf32> to vector<4x8x8xbf16>
    %185 = vector.shape_cast %178 : vector<8x32xf32> to vector<8x4x8xf32>
    %186 = tpu.transpose %185, [1, 0, 2] : vector<8x4x8xf32> -> vector<4x8x8xf32>
    %187 = arith.truncf %186 : vector<4x8x8xf32> to vector<4x8x8xbf16>
    %188 = vector.shape_cast %179 : vector<8x32xf32> to vector<8x4x8xf32>
    %189 = tpu.transpose %188, [1, 0, 2] : vector<8x4x8xf32> -> vector<4x8x8xf32>
    %190 = arith.truncf %189 : vector<4x8x8xf32> to vector<4x8x8xbf16>
    "tpu.trace_start"() <{level = 10 : i32, message = "hqd,hkd->hqk"}> : () -> ()
    %cst_58 = arith.constant dense<0.000000e+00> : vector<4x8x8xf32>
    %191 = tpu.matmul %184, %187, %cst_58 {dimension_numbers = #tpu.dot_dimension_numbers<[2], [2], [1], [1], [0, 0, 0, 1, 1, 1], [0], [0]>} : vector<4x8x8xbf16>, vector<4x8x8xbf16>, vector<4x8x8xf32> -> vector<4x8x8xf32>
    "tpu.trace_stop"() : () -> ()
    %192 = vector.shape_cast %181 : vector<1x8xf32> to vector<1x1x8xf32>
    %193 = vector.broadcast %192 : vector<1x1x8xf32> to vector<4x8x8xf32>
    %194 = arith.addf %191, %193 : vector<4x8x8xf32>
    %cst_59 = arith.constant dense<0xFF800000> : vector<4x8xf32>
    %195 = vector.multi_reduction <maximumf>, %194, %cst_59 [2] : vector<4x8x8xf32> to vector<4x8xf32>
    %196 = vector.shape_cast %195 : vector<4x8xf32> to vector<4x8x1xf32>
    %197 = vector.broadcast %196 : vector<4x8x1xf32> to vector<4x8x8xf32>
    %198 = arith.subf %194, %197 : vector<4x8x8xf32>
    %199 = math.exp %198 : vector<4x8x8xf32>
    %cst_60 = arith.constant dense<0.000000e+00> : vector<4x8xf32>
    %200 = vector.multi_reduction <add>, %199, %cst_60 [2] : vector<4x8x8xf32> to vector<4x8xf32>
    %201 = vector.shape_cast %200 : vector<4x8xf32> to vector<4x8x1xf32>
    %202 = tpu.reciprocal %201 {approx = true} : vector<4x8x1xf32> -> vector<4x8x1xf32>
    %203 = vector.broadcast %202 : vector<4x8x1xf32> to vector<4x8x8xf32>
    %204 = arith.mulf %199, %203 : vector<4x8x8xf32>
    %205 = arith.truncf %204 : vector<4x8x8xf32> to vector<4x8x8xbf16>
    "tpu.trace_start"() <{level = 10 : i32, message = "hqk,hkd->hqd"}> : () -> ()
    %cst_61 = arith.constant dense<0.000000e+00> : vector<4x8x8xf32>
    %206 = tpu.matmul %205, %190, %cst_61 {dimension_numbers = #tpu.dot_dimension_numbers<[2], [1], [1], [2], [0, 0, 0, 1, 1, 2], [0], [0]>} : vector<4x8x8xbf16>, vector<4x8x8xbf16>, vector<4x8x8xf32> -> vector<4x8x8xf32>
    "tpu.trace_stop"() : () -> ()
    %207 = tpu.transpose %206, [1, 0, 2] : vector<4x8x8xf32> -> vector<8x4x8xf32>
    %208 = vector.shape_cast %207 : vector<8x4x8xf32> to vector<8x32xf32>
    %209 = tpu.concatenate %176, %208 in 0 : vector<8x32xf32>, vector<8x32xf32> -> vector<16x32xf32>
    %210 = arith.truncf %209 : vector<16x32xf32> to vector<16x32xbf16>
    %c0_62 = arith.constant 0 : index
    %c0_63 = arith.constant 0 : index
    %c0_64 = arith.constant 0 : index
    %211 = vector.load %arg13[%c0_62, %c0_63, %c0_64] : memref<1x32x32xbf16, #tpu.memory_space<vmem>>, vector<1x32x32xbf16>
    %212 = vector.shape_cast %211 : vector<1x32x32xbf16> to vector<32x32xbf16>
    %cst_65 = arith.constant dense<0.000000e+00> : vector<16x32xf32>
    %213 = tpu.matmul %210, %212, %cst_65 {dimension_numbers = #tpu.dot_dimension_numbers<[1], [0], [0], [1], [0, 0, 1, 1], [], []>} : vector<16x32xbf16>, vector<32x32xbf16>, vector<16x32xf32> -> vector<16x32xf32>
    %214 = arith.addf %107, %213 : vector<16x32xf32>
    %215 = arith.index_cast %arg1 : i32 to index
    %c2 = arith.constant 2 : index
    %216 = memref.load %arg2[%215, %c2] : memref<2x3xf32, #tpu.memory_space<smem>>
    %217 = arith.index_cast %arg1 : i32 to index
    %c2_66 = arith.constant 2 : index
    %218 = memref.load %arg3[%217, %c2_66] : memref<2x3xf32, #tpu.memory_space<smem>>
    %cst_67 = arith.constant dense<0.000000e+00> : vector<16xf32>
    %219 = vector.multi_reduction <add>, %214, %cst_67 [1] : vector<16x32xf32> to vector<16xf32>
    %220 = vector.shape_cast %219 : vector<16xf32> to vector<16x1xf32>
    %cst_68 = arith.constant 3.200000e+01 : f32
    %221 = vector.broadcast %cst_68 : f32 to vector<16x1xf32>
    %222 = arith.divf %220, %221 : vector<16x1xf32>
    %223 = vector.broadcast %222 : vector<16x1xf32> to vector<16x32xf32>
    %224 = arith.subf %214, %223 : vector<16x32xf32>
    %225 = arith.mulf %224, %224 : vector<16x32xf32>
    %cst_69 = arith.constant dense<0.000000e+00> : vector<16xf32>
    %226 = vector.multi_reduction <add>, %225, %cst_69 [1] : vector<16x32xf32> to vector<16xf32>
    %227 = vector.shape_cast %226 : vector<16xf32> to vector<16x1xf32>
    %cst_70 = arith.constant 3.100000e+01 : f32
    %228 = vector.broadcast %cst_70 : f32 to vector<16x1xf32>
    %229 = arith.divf %227, %228 : vector<16x1xf32>
    %230 = math.sqrt %229 : vector<16x1xf32>
    %cst_71 = arith.constant 9.99999997E-7 : f32
    %231 = vector.broadcast %cst_71 : f32 to vector<16x1xf32>
    %232 = arith.addf %230, %231 : vector<16x1xf32>
    %233 = tpu.reciprocal %232 {approx = true} : vector<16x1xf32> -> vector<16x1xf32>
    %234 = vector.broadcast %222 : vector<16x1xf32> to vector<16x32xf32>
    %235 = arith.subf %214, %234 : vector<16x32xf32>
    %236 = vector.broadcast %216 : f32 to vector<16x32xf32>
    %237 = arith.mulf %236, %235 : vector<16x32xf32>
    %238 = vector.broadcast %233 : vector<16x1xf32> to vector<16x32xf32>
    %239 = arith.mulf %237, %238 : vector<16x32xf32>
    %240 = vector.broadcast %218 : f32 to vector<16x32xf32>
    %241 = arith.addf %239, %240 : vector<16x32xf32>
    %c0_72 = arith.constant 0 : index
    %c0_73 = arith.constant 0 : index
    %c0_74 = arith.constant 0 : index
    %242 = vector.load %arg14[%c0_72, %c0_73, %c0_74] : memref<1x33x64xbf16, #tpu.memory_space<vmem>>, vector<1x33x64xbf16>
    %243 = vector.shape_cast %242 : vector<1x33x64xbf16> to vector<33x64xbf16>
    %c0_75 = arith.constant 0 : index
    %c0_76 = arith.constant 0 : index
    %c0_77 = arith.constant 0 : index
    %244 = vector.load %arg15[%c0_75, %c0_76, %c0_77] : memref<1x65x32xbf16, #tpu.memory_space<vmem>>, vector<1x65x32xbf16>
    %245 = vector.shape_cast %244 : vector<1x65x32xbf16> to vector<65x32xbf16>
    %246 = arith.truncf %241 : vector<16x32xf32> to vector<16x32xbf16>
    %247 = vector.extract_strided_slice %243 {offsets = [0, 0], sizes = [32, 64], strides = [1, 1]} : vector<33x64xbf16> to vector<32x64xbf16>
    %cst_78 = arith.constant dense<0.000000e+00> : vector<16x64xf32>
    %248 = tpu.matmul %246, %247, %cst_78 {dimension_numbers = #tpu.dot_dimension_numbers<[1], [0], [0], [1], [0, 0, 1, 1], [], []>} : vector<16x32xbf16>, vector<32x64xbf16>, vector<16x64xf32> -> vector<16x64xf32>
    %249 = vector.extract_strided_slice %243 {offsets = [32, 0], sizes = [1, 64], strides = [1, 1]} : vector<33x64xbf16> to vector<1x64xbf16>
    %250 = arith.extf %249 : vector<1x64xbf16> to vector<1x64xf32>
    %251 = vector.broadcast %250 : vector<1x64xf32> to vector<16x64xf32>
    %252 = arith.addf %248, %251 : vector<16x64xf32>
    %cst_79 = arith.constant 0.000000e+00 : f32
    %253 = vector.broadcast %cst_79 : f32 to vector<16x64xf32>
    %254 = arith.maximumf %252, %253 : vector<16x64xf32>
    %255 = arith.truncf %254 : vector<16x64xf32> to vector<16x64xbf16>
    %256 = vector.extract_strided_slice %245 {offsets = [0, 0], sizes = [64, 32], strides = [1, 1]} : vector<65x32xbf16> to vector<64x32xbf16>
    %cst_80 = arith.constant dense<0.000000e+00> : vector<16x32xf32>
    %257 = tpu.matmul %255, %256, %cst_80 {dimension_numbers = #tpu.dot_dimension_numbers<[1], [0], [0], [1], [0, 0, 1, 1], [], []>} : vector<16x64xbf16>, vector<64x32xbf16>, vector<16x32xf32> -> vector<16x32xf32>
    %258 = vector.extract_strided_slice %245 {offsets = [64, 0], sizes = [1, 32], strides = [1, 1]} : vector<65x32xbf16> to vector<1x32xbf16>
    %259 = arith.extf %258 : vector<1x32xbf16> to vector<1x32xf32>
    %260 = vector.broadcast %259 : vector<1x32xf32> to vector<16x32xf32>
    %261 = arith.addf %257, %260 : vector<16x32xf32>
    %262 = arith.addf %214, %261 : vector<16x32xf32>
    %c0_81 = arith.constant 0 : index
    %c0_82 = arith.constant 0 : index
    %263 = vector.load %arg17[%c0_81, %c0_82] : memref<16x32xf32, #tpu.memory_space<vmem>>, vector<16x32xf32>
    tpu.vector_store %arg17[%c0_81, %c0_82], %262 {strides = array<i32>} : memref<16x32xf32, #tpu.memory_space<vmem>>, vector<16x32xf32>,
    %c1_i32 = arith.constant 1 : i32
    %264 = arith.cmpi eq, %arg1, %c1_i32 : i32
    %265 = arith.extui %264 : i1 to i32
    %c0_i32_83 = arith.constant 0 : i32
    %266 = arith.cmpi ne, %265, %c0_i32_83 : i32
    scf.if %266 {
      %c0_84 = arith.constant 0 : index
      %267 = memref.load %arg4[%c0_84] : memref<2xf32, #tpu.memory_space<smem>>
      %c1_85 = arith.constant 1 : index
      %268 = memref.load %arg4[%c1_85] : memref<2xf32, #tpu.memory_space<smem>>
      %cst_86 = arith.constant dense<0.000000e+00> : vector<16xf32>
      %269 = vector.multi_reduction <add>, %262, %cst_86 [1] : vector<16x32xf32> to vector<16xf32>
      %270 = vector.shape_cast %269 : vector<16xf32> to vector<16x1xf32>
      %cst_87 = arith.constant 3.200000e+01 : f32
      %271 = vector.broadcast %cst_87 : f32 to vector<16x1xf32>
      %272 = arith.divf %270, %271 : vector<16x1xf32>
      %273 = vector.broadcast %272 : vector<16x1xf32> to vector<16x32xf32>
      %274 = arith.subf %262, %273 : vector<16x32xf32>
      %275 = arith.mulf %274, %274 : vector<16x32xf32>
      %cst_88 = arith.constant dense<0.000000e+00> : vector<16xf32>
      %276 = vector.multi_reduction <add>, %275, %cst_88 [1] : vector<16x32xf32> to vector<16xf32>
      %277 = vector.shape_cast %276 : vector<16xf32> to vector<16x1xf32>
      %cst_89 = arith.constant 3.100000e+01 : f32
      %278 = vector.broadcast %cst_89 : f32 to vector<16x1xf32>
      %279 = arith.divf %277, %278 : vector<16x1xf32>
      %280 = math.sqrt %279 : vector<16x1xf32>
      %cst_90 = arith.constant 9.99999997E-7 : f32
      %281 = vector.broadcast %cst_90 : f32 to vector<16x1xf32>
      %282 = arith.addf %280, %281 : vector<16x1xf32>
      %283 = tpu.reciprocal %282 {approx = true} : vector<16x1xf32> -> vector<16x1xf32>
      %284 = vector.broadcast %272 : vector<16x1xf32> to vector<16x32xf32>
      %285 = arith.subf %262, %284 : vector<16x32xf32>
      %286 = vector.broadcast %267 : f32 to vector<16x32xf32>
      %287 = arith.mulf %286, %285 : vector<16x32xf32>
      %288 = vector.broadcast %283 : vector<16x1xf32> to vector<16x32xf32>
      %289 = arith.mulf %287, %288 : vector<16x32xf32>
      %290 = vector.broadcast %268 : f32 to vector<16x32xf32>
      %291 = arith.addf %289, %290 : vector<16x32xf32>
      %292 = vector.shape_cast %291 : vector<16x32xf32> to vector<2x8x32xf32>
      %c0_91 = arith.constant 0 : index
      %c0_92 = arith.constant 0 : index
      %c0_93 = arith.constant 0 : index
      %293 = vector.load %arg16[%c0_91, %c0_92, %c0_93] : memref<2x8x32xf32, #tpu.memory_space<vmem>>, vector<2x8x32xf32>
      tpu.vector_store %arg16[%c0_91, %c0_92, %c0_93], %292 {strides = array<i32>} : memref<2x8x32xf32, #tpu.memory_space<vmem>>, vector<2x8x32xf32>,
    } else {
    }
    return
  }
  func.func @transform_0(%arg0: i32, %arg1: i32) -> (i32, i32) {
    %c0_i32 = arith.constant 0 : i32
    %c0_i32_0 = arith.constant 0 : i32
    %c0_i32_1 = arith.constant 0 : i32
    return %c0_i32, %c0_i32_0 : i32, i32
  }
  func.func @transform_1(%arg0: i32, %arg1: i32) -> (i32, i32) {
    %c0_i32 = arith.constant 0 : i32
    %c0_i32_0 = arith.constant 0 : i32
    %c0_i32_1 = arith.constant 0 : i32
    return %c0_i32, %c0_i32_0 : i32, i32
  }
  func.func @transform_2(%arg0: i32, %arg1: i32) -> i32 {
    %c0_i32 = arith.constant 0 : i32
    %c0_i32_0 = arith.constant 0 : i32
    return %c0_i32 : i32
  }
  func.func @transform_3(%arg0: i32, %arg1: i32) -> (i32, i32, i32) {
    %c0_i32 = arith.constant 0 : i32
    %c0_i32_0 = arith.constant 0 : i32
    %c0_i32_1 = arith.constant 0 : i32
    return %arg0, %c0_i32, %c0_i32_0 : i32, i32, i32
  }
  func.func @transform_4(%arg0: i32, %arg1: i32) -> (i32, i32, i32) {
    %c0_i32 = arith.constant 0 : i32
    %c0_i32_0 = arith.constant 0 : i32
    %c0_i32_1 = arith.constant 0 : i32
    return %arg0, %c0_i32, %c0_i32_0 : i32, i32, i32
  }
  func.func @transform_5(%arg0: i32, %arg1: i32) -> (i32, i32, i32) {
    %c0_i32 = arith.constant 0 : i32
    %c0_i32_0 = arith.constant 0 : i32
    %c0_i32_1 = arith.constant 0 : i32
    return %arg0, %c0_i32, %c0_i32_0 : i32, i32, i32
  }
  func.func @transform_6(%arg0: i32, %arg1: i32) -> (i32, i32, i32) {
    %c0_i32 = arith.constant 0 : i32
    %c0_i32_0 = arith.constant 0 : i32
    %c0_i32_1 = arith.constant 0 : i32
    return %arg0, %c0_i32, %c0_i32_0 : i32, i32, i32
  }
  func.func @transform_7(%arg0: i32, %arg1: i32) -> (i32, i32, i32) {
    %c0_i32 = arith.constant 0 : i32
    %c0_i32_0 = arith.constant 0 : i32
    %c0_i32_1 = arith.constant 0 : i32
    return %arg1, %c0_i32, %c0_i32_0 : i32, i32, i32
  }
  func.func @transform_8(%arg0: i32, %arg1: i32) -> (i32, i32, i32) {
    %c0_i32 = arith.constant 0 : i32
    %c0_i32_0 = arith.constant 0 : i32
    %c0_i32_1 = arith.constant 0 : i32
    return %arg1, %c0_i32, %c0_i32_0 : i32, i32, i32
  }
  func.func @transform_9(%arg0: i32, %arg1: i32) -> (i32, i32, i32) {
    %c0_i32 = arith.constant 0 : i32
    %c0_i32_0 = arith.constant 0 : i32
    %c0_i32_1 = arith.constant 0 : i32
    return %arg1, %c0_i32, %c0_i32_0 : i32, i32, i32
  }
  func.func @transform_10(%arg0: i32, %arg1: i32) -> (i32, i32, i32) {
    %c0_i32 = arith.constant 0 : i32
    %c0_i32_0 = arith.constant 0 : i32
    %c0_i32_1 = arith.constant 0 : i32
    return %arg1, %c0_i32, %c0_i32_0 : i32, i32, i32
  }
  func.func @transform_11(%arg0: i32, %arg1: i32) -> (i32, i32, i32) {
    %c0_i32 = arith.constant 0 : i32
    %c0_i32_0 = arith.constant 0 : i32
    %c0_i32_1 = arith.constant 0 : i32
    return %arg1, %c0_i32, %c0_i32_0 : i32, i32, i32
  }
  func.func @transform_12(%arg0: i32, %arg1: i32) -> (i32, i32, i32) {
    %c0_i32 = arith.constant 0 : i32
    %c0_i32_0 = arith.constant 0 : i32
    %c0_i32_1 = arith.constant 0 : i32
    return %arg1, %c0_i32, %c0_i32_0 : i32, i32, i32
  }
  func.func @transform_13(%arg0: i32, %arg1: i32) -> (i32, i32, i32) {
    %c0_i32 = arith.constant 0 : i32
    %c0_i32_0 = arith.constant 0 : i32
    %c0_i32_1 = arith.constant 0 : i32
    return %arg1, %c0_i32, %c0_i32_0 : i32, i32, i32
  }
  func.func @transform_14(%arg0: i32, %arg1: i32) -> (i32, i32, i32) {
    %c0_i32 = arith.constant 0 : i32
    %c0_i32_0 = arith.constant 0 : i32
    %c0_i32_1 = arith.constant 0 : i32
    return %arg0, %c0_i32, %c0_i32_0 : i32, i32, i32
  }
}

</mosaic_0001>

<llo_original>
// kernel: tpu_custom_call.1
$region0: #{tpu_custom_call.1}
  #allocation0 [shape = 'u32[]', space=smem, size = 0x4, offset = 0x4, fixed_abs, tag = 'smem constant byte address 0x4 - core index']
  #allocation1 [shape = 'u32[144,128]{1,0:T(1,128)}', space=vmem, size = 0x12000, scoped, tag = 'internal scratch']
  #allocation2 [shape = 'f32[16,32]{1,0:T(8,128)}', space=vmem, size = 0x2000, scoped, tag = 'scratch operand']
  #allocation3 [shape = 'bf16[16,32]{1,0:T(16,128)(2,1)}', space=vmem, size = 0x1000, scoped, tag = 'scratch operand']
  #allocation4 [shape = 'f32[2,8,8]{2,1,0:T(8,128)}', space=vmem, size = 0x2000, scoped, tag = 'scratch operand']
  #allocation5 [shape = 'f32[2,1,8]{2,1,0:T(1,128)}', space=vmem, size = 0x400, scoped, tag = 'scratch operand']
  %s0 = inlined_call_operand.hbm [shape: f32[2,3], index: 0, kind: input, shape index: {}]
  %s1 = inlined_call_operand.vmem [shape: f32[2,3], index: 1, kind: input, shape index: {}]
  %s2 = inlined_call_operand.vmem [shape: f32[2], index: 2, kind: input, shape index: {}]
  %s3 = inlined_call_operand.vmem [shape: f32[2,8,32], index: 3, kind: input, shape index: {}]
  %s4 = inlined_call_operand.hbm [shape: f32[2,8,32], index: 4, kind: input, shape index: {}]
  %s5 = inlined_call_operand.vmem [shape: f32[2,1,8], index: 5, kind: input, shape index: {}]
  %s6 = inlined_call_operand.hbm [shape: f32[2,8,8], index: 6, kind: input, shape index: {}]
  %s7 = inlined_call_operand.vmem [shape: bf16[2,32,96], index: 7, kind: input, shape index: {}]
  %s8 = inlined_call_operand.vmem [shape: bf16[2,32,32], index: 8, kind: input, shape index: {}]
  %s9 = inlined_call_operand.vmem [shape: bf16[2,32,32], index: 9, kind: input, shape index: {}]
  %s10 = inlined_call_operand.vmem [shape: bf16[2,32,64], index: 10, kind: input, shape index: {}]
  %s11 = inlined_call_operand.hbm [shape: bf16[2,32,32], index: 11, kind: input, shape index: {}]
  %s12 = inlined_call_operand.vmem [shape: bf16[2,33,64], index: 12, kind: input, shape index: {}]
  %s13 = inlined_call_operand.vmem [shape: bf16[2,65,32], index: 13, kind: input, shape index: {}]
  %s14 = inlined_call_operand.hbm [shape: f32[2,8,32], index: 14, kind: output, shape index: {}]
  %s15 = sld [smem:[#allocation0]]
  $region121: #{tpu_custom_call.1} parent=0
    _
  %s17 = ssub.s32 1, %s15
  %s18 = scalar_select 0, %s17, %s15
  $region1: #{tpu_custom_call.1} parent=0
    #allocation6 [shape = 'u8[1024]{0}', space=smem, size = 0x400, scoped, tag = 'input window, operand 0, single buffered']
    #allocation7 [shape = 's32[2]{0}', space=sflag, size = 0x8, scoped, tag = 'scoped memory for tpu_custom_call.1']
    #allocation8 [shape = 's32[2]{0}', space=sflag, size = 0x8, scoped, tag = 'scoped memory for tpu_custom_call.1']
    #allocation9 [shape = 's32[2]{0}', space=sflag, size = 0x8, scoped, tag = 'scoped memory for tpu_custom_call.1']
    #allocation10 [shape = 's32[2]{0}', space=sflag, size = 0x8, scoped, tag = 'scoped memory for tpu_custom_call.1']
    #allocation11 [shape = 'u8[1024]{0}', space=smem, size = 0x400, scoped, tag = 'input window, operand 1, single buffered']
    #allocation12 [shape = 'u8[512]{0}', space=smem, size = 0x200, scoped, tag = 'input window, operand 2, single buffered']
    #allocation13 [shape = 's32[1]{0}', space=sflag, size = 0x4, scoped, tag = 'scoped memory for tpu_custom_call.1']
    #allocation14 [shape = 'u8[8192]{0}', space=vmem, size = 0x2000, scoped, tag = 'input window, operand 4, single buffered']
    #allocation15 [shape = 'u8[8192]{0}', space=vmem, size = 0x2000, scoped, tag = 'input window, operand 6, single buffered']
    #allocation16 [shape = 's32[1]{0}', space=sflag, size = 0x4, scoped, tag = 'scoped memory for tpu_custom_call.1']
    #allocation17 [shape = 'u8[16384]{0}', space=vmem, size = 0x4000, scoped, tag = 'input window, operand 11']
    #allocation18 [shape = 'u8[8192]{0}', space=vmem, size = 0x2000, scoped, tag = 'output window, operand 0, single buffered']
    %19 = vsyncpa [#allocation9], 0
    %20 = vsyncpa [#allocation10], 0
    %21 = vsyncpa [#allocation13], 0
    %22 = vsyncpa [#allocation7], 0
    %23 = vsyncpa [#allocation16], 0
    %24 = vsyncpa [#allocation8], 0
    loop: start=0, step=1, limit=4
    $region2: #{tpu_custom_call.1} parent=1 // loop_pre_header
      _
    $region3: #{tpu_custom_call.1} parent=1 // loop_header
      %s26 = sphi 0, %s30
      %p27 = scmp.ge.s32.totalorder %s26, 4
      %s33 = sphi 0, %s45
      %s34 = sphi 0, %s41
      %s35 = sphi 0, %s33
      %s36 = sphi 0, %s34
      %s37 = sphi 0, %s35
      %s38 = sphi 0, %s36
      %s46 = sphi 0, %s46
      %s48 = sphi 0, %s46
      %s49 = sphi 0, %s48
      %s63 = sphi 0, %s49
      %s67 = sphi 0, %s67
      %s69 = sphi 0, %s67
      %s70 = sphi 0, %s69
      %s84 = sphi 0, %s70
      %s88 = sphi 0, %s88
      %s90 = sphi 0, %s88
      %s91 = sphi 0, %s90
      %s105 = sphi 0, %s91
      %s111 = sphi 0, %s113
      %s114 = sphi 0, %s111
      %s115 = sphi 0, %s114
      %s131 = sphi 0, %s115
      %s137 = sphi 0, %s139
      %s140 = sphi 0, %s137
      %s141 = sphi 0, %s140
      %s157 = sphi 0, %s141
      %s163 = sphi 0, %s165
      %s166 = sphi 0, %s163
      %s167 = sphi 0, %s166
      %s183 = sphi 0, %s167
      %s189 = sphi 0, %s191
      %s192 = sphi 0, %s189
      %s193 = sphi 0, %s192
      %s209 = sphi 0, %s193
      %s215 = sphi 0, %s217
      %s218 = sphi 0, %s215
      %s219 = sphi 0, %s218
      %s235 = sphi 0, %s219
      %s241 = sphi 0, %s243
      %s244 = sphi 0, %s241
      %s245 = sphi 0, %s244
      %s261 = sphi 0, %s245
      %s267 = sphi 0, %s269
      %s270 = sphi 0, %s267
      %s271 = sphi 0, %s270
      %s287 = sphi 0, %s271
      %s293 = sphi 0, %s295
      %s296 = sphi 0, %s293
      %s297 = sphi 0, %s296
      %s313 = sphi 0, %s297
      %s319 = sphi 0, %s321
      %s322 = sphi 0, %s319
      %s323 = sphi 0, %s322
      %s339 = sphi 0, %s323
      %s345 = sphi 0, %s347
      %s348 = sphi 0, %s345
      %s349 = sphi 0, %s348
      %s365 = sphi 0, %s349
      %s371 = sphi 0, %s373
      %s374 = sphi 0, %s371
      %s375 = sphi 0, %s374
      %s391 = sphi 0, %s375
      %s397 = sphi 0, %s399
      %s400 = sphi 0, %s397
      %s401 = sphi 0, %s400
      %s417 = sphi 0, %s401
    $region4: #{tpu_custom_call.1} parent=1 // loop_header_branch
      %29 = sbr.rel (%p27) target = $region8
    $region5: #{tpu_custom_call.1} parent=1 // loop_body
      %s31 = ssub.s32 %s26, 1
      %s32 = ssub.s32 %s26, 2
      %s39 = sadd.s32 1, %s34
      %p40 = scmp.ge.s32.totalorder %s39, 2
      %s41 = scalar_select %p40, 0, %s39
      %s42 = sadd.s32 1, %s33
      %s43 = scalar_select %p40, %s42, %s33
      %p44 = scmp.ge.s32.totalorder %s43, 1
      %s45 = scalar_select %p44, 0, %s43
      %s47 = sadd.s32 %s46, 1
      %p50 = scmp.eq.s32.totalorder %s26, 1
      %p51 = scmp.ne.s32.totalorder %s46, %s48
      %p52 = scmp.eq.s32.totalorder %s26, 0
      %p53 = por %p51, %p52
      %p54 = scmp.ne.s32.totalorder %s46, %s48
      %p55 = scmp.eq.s32.totalorder %s31, 1
      %p56 = por %p54, %p55
      %p57 = scmp.ne.s32.totalorder %s48, %s49
      %p58 = scmp.eq.s32.totalorder %s31, 0
      %p59 = por %p57, %p58
      %p60 = scmp.ne.s32.totalorder %s48, %s49
      %p61 = scmp.eq.s32.totalorder %s32, 1
      %p62 = por %p60, %p61
      %p64 = scmp.ne.s32.totalorder %s49, %s63
      %p65 = scmp.eq.s32.totalorder %s32, 0
      %p66 = por %p64, %p65
      %s68 = sadd.s32 %s67, 1
      %p71 = scmp.eq.s32.totalorder %s26, 1
      %p72 = scmp.ne.s32.totalorder %s67, %s69
      %p73 = scmp.eq.s32.totalorder %s26, 0
      %p74 = por %p72, %p73
      %p75 = scmp.ne.s32.totalorder %s67, %s69
      %p76 = scmp.eq.s32.totalorder %s31, 1
      %p77 = por %p75, %p76
      %p78 = scmp.ne.s32.totalorder %s69, %s70
      %p79 = scmp.eq.s32.totalorder %s31, 0
      %p80 = por %p78, %p79
      %p81 = scmp.ne.s32.totalorder %s69, %s70
      %p82 = scmp.eq.s32.totalorder %s32, 1
      %p83 = por %p81, %p82
      %p85 = scmp.ne.s32.totalorder %s70, %s84
      %p86 = scmp.eq.s32.totalorder %s32, 0
      %p87 = por %p85, %p86
      %s89 = sadd.s32 %s88, 1
      %p92 = scmp.eq.s32.totalorder %s26, 1
      %p93 = scmp.ne.s32.totalorder %s88, %s90
      %p94 = scmp.eq.s32.totalorder %s26, 0
      %p95 = por %p93, %p94
      %p96 = scmp.ne.s32.totalorder %s88, %s90
      %p97 = scmp.eq.s32.totalorder %s31, 1
      %p98 = por %p96, %p97
      %p99 = scmp.ne.s32.totalorder %s90, %s91
      %p100 = scmp.eq.s32.totalorder %s31, 0
      %p101 = por %p99, %p100
      %p102 = scmp.ne.s32.totalorder %s90, %s91
      %p103 = scmp.eq.s32.totalorder %s32, 1
      %p104 = por %p102, %p103
      %p106 = scmp.ne.s32.totalorder %s91, %s105
      %p107 = scmp.eq.s32.totalorder %s32, 0
      %p108 = por %p106, %p107
      %s109 = ssub.s32 %s33, %s45
      %p110 = scmp.eq.s32.totalorder %s109, 0
      %s112 = sadd.s32 %s111, 1
      %s113 = scalar_select %p110, %s111, %s112
      %p116 = pneg %p110
      %p117 = scmp.eq.s32.totalorder %s26, 1
      %p118 = por %p116, %p117
      %p119 = scmp.ne.s32.totalorder %s111, %s114
      %p120 = scmp.eq.s32.totalorder %s26, 0
      %p121 = por %p119, %p120
      %p122 = scmp.ne.s32.totalorder %s111, %s114
      %p123 = scmp.eq.s32.totalorder %s31, 1
      %p124 = por %p122, %p123
      %p125 = scmp.ne.s32.totalorder %s114, %s115
      %p126 = scmp.eq.s32.totalorder %s31, 0
      %p127 = por %p125, %p126
      %p128 = scmp.ne.s32.totalorder %s114, %s115
      %p129 = scmp.eq.s32.totalorder %s32, 1
      %p130 = por %p128, %p129
      %p132 = scmp.ne.s32.totalorder %s115, %s131
      %p133 = scmp.eq.s32.totalorder %s32, 0
      %p134 = por %p132, %p133
      %s135 = ssub.s32 %s33, %s45
      %p136 = scmp.eq.s32.totalorder %s135, 0
      %s138 = sadd.s32 %s137, 1
      %s139 = scalar_select %p136, %s137, %s138
      %p142 = pneg %p136
      %p143 = scmp.eq.s32.totalorder %s26, 1
      %p144 = por %p142, %p143
      %p145 = scmp.ne.s32.totalorder %s137, %s140
      %p146 = scmp.eq.s32.totalorder %s26, 0
      %p147 = por %p145, %p146
      %p148 = scmp.ne.s32.totalorder %s137, %s140
      %p149 = scmp.eq.s32.totalorder %s31, 1
      %p150 = por %p148, %p149
      %p151 = scmp.ne.s32.totalorder %s140, %s141
      %p152 = scmp.eq.s32.totalorder %s31, 0
      %p153 = por %p151, %p152
      %p154 = scmp.ne.s32.totalorder %s140, %s141
      %p155 = scmp.eq.s32.totalorder %s32, 1
      %p156 = por %p154, %p155
      %p158 = scmp.ne.s32.totalorder %s141, %s157
      %p159 = scmp.eq.s32.totalorder %s32, 0
      %p160 = por %p158, %p159
      %s161 = ssub.s32 %s33, %s45
      %p162 = scmp.eq.s32.totalorder %s161, 0
      %s164 = sadd.s32 %s163, 1
      %s165 = scalar_select %p162, %s163, %s164
      %p168 = pneg %p162
      %p169 = scmp.eq.s32.totalorder %s26, 1
      %p170 = por %p168, %p169
      %p171 = scmp.ne.s32.totalorder %s163, %s166
      %p172 = scmp.eq.s32.totalorder %s26, 0
      %p173 = por %p171, %p172
      %p174 = scmp.ne.s32.totalorder %s163, %s166
      %p175 = scmp.eq.s32.totalorder %s31, 1
      %p176 = por %p174, %p175
      %p177 = scmp.ne.s32.totalorder %s166, %s167
      %p178 = scmp.eq.s32.totalorder %s31, 0
      %p179 = por %p177, %p178
      %p180 = scmp.ne.s32.totalorder %s166, %s167
      %p181 = scmp.eq.s32.totalorder %s32, 1
      %p182 = por %p180, %p181
      %p184 = scmp.ne.s32.totalorder %s167, %s183
      %p185 = scmp.eq.s32.totalorder %s32, 0
      %p186 = por %p184, %p185
      %s187 = ssub.s32 %s33, %s45
      %p188 = scmp.eq.s32.totalorder %s187, 0
      %s190 = sadd.s32 %s189, 1
      %s191 = scalar_select %p188, %s189, %s190
      %p194 = pneg %p188
      %p195 = scmp.eq.s32.totalorder %s26, 1
      %p196 = por %p194, %p195
      %p197 = scmp.ne.s32.totalorder %s189, %s192
      %p198 = scmp.eq.s32.totalorder %s26, 0
      %p199 = por %p197, %p198
      %p200 = scmp.ne.s32.totalorder %s189, %s192
      %p201 = scmp.eq.s32.totalorder %s31, 1
      %p202 = por %p200, %p201
      %p203 = scmp.ne.s32.totalorder %s192, %s193
      %p204 = scmp.eq.s32.totalorder %s31, 0
      %p205 = por %p203, %p204
      %p206 = scmp.ne.s32.totalorder %s192, %s193
      %p207 = scmp.eq.s32.totalorder %s32, 1
      %p208 = por %p206, %p207
      %p210 = scmp.ne.s32.totalorder %s193, %s209
      %p211 = scmp.eq.s32.totalorder %s32, 0
      %p212 = por %p210, %p211
      %s213 = ssub.s32 %s34, %s41
      %p214 = scmp.eq.s32.totalorder %s213, 0
      %s216 = sadd.s32 %s215, 1
      %s217 = scalar_select %p214, %s215, %s216
      %p220 = pneg %p214
      %p221 = scmp.eq.s32.totalorder %s26, 1
      %p222 = por %p220, %p221
      %p223 = scmp.ne.s32.totalorder %s215, %s218
      %p224 = scmp.eq.s32.totalorder %s26, 0
      %p225 = por %p223, %p224
      %p226 = scmp.ne.s32.totalorder %s215, %s218
      %p227 = scmp.eq.s32.totalorder %s31, 1
      %p228 = por %p226, %p227
      %p229 = scmp.ne.s32.totalorder %s218, %s219
      %p230 = scmp.eq.s32.totalorder %s31, 0
      %p231 = por %p229, %p230
      %p232 = scmp.ne.s32.totalorder %s218, %s219
      %p233 = scmp.eq.s32.totalorder %s32, 1
      %p234 = por %p232, %p233
      %p236 = scmp.ne.s32.totalorder %s219, %s235
      %p237 = scmp.eq.s32.totalorder %s32, 0
      %p238 = por %p236, %p237
      %s239 = ssub.s32 %s34, %s41
      %p240 = scmp.eq.s32.totalorder %s239, 0
      %s242 = sadd.s32 %s241, 1
      %s243 = scalar_select %p240, %s241, %s242
      %p246 = pneg %p240
      %p247 = scmp.eq.s32.totalorder %s26, 1
      %p248 = por %p246, %p247
      %p249 = scmp.ne.s32.totalorder %s241, %s244
      %p250 = scmp.eq.s32.totalorder %s26, 0
      %p251 = por %p249, %p250
      %p252 = scmp.ne.s32.totalorder %s241, %s244
      %p253 = scmp.eq.s32.totalorder %s31, 1
      %p254 = por %p252, %p253
      %p255 = scmp.ne.s32.totalorder %s244, %s245
      %p256 = scmp.eq.s32.totalorder %s31, 0
      %p257 = por %p255, %p256
      %p258 = scmp.ne.s32.totalorder %s244, %s245
      %p259 = scmp.eq.s32.totalorder %s32, 1
      %p260 = por %p258, %p259
      %p262 = scmp.ne.s32.totalorder %s245, %s261
      %p263 = scmp.eq.s32.totalorder %s32, 0
      %p264 = por %p262, %p263
      %s265 = ssub.s32 %s34, %s41
      %p266 = scmp.eq.s32.totalorder %s265, 0
      %s268 = sadd.s32 %s267, 1
      %s269 = scalar_select %p266, %s267, %s268
      %p272 = pneg %p266
      %p273 = scmp.eq.s32.totalorder %s26, 1
      %p274 = por %p272, %p273
      %p275 = scmp.ne.s32.totalorder %s267, %s270
      %p276 = scmp.eq.s32.totalorder %s26, 0
      %p277 = por %p275, %p276
      %p278 = scmp.ne.s32.totalorder %s267, %s270
      %p279 = scmp.eq.s32.totalorder %s31, 1
      %p280 = por %p278, %p279
      %p281 = scmp.ne.s32.totalorder %s270, %s271
      %p282 = scmp.eq.s32.totalorder %s31, 0
      %p283 = por %p281, %p282
      %p284 = scmp.ne.s32.totalorder %s270, %s271
      %p285 = scmp.eq.s32.totalorder %s32, 1
      %p286 = por %p284, %p285
      %p288 = scmp.ne.s32.totalorder %s271, %s287
      %p289 = scmp.eq.s32.totalorder %s32, 0
      %p290 = por %p288, %p289
      %s291 = ssub.s32 %s34, %s41
      %p292 = scmp.eq.s32.totalorder %s291, 0
      %s294 = sadd.s32 %s293, 1
      %s295 = scalar_select %p292, %s293, %s294
      %p298 = pneg %p292
      %p299 = scmp.eq.s32.totalorder %s26, 1
      %p300 = por %p298, %p299
      %p301 = scmp.ne.s32.totalorder %s293, %s296
      %p302 = scmp.eq.s32.totalorder %s26, 0
      %p303 = por %p301, %p302
      %p304 = scmp.ne.s32.totalorder %s293, %s296
      %p305 = scmp.eq.s32.totalorder %s31, 1
      %p306 = por %p304, %p305
      %p307 = scmp.ne.s32.totalorder %s296, %s297
      %p308 = scmp.eq.s32.totalorder %s31, 0
      %p309 = por %p307, %p308
      %p310 = scmp.ne.s32.totalorder %s296, %s297
      %p311 = scmp.eq.s32.totalorder %s32, 1
      %p312 = por %p310, %p311
      %p314 = scmp.ne.s32.totalorder %s297, %s313
      %p315 = scmp.eq.s32.totalorder %s32, 0
      %p316 = por %p314, %p315
      %s317 = ssub.s32 %s34, %s41
      %p318 = scmp.eq.s32.totalorder %s317, 0
      %s320 = sadd.s32 %s319, 1
      %s321 = scalar_select %p318, %s319, %s320
      %p324 = pneg %p318
      %p325 = scmp.eq.s32.totalorder %s26, 1
      %p326 = por %p324, %p325
      %p327 = scmp.ne.s32.totalorder %s319, %s322
      %p328 = scmp.eq.s32.totalorder %s26, 0
      %p329 = por %p327, %p328
      %p330 = scmp.ne.s32.totalorder %s319, %s322
      %p331 = scmp.eq.s32.totalorder %s31, 1
      %p332 = por %p330, %p331
      %p333 = scmp.ne.s32.totalorder %s322, %s323
      %p334 = scmp.eq.s32.totalorder %s31, 0
      %p335 = por %p333, %p334
      %p336 = scmp.ne.s32.totalorder %s322, %s323
      %p337 = scmp.eq.s32.totalorder %s32, 1
      %p338 = por %p336, %p337
      %p340 = scmp.ne.s32.totalorder %s323, %s339
      %p341 = scmp.eq.s32.totalorder %s32, 0
      %p342 = por %p340, %p341
      %s343 = ssub.s32 %s34, %s41
      %p344 = scmp.eq.s32.totalorder %s343, 0
      %s346 = sadd.s32 %s345, 1
      %s347 = scalar_select %p344, %s345, %s346
      %p350 = pneg %p344
      %p351 = scmp.eq.s32.totalorder %s26, 1
      %p352 = por %p350, %p351
      %p353 = scmp.ne.s32.totalorder %s345, %s348
      %p354 = scmp.eq.s32.totalorder %s26, 0
      %p355 = por %p353, %p354
      %p356 = scmp.ne.s32.totalorder %s345, %s348
      %p357 = scmp.eq.s32.totalorder %s31, 1
      %p358 = por %p356, %p357
      %p359 = scmp.ne.s32.totalorder %s348, %s349
      %p360 = scmp.eq.s32.totalorder %s31, 0
      %p361 = por %p359, %p360
      %p362 = scmp.ne.s32.totalorder %s348, %s349
      %p363 = scmp.eq.s32.totalorder %s32, 1
      %p364 = por %p362, %p363
      %p366 = scmp.ne.s32.totalorder %s349, %s365
      %p367 = scmp.eq.s32.totalorder %s32, 0
      %p368 = por %p366, %p367
      %s369 = ssub.s32 %s34, %s41
      %p370 = scmp.eq.s32.totalorder %s369, 0
      %s372 = sadd.s32 %s371, 1
      %s373 = scalar_select %p370, %s371, %s372
      %p376 = pneg %p370
      %p377 = scmp.eq.s32.totalorder %s26, 1
      %p378 = por %p376, %p377
      %p379 = scmp.ne.s32.totalorder %s371, %s374
      %p380 = scmp.eq.s32.totalorder %s26, 0
      %p381 = por %p379, %p380
      %p382 = scmp.ne.s32.totalorder %s371, %s374
      %p383 = scmp.eq.s32.totalorder %s31, 1
      %p384 = por %p382, %p383
      %p385 = scmp.ne.s32.totalorder %s374, %s375
      %p386 = scmp.eq.s32.totalorder %s31, 0
      %p387 = por %p385, %p386
      %p388 = scmp.ne.s32.totalorder %s374, %s375
      %p389 = scmp.eq.s32.totalorder %s32, 1
      %p390 = por %p388, %p389
      %p392 = scmp.ne.s32.totalorder %s375, %s391
      %p393 = scmp.eq.s32.totalorder %s32, 0
      %p394 = por %p392, %p393
      %s395 = ssub.s32 %s33, %s45
      %p396 = scmp.eq.s32.totalorder %s395, 0
      %s398 = sadd.s32 %s397, 1
      %s399 = scalar_select %p396, %s397, %s398
      %p402 = pneg %p396
      %p403 = scmp.eq.s32.totalorder %s26, 1
      %p404 = por %p402, %p403
      %p405 = scmp.ne.s32.totalorder %s397, %s400
      %p406 = scmp.eq.s32.totalorder %s26, 0
      %p407 = por %p405, %p406
      %p408 = scmp.ne.s32.totalorder %s397, %s400
      %p409 = scmp.eq.s32.totalorder %s31, 1
      %p410 = por %p408, %p409
      %p411 = scmp.ne.s32.totalorder %s400, %s401
      %p412 = scmp.eq.s32.totalorder %s31, 0
      %p413 = por %p411, %p412
      %p414 = scmp.ne.s32.totalorder %s400, %s401
      %p415 = scmp.eq.s32.totalorder %s32, 1
      %p416 = por %p414, %p415
      %p418 = scmp.ne.s32.totalorder %s401, %s417
      %p419 = scmp.eq.s32.totalorder %s32, 0
      %p420 = por %p418, %p419
      %p421 = scmp.le.s32.totalorder 1, %s26
      %p422 = scmp.lt.s32.totalorder %s26, 3
      %p423 = pnand %p421, %p422
      %p424 = pneg %p423
      // Predicated region
      $region9: #{tpu_custom_call.1} parent=5 // pred_check
        _
      $region10: #{tpu_custom_call.1} parent=5 // pred_check_branch
        %426 = sbr.rel (%p423) target = $region12
      $region11: #{tpu_custom_call.1} parent=5 // pred_region
        %s427 = ssub.s32 %s26, 1
        // Predicated region
        $region13: #{tpu_custom_call.1} parent=11 // pred_check
          %p428 = pneg %p59
        $region14: #{tpu_custom_call.1} parent=11 // pred_check_branch
          %430 = sbr.rel (%p428) target = $region16
        $region15: #{tpu_custom_call.1} parent=11 // pred_region
          %s432 = ssub.s32 32, 32
          %433 = vsyncadd [#allocation9], %s432
          %436 = dma.hbm_to_smem %s0, 32, [#allocation6], [#allocation9]
        $region16: #{tpu_custom_call.1} parent=11 // pred_fallthru
          _
        // Predicated region
        $region17: #{tpu_custom_call.1} parent=11 // pred_check
          %p437 = pneg %p80
        $region18: #{tpu_custom_call.1} parent=11 // pred_check_branch
          %439 = sbr.rel (%p437) target = $region20
        $region19: #{tpu_custom_call.1} parent=11 // pred_region
          %s441 = ssub.s32 32, 32
          %442 = vsyncadd [#allocation10], %s441
          %s444 = sshll.u32 %s1, 4
          %s445 = int_to_ptr.vmem [resolvable:$true] %s444
          %447 = dma.vmem_to_smem %s445, 32, [#allocation11], [#allocation10]
        $region20: #{tpu_custom_call.1} parent=11 // pred_fallthru
          _
        // Predicated region
        $region21: #{tpu_custom_call.1} parent=11 // pred_check
          %p448 = pneg %p101
        $region22: #{tpu_custom_call.1} parent=11 // pred_check_branch
          %450 = sbr.rel (%p448) target = $region24
        $region23: #{tpu_custom_call.1} parent=11 // pred_region
          %s452 = ssub.s32 16, 16
          %453 = vsyncadd [#allocation13], %s452
          %s455 = sshll.u32 %s2, 4
          %s456 = int_to_ptr.vmem [resolvable:$true] %s455
          %458 = dma.vmem_to_smem %s456, 16, [#allocation12], [#allocation13]
        $region24: #{tpu_custom_call.1} parent=11 // pred_fallthru
          _
        // Predicated region
        $region25: #{tpu_custom_call.1} parent=11 // pred_check
          %p459 = pneg %p127
        $region26: #{tpu_custom_call.1} parent=11 // pred_check_branch
          %461 = sbr.rel (%p459) target = $region28
        $region27: #{tpu_custom_call.1} parent=11 // pred_region
          %s462 = smul.u32 2, %s35
          %p463 = scmp.lt.s32.totalorder %s462, 1
          %s464 = scalar_select %p463, %s462, 1
          %s465 = smul.addr %s464, 8
          %s466 = scalar_lea.vmem %s3, %s465
          %s467 = smul.u32 2, %s35
        $region28: #{tpu_custom_call.1} parent=11 // pred_fallthru
          _
        // Predicated region
        $region29: #{tpu_custom_call.1} parent=11 // pred_check
          %p468 = pneg %p153
        $region30: #{tpu_custom_call.1} parent=11 // pred_check_branch
          %470 = sbr.rel (%p468) target = $region32
        $region31: #{tpu_custom_call.1} parent=11 // pred_region
          %s471 = smul.u32 2, %s35
          %s473 = ssub.s32 256, 256
          %474 = vsyncadd [#allocation7], %s473
          %s475 = smul.addr %s471, 128
          %s476 = scalar_lea.hbm %s4, %s475
          %s477 = sshll.u32 [#allocation14], 4
          %s478 = int_to_ptr.vmem [resolvable:$true] %s477
          %483 = dma.hbm_to_vmem [thread:$0]  %s476, 256, %s478, [#allocation7], 128, 128, 8
        $region32: #{tpu_custom_call.1} parent=11 // pred_fallthru
          _
        // Predicated region
        $region33: #{tpu_custom_call.1} parent=11 // pred_check
          %p484 = pneg %p179
        $region34: #{tpu_custom_call.1} parent=11 // pred_check_branch
          %486 = sbr.rel (%p484) target = $region36
        $region35: #{tpu_custom_call.1} parent=11 // pred_region
          %s487 = smul.u32 2, %s35
          %p488 = scmp.lt.s32.totalorder %s487, 1
          %s489 = scalar_select %p488, %s487, 1
          %s490 = scalar_lea.vmem %s5, %s489
          %s491 = smul.u32 2, %s35
        $region36: #{tpu_custom_call.1} parent=11 // pred_fallthru
          _
        // Predicated region
        $region37: #{tpu_custom_call.1} parent=11 // pred_check
          %p492 = pneg %p205
        $region38: #{tpu_custom_call.1} parent=11 // pred_check_branch
          %494 = sbr.rel (%p492) target = $region40
        $region39: #{tpu_custom_call.1} parent=11 // pred_region
          %s495 = smul.u32 2, %s35
          %s497 = ssub.s32 256, 256
          %498 = vsyncadd [#allocation16], %s497
          %s499 = smul.addr %s495, 128
          %s500 = scalar_lea.hbm %s6, %s499
          %s501 = sshll.u32 [#allocation15], 4
          %s502 = int_to_ptr.vmem [resolvable:$true] %s501
          %507 = dma.hbm_to_vmem [thread:$0]  %s500, 256, %s502, [#allocation16], 128, 128, 8
        $region40: #{tpu_custom_call.1} parent=11 // pred_fallthru
          _
      $region12: #{tpu_custom_call.1} parent=5 // pred_fallthru
        _
      %p508 = scmp.lt.s32.totalorder %s26, 2
      // Predicated region
      $region41: #{tpu_custom_call.1} parent=5 // pred_check
        %p509 = pneg %p508
      $region42: #{tpu_custom_call.1} parent=5 // pred_check_branch
        %511 = sbr.rel (%p509) target = $region44
      $region43: #{tpu_custom_call.1} parent=5 // pred_region
        // Predicated region
        $region45: #{tpu_custom_call.1} parent=43 // pred_check
          %p512 = pneg %p225
        $region46: #{tpu_custom_call.1} parent=43 // pred_check_branch
          %514 = sbr.rel (%p512) target = $region48
        $region47: #{tpu_custom_call.1} parent=43 // pred_region
          %p515 = scmp.lt.s32.totalorder %s34, 1
          %s516 = scalar_select %p515, %s34, 1
          %s517 = smul.addr %s516, 4
          %s518 = smul.addr %s517, 4
          %s519 = scalar_lea.vmem %s7, %s518
        $region48: #{tpu_custom_call.1} parent=43 // pred_fallthru
          _
        // Predicated region
        $region49: #{tpu_custom_call.1} parent=43 // pred_check
          %p520 = pneg %p251
        $region50: #{tpu_custom_call.1} parent=43 // pred_check_branch
          %522 = sbr.rel (%p520) target = $region52
        $region51: #{tpu_custom_call.1} parent=43 // pred_region
          %p523 = scmp.lt.s32.totalorder %s34, 1
          %s524 = scalar_select %p523, %s34, 1
          %s525 = smul.addr %s524, 4
          %s526 = smul.addr %s525, 4
          %s527 = scalar_lea.vmem %s8, %s526
        $region52: #{tpu_custom_call.1} parent=43 // pred_fallthru
          _
        // Predicated region
        $region53: #{tpu_custom_call.1} parent=43 // pred_check
          %p528 = pneg %p277
        $region54: #{tpu_custom_call.1} parent=43 // pred_check_branch
          %530 = sbr.rel (%p528) target = $region56
        $region55: #{tpu_custom_call.1} parent=43 // pred_region
          %p531 = scmp.lt.s32.totalorder %s34, 1
          %s532 = scalar_select %p531, %s34, 1
          %s533 = smul.addr %s532, 4
          %s534 = smul.addr %s533, 4
          %s535 = scalar_lea.vmem %s9, %s534
        $region56: #{tpu_custom_call.1} parent=43 // pred_fallthru
          _
        // Predicated region
        $region57: #{tpu_custom_call.1} parent=43 // pred_check
          %p536 = pneg %p303
        $region58: #{tpu_custom_call.1} parent=43 // pred_check_branch
          %538 = sbr.rel (%p536) target = $region60
        $region59: #{tpu_custom_call.1} parent=43 // pred_region
          %p539 = scmp.lt.s32.totalorder %s34, 1
          %s540 = scalar_select %p539, %s34, 1
          %s541 = smul.addr %s540, 4
          %s542 = smul.addr %s541, 4
          %s543 = scalar_lea.vmem %s10, %s542
        $region60: #{tpu_custom_call.1} parent=43 // pred_fallthru
          _
        // Predicated region
        $region61: #{tpu_custom_call.1} parent=43 // pred_check
          %p544 = pneg %p329
        $region62: #{tpu_custom_call.1} parent=43 // pred_check_branch
          %546 = sbr.rel (%p544) target = $region64
        $region63: #{tpu_custom_call.1} parent=43 // pred_region
          %s547 = sand.u32 %s26, 1
          %s548 = scalar_lea.sflag [#allocation7], %s547
          %s549 = sand.u32 %s319, 1
          %s550 = smul.addr %s549, 16
          %s551 = scalar_lea.vmem [#allocation17], %s550
          %s553 = ssub.s32 256, 256
          %554 = vsyncadd %s548, %s553
          %s555 = smul.addr %s34, 4
          %s556 = smul.addr %s555, 64
          %s557 = scalar_lea.hbm %s11, %s556
          %s558 = sshll.u32 %s551, 4
          %s559 = int_to_ptr.vmem [resolvable:$true] %s558
          %564 = dma.hbm_to_vmem [thread:$0]  %s557, 256, %s559, %s548, 64, 64, 4
        $region64: #{tpu_custom_call.1} parent=43 // pred_fallthru
          _
        // Predicated region
        $region65: #{tpu_custom_call.1} parent=43 // pred_check
          %p565 = pneg %p355
        $region66: #{tpu_custom_call.1} parent=43 // pred_check_branch
          %567 = sbr.rel (%p565) target = $region68
        $region67: #{tpu_custom_call.1} parent=43 // pred_region
          %p568 = scmp.lt.s32.totalorder %s34, 1
          %s569 = scalar_select %p568, %s34, 1
          %s570 = smul.addr %s569, 5
          %s571 = smul.addr %s570, 4
          %s572 = scalar_lea.vmem %s12, %s571
        $region68: #{tpu_custom_call.1} parent=43 // pred_fallthru
          _
        // Predicated region
        $region69: #{tpu_custom_call.1} parent=43 // pred_check
          %p573 = pneg %p381
        $region70: #{tpu_custom_call.1} parent=43 // pred_check_branch
          %575 = sbr.rel (%p573) target = $region72
        $region71: #{tpu_custom_call.1} parent=43 // pred_region
          %p576 = scmp.lt.s32.totalorder %s34, 1
          %s577 = scalar_select %p576, %s34, 1
          %s578 = smul.addr %s577, 9
          %s579 = smul.addr %s578, 4
          %s580 = scalar_lea.vmem %s13, %s579
        $region72: #{tpu_custom_call.1} parent=43 // pred_fallthru
          _
      $region44: #{tpu_custom_call.1} parent=5 // pred_fallthru
        _
      %p581 = scmp.le.s32.totalorder 1, %s26
      %p582 = scmp.lt.s32.totalorder %s26, 3
      %p583 = pnand %p581, %p582
      %p584 = pneg %p583
      // Predicated region
      $region73: #{tpu_custom_call.1} parent=5 // pred_check
        _
      $region74: #{tpu_custom_call.1} parent=5 // pred_check_branch
        %586 = sbr.rel (%p583) target = $region76
      $region75: #{tpu_custom_call.1} parent=5 // pred_region
        %s587 = ssub.s32 %s26, 1
        // Predicated region
        $region77: #{tpu_custom_call.1} parent=75 // pred_check
          %p588 = pneg %p59
        $region78: #{tpu_custom_call.1} parent=75 // pred_check_branch
          %590 = sbr.rel (%p588) target = $region80
        $region79: #{tpu_custom_call.1} parent=75 // pred_region
          %591 = dma.done [#allocation9], 32
        $region80: #{tpu_custom_call.1} parent=75 // pred_fallthru
          _
        // Predicated region
        $region81: #{tpu_custom_call.1} parent=75 // pred_check
          %p592 = pneg %p80
        $region82: #{tpu_custom_call.1} parent=75 // pred_check_branch
          %594 = sbr.rel (%p592) target = $region84
        $region83: #{tpu_custom_call.1} parent=75 // pred_region
          %595 = dma.done [#allocation10], 32
        $region84: #{tpu_custom_call.1} parent=75 // pred_fallthru
          _
        // Predicated region
        $region85: #{tpu_custom_call.1} parent=75 // pred_check
          %p596 = pneg %p101
        $region86: #{tpu_custom_call.1} parent=75 // pred_check_branch
          %598 = sbr.rel (%p596) target = $region88
        $region87: #{tpu_custom_call.1} parent=75 // pred_region
          %599 = dma.done [#allocation13], 16
        $region88: #{tpu_custom_call.1} parent=75 // pred_fallthru
          _
        // Predicated region
        $region89: #{tpu_custom_call.1} parent=75 // pred_check
          %p600 = pneg %p153
        $region90: #{tpu_custom_call.1} parent=75 // pred_check_branch
          %602 = sbr.rel (%p600) target = $region92
        $region91: #{tpu_custom_call.1} parent=75 // pred_region
          %603 = dma.done [#allocation7], 256
        $region92: #{tpu_custom_call.1} parent=75 // pred_fallthru
          _
        // Predicated region
        $region93: #{tpu_custom_call.1} parent=75 // pred_check
          %p604 = pneg %p205
        $region94: #{tpu_custom_call.1} parent=75 // pred_check_branch
          %606 = sbr.rel (%p604) target = $region96
        $region95: #{tpu_custom_call.1} parent=75 // pred_region
          %607 = dma.done [#allocation16], 256
        $region96: #{tpu_custom_call.1} parent=75 // pred_fallthru
          _
        %s608 = sand.u32 %s31, 1
        %s609 = scalar_lea.sflag [#allocation7], %s608
        %s610 = sand.u32 %s322, 1
        %s611 = smul.addr %s610, 16
        %s612 = scalar_lea.vmem [#allocation17], %s611
        // Predicated region
        $region97: #{tpu_custom_call.1} parent=75 // pred_check
          %p613 = pneg %p335
        $region98: #{tpu_custom_call.1} parent=75 // pred_check_branch
          %615 = sbr.rel (%p613) target = $region100
        $region99: #{tpu_custom_call.1} parent=75 // pred_region
          %616 = dma.done %s609, 256
        $region100: #{tpu_custom_call.1} parent=75 // pred_fallthru
          _
        %617 = sfence
        %p618 = pneg %p59
        %p619 = pneg %p56
        %p620 = pneg %p80
        %p621 = pneg %p77
        %p622 = pneg %p101
        %p623 = pneg %p98
        %s624 = smul.u32 2, %s35
        %p625 = scmp.lt.s32.totalorder %s624, 1
        %s626 = scalar_select %p625, %s624, 1
        %s627 = smul.addr %s626, 8
        %s628 = scalar_lea.vmem %s3, %s627
        %p629 = pneg %p127
        %p630 = pneg %p124
        %p631 = pneg %p153
        %p632 = pneg %p150
        %s633 = smul.u32 2, %s35
        %p634 = scmp.lt.s32.totalorder %s633, 1
        %s635 = scalar_select %p634, %s633, 1
        %s636 = scalar_lea.vmem %s5, %s635
        %p637 = pneg %p179
        %p638 = pneg %p176
        %p639 = pneg %p205
        %p640 = pneg %p202
        %p641 = scmp.lt.s32.totalorder %s36, 1
        %s642 = scalar_select %p641, %s36, 1
        %s643 = smul.addr %s642, 4
        %s644 = smul.addr %s643, 4
        %s645 = scalar_lea.vmem %s7, %s644
        %p646 = pneg %p231
        %p647 = pneg %p228
        %p648 = scmp.lt.s32.totalorder %s36, 1
        %s649 = scalar_select %p648, %s36, 1
        %s650 = smul.addr %s649, 4
        %s651 = smul.addr %s650, 4
        %s652 = scalar_lea.vmem %s8, %s651
        %p653 = pneg %p257
        %p654 = pneg %p254
        %p655 = scmp.lt.s32.totalorder %s36, 1
        %s656 = scalar_select %p655, %s36, 1
        %s657 = smul.addr %s656, 4
        %s658 = smul.addr %s657, 4
        %s659 = scalar_lea.vmem %s9, %s658
        %p660 = pneg %p283
        %p661 = pneg %p280
        %p662 = scmp.lt.s32.totalorder %s36, 1
        %s663 = scalar_select %p662, %s36, 1
        %s664 = smul.addr %s663, 4
        %s665 = smul.addr %s664, 4
        %s666 = scalar_lea.vmem %s10, %s665
        %p667 = pneg %p309
        %p668 = pneg %p306
        %s669 = sand.u32 %s31, 1
        %s670 = scalar_lea.sflag [#allocation7], %s669
        %s671 = sand.u32 %s322, 1
        %s672 = smul.addr %s671, 16
        %s673 = scalar_lea.vmem [#allocation17], %s672
        %p674 = pneg %p335
        %p675 = pneg %p332
        %p676 = scmp.lt.s32.totalorder %s36, 1
        %s677 = scalar_select %p676, %s36, 1
        %s678 = smul.addr %s677, 5
        %s679 = smul.addr %s678, 4
        %s680 = scalar_lea.vmem %s12, %s679
        %p681 = pneg %p361
        %p682 = pneg %p358
        %p683 = scmp.lt.s32.totalorder %s36, 1
        %s684 = scalar_select %p683, %s36, 1
        %s685 = smul.addr %s684, 9
        %s686 = smul.addr %s685, 4
        %s687 = scalar_lea.vmem %s13, %s686
        %p688 = pneg %p387
        %p689 = pneg %p384
        %p690 = pneg %p413
        %p691 = pneg %p410
        %s692 = smul.u32 2, %s35
        %p693 = scmp.lt.s32.totalorder %s692, 1
        %s694 = scalar_select %p693, %s692, 1
        %s695 = smul.addr %s694, 8
        %s696 = scalar_lea.vmem %s3, %s695
        %s697 = smul.u32 2, %s35
        %s698 = smul.u32 2, %s35
        %s699 = smul.u32 2, %s35
        %p700 = scmp.lt.s32.totalorder %s699, 1
        %s701 = scalar_select %p700, %s699, 1
        %s702 = scalar_lea.vmem %s5, %s701
        %s703 = smul.u32 2, %s35
        %s704 = smul.u32 2, %s35
        %p705 = scmp.lt.s32.totalorder %s36, 1
        %s706 = scalar_select %p705, %s36, 1
        %s707 = smul.addr %s706, 4
        %s708 = smul.addr %s707, 4
        %s709 = scalar_lea.vmem %s7, %s708
        %p710 = scmp.lt.s32.totalorder %s36, 1
        %s711 = scalar_select %p710, %s36, 1
        %s712 = smul.addr %s711, 4
        %s713 = smul.addr %s712, 4
        %s714 = scalar_lea.vmem %s8, %s713
        %p715 = scmp.lt.s32.totalorder %s36, 1
        %s716 = scalar_select %p715, %s36, 1
        %s717 = smul.addr %s716, 4
        %s718 = smul.addr %s717, 4
        %s719 = scalar_lea.vmem %s9, %s718
        %p720 = scmp.lt.s32.totalorder %s36, 1
        %s721 = scalar_select %p720, %s36, 1
        %s722 = smul.addr %s721, 4
        %s723 = smul.addr %s722, 4
        %s724 = scalar_lea.vmem %s10, %s723
        %p725 = scmp.lt.s32.totalorder %s36, 1
        %s726 = scalar_select %p725, %s36, 1
        %s727 = smul.addr %s726, 5
        %s728 = smul.addr %s727, 4
        %s729 = scalar_lea.vmem %s12, %s728
        %p730 = scmp.lt.s32.totalorder %s36, 1
        %s731 = scalar_select %p730, %s36, 1
        %s732 = smul.addr %s731, 9
        %s733 = smul.addr %s732, 4
        %s734 = scalar_lea.vmem %s13, %s733
        %s735 = smul.u32 2, %s35
        %p737 = scmp.eq.s32.totalorder %s36, 0
        // Predicated region
        $region101: #{tpu_custom_call.1} parent=75 // pred_check
          %p738 = pneg %p737
        $region102: #{tpu_custom_call.1} parent=75 // pred_check_branch
          %740 = sbr.rel (%p738) target = $region104
        $region103: #{tpu_custom_call.1} parent=75 // pred_region
          %v741 = vld [vmem:[%s696] sm:$0xff]
          %v742 = vld [vmem:[%s696 + $0x8] sm:$0xff]
          %vm743 = vcmask 261120
          %744 = vst.msk [vmem:[#allocation2] sm:$0xff] %vm743, %v741
          %745 = vst.msk [vmem:[#allocation2 + $0x8] sm:$0xff] %vm743, %v742
          %v746 = vld [vmem:[#allocation14] sm:$0xff]
          %v747 = vld [vmem:[#allocation14 + $0x8] sm:$0xff]
          %v748 = vpack.c.bf16 %v747, %v746
          %749 = vst.msk [vmem:[#allocation3] sm:$0xff] %vm743, %v748
          %v750 = vld [vmem:[#allocation15] sm:$0xff]
          %v751 = vld [vmem:[#allocation15 + $0x8] sm:$0xff]
          %vm752 = vcmp.eq.f32.partialorder %v750, 0.0
          %vm753 = vcmp.eq.f32.partialorder %v751, 0.0
          %v754 = vsel %vm752, -1e+09, 0.0
          %v755 = vsel %vm753, -1e+09, 0.0
          %vm756 = vcmask 64512
          %757 = vst.msk [vmem:[#allocation4] sm:$0xff] %vm756, %v754
          %758 = vst.msk [vmem:[#allocation4 + $0x8] sm:$0xff] %vm756, %v755
          %v759 = vld [vmem:[%s702] sm:$0x1]
          %v760 = vld [vmem:[%s702 + $0x1] sm:$0x1]
          %vm761 = vcmp.eq.f32.partialorder %v759, 0.0
          %vm762 = vcmp.eq.f32.partialorder %v760, 0.0
          %v763 = vsel %vm761, -1e+09, 0.0
          %v764 = vsel %vm762, -1e+09, 0.0
          %vm765 = vcmask 57344
          %766 = vst.msk [vmem:[#allocation5] sm:$0x1] %vm765, %v763
          %767 = vst.msk [vmem:[#allocation5 + $0x1] sm:$0x1] %vm765, %v764
        $region104: #{tpu_custom_call.1} parent=75 // pred_fallthru
          _
        %v768 = vld [vmem:[#allocation2] sm:$0xff]
        %v769 = vld [vmem:[#allocation2 + $0x8] sm:$0xff]
        %s770 = smul.u32 %s36, 128
        %s771 = sld [smem:[#allocation6 + %s770]]
        %s772 = sld [smem:[#allocation11 + %s770]]
        %vm773 = vcmask 261120
        %v774 = vsel %vm773, %v768, 0.0
        %775 = vadd.xlane.f32.xlu0 %v774
        %v776 = vpop.xlane.xlu0 %775
        %v777 = vsel %vm773, %v769, 0.0
        %778 = vadd.xlane.f32.xlu0 %v777
        %v779 = vpop.xlane.xlu0 %778
        %v780 = vrcp.pop 32.0
        %v781 = vmul.f32 %v776, %v780
        %v782 = vmul.f32 %v779, %v780
        %v783 = vsub.f32 %v768, %v781
        %v784 = vsub.f32 %v769, %v782
        %v785 = vmul.f32 %v783, %v783
        %v786 = vmul.f32 %v784, %v784
        %v787 = vsel %vm773, %v785, 0.0
        %788 = vadd.xlane.f32.xlu0 %v787
        %v789 = vpop.xlane.xlu0 %788
        %v790 = vsel %vm773, %v786, 0.0
        %791 = vadd.xlane.f32.xlu0 %v790
        %v792 = vpop.xlane.xlu0 %791
        %v793 = vrcp.pop 31.0
        %v794 = vmul.f32 %v789, %v793
        %v795 = vmul.f32 %v792, %v793
        %v796 = vrsqrt.pop %v794
        %v797 = vmul.f32 %v794, %v796
        %vm798 = vcmp.eq.f32.partialorder %v794, inf
        %v799 = vsel %vm798, %v794, %v797
        %vm800 = vcmp.eq.f32.partialorder %v794, 0.0
        %v801 = vand.u32 %v794, 2147483648
        %v802 = vsel %vm800, %v801, %v799
        %v803 = vrsqrt.pop %v795
        %v804 = vmul.f32 %v795, %v803
        %vm805 = vcmp.eq.f32.partialorder %v795, inf
        %v806 = vsel %vm805, %v795, %v804
        %vm807 = vcmp.eq.f32.partialorder %v795, 0.0
        %v808 = vand.u32 %v795, 2147483648
        %v809 = vsel %vm807, %v808, %v806
        %v810 = vadd.f32 %v802, 1e-06
        %v811 = vadd.f32 %v809, 1e-06
        %v812 = vrcp.pop %v810
        %v813 = vrcp.pop %v811
        %v814 = vstv %s771
        %v815 = vmul.f32 %v814, %v783
        %v816 = vmul.f32 %v814, %v784
        %v817 = vmul.f32 %v815, %v812
        %v818 = vmul.f32 %v816, %v813
        %v819 = vstv %s772
        %v820 = vadd.f32 %v817, %v819
        %v821 = vadd.f32 %v818, %v819
        %v822 = vpack.c.bf16 %v821, %v820
        %v823 = vld [vmem:[%s709] sm:$0xf]
        %v824 = vld [vmem:[%s709 + $0x4] sm:$0xf]
        %v825 = vld [vmem:[%s709 + $0x8] sm:$0xf]
        %v826 = vld [vmem:[%s709 + $0xc] sm:$0xf]
        %v831 = vunpack.c.l.b16 %v823
        %v832 = vunpack.c.l.b16 %v824
        %v833 = vunpack.c.l.b16 %v825
        %v834 = vunpack.c.l.b16 %v826
        %v835 = vpack.c.b16 %v832, %v831
        %v836 = vpack.c.b16 %v834, %v833
        %v840 = vsel %vm773, %v822, 0
        %842 = vmatprep.subr.bf16.mxu0 0
        %843 = vmatpush1.bf16.msra.mxu0 %v835
        %844 = vmatprep.subr.bf16.mxu0 0
        %845 = vmatpush1.bf16.msra.mxu0 %v836
        %846 = vmatprep.subr.bf16.mxu0 0
        %847 = vmatpush1.bf16.msra.mxu0 0
        %848 = vmatprep.subr.bf16.mxu0 0
        %849 = vmatpush1.bf16.msra.mxu0 0
        %850 = vmatprep.subr.bf16.mxu0 0
        %851 = vmatpush1.bf16.msra.mxu0 0
        %852 = vmatprep.subr.bf16.mxu0 0
        %853 = vmatpush1.bf16.msra.mxu0 0
        %854 = vmatprep.subr.bf16.mxu0 0
        %855 = vmatpush1.bf16.msra.mxu0 0
        %856 = vmatprep.subr.bf16.mxu0 0
        %857 = vmatpush1.bf16.msra.mxu0 0
        %858 = vmatprep.subr.bf16.mxu0 0
        %859 = vmatpush1.bf16.msra.mxu0 0
        %860 = vmatprep.subr.bf16.mxu0 0
        %861 = vmatpush1.bf16.msra.mxu0 0
        %862 = vmatprep.subr.bf16.mxu0 0
        %863 = vmatpush1.bf16.msra.mxu0 0
        %864 = vmatprep.subr.bf16.mxu0 0
        %865 = vmatpush1.bf16.msra.mxu0 0
        %866 = vmatprep.subr.bf16.mxu0 0
        %867 = vmatpush1.bf16.msra.mxu0 0
        %868 = vmatprep.subr.bf16.mxu0 0
        %869 = vmatpush1.bf16.msra.mxu0 0
        %870 = vmatprep.subr.bf16.mxu0 0
        %871 = vmatpush1.bf16.msra.mxu0 0
        %872 = vmatprep.subr.bf16.mxu0 0
        %873 = vmatpush1.bf16.msra.mxu0 0
        %874 = vmatprep.mubr.bf16.mxu0 0
        %875 = vmatmul.mubr.bf16.gmra.mrb[0].mxu0 %v840
        %v876 = vpop.f32.mrb[0].mxu0
        %v877 = vadd.f32 0.0, %v876
        %v878 = vpop.f32.mrb[0].mxu0
        %v879 = vpop.f32.mrb[0].mxu0
        %v880 = vadd.f32 0.0, %v879
        %v881 = vpop.f32.mrb[0].mxu0
        %882 = vdwg.mxu0
        %v883 = vmul.f32 %v877, 0.35355338
        %v884 = vmul.f32 %v880, 0.35355338
        %v885 = vld [vmem:[#allocation4] sm:$0xff]
        %887 = vrot.lane.b32.xlu0 %v883, 120
        %v888 = vpop.permute.xlu0 %887
        %890 = vrot.lane.b32.xlu0 %v883, 112
        %v891 = vpop.permute.xlu0 %890
        %893 = vrot.lane.b32.xlu0 %v883, 104
        %v894 = vpop.permute.xlu0 %893
        %v896 = vcombine.low %v883, %v891
        %v897 = vcombine.high %v883, %v891
        %v899 = vunpack.c.l.s4 1983009808
        %v900 = vunpack.c.0.s8 %v899
        %v901 = vlaneseq
        %v902 = vshrl.u32 %v901, 7
        %v903 = vsub.s32 %v900, %v902
        %v904 = vrot.slane %v896, %v903
        %v906 = vunpack.c.l.s4 1983009808
        %v907 = vunpack.c.0.s8 %v906
        %v908 = vlaneseq
        %v909 = vshrl.u32 %v908, 7
        %v910 = vsub.s32 %v907, %v909
        %v911 = vrot.slane %v897, %v910
        %v912 = vcombine.low %v888, %v894
        %v913 = vcombine.high %v888, %v894
        %v915 = vunpack.c.l.s4 1983009808
        %v916 = vunpack.c.0.s8 %v915
        %v917 = vlaneseq
        %v918 = vshrl.u32 %v917, 7
        %v919 = vsub.s32 %v916, %v918
        %v920 = vrot.slane %v912, %v919
        %v922 = vunpack.c.l.s4 1983009808
        %v923 = vunpack.c.0.s8 %v922
        %v924 = vlaneseq
        %v925 = vshrl.u32 %v924, 7
        %v926 = vsub.s32 %v923, %v925
        %v927 = vrot.slane %v913, %v926
        %v928 = vcombine.low %v904, %v920
        %v929 = vcombine.high %v904, %v920
        %v931 = vunpack.c.l.s4 1934713408
        %v932 = vunpack.c.0.s8 %v931
        %v933 = vlaneseq
        %v934 = vshrl.u32 %v933, 7
        %v935 = vsub.s32 %v932, %v934
        %v936 = vrot.slane %v928, %v935
        %v938 = vunpack.c.l.s4 1934713408
        %v939 = vunpack.c.0.s8 %v938
        %v940 = vlaneseq
        %v941 = vshrl.u32 %v940, 7
        %v942 = vsub.s32 %v939, %v941
        %v943 = vrot.slane %v929, %v942
        %v944 = vcombine.low %v911, %v927
        %v945 = vcombine.high %v911, %v927
        %v947 = vunpack.c.l.s4 1934713408
        %v948 = vunpack.c.0.s8 %v947
        %v949 = vlaneseq
        %v950 = vshrl.u32 %v949, 7
        %v951 = vsub.s32 %v948, %v950
        %v952 = vrot.slane %v944, %v951
        %v954 = vunpack.c.l.s4 1934713408
        %v955 = vunpack.c.0.s8 %v954
        %v956 = vlaneseq
        %v957 = vshrl.u32 %v956, 7
        %v958 = vsub.s32 %v955, %v957
        %v959 = vrot.slane %v945, %v958
        %v960 = vcombine.high %v936, 0.0
        %v961 = vcombine.high %v943, 0.0
        %v962 = vcombine.high %v952, 0.0
        %v963 = vcombine.high %v959, 0.0
        %v964 = vcombine.low %v936, %v943
        %v966 = vunpack.c.l.s4 1983009808
        %v967 = vunpack.c.0.s8 %v966
        %v968 = vlaneseq
        %v969 = vshrl.u32 %v968, 7
        %v970 = vsub.s32 %v967, %v969
        %v971 = vrot.slane %v964, %v970
        %v972 = vcombine.low %v960, %v961
        %v974 = vunpack.c.l.s4 1983009808
        %v975 = vunpack.c.0.s8 %v974
        %v976 = vlaneseq
        %v977 = vshrl.u32 %v976, 7
        %v978 = vsub.s32 %v975, %v977
        %v979 = vrot.slane %v972, %v978
        %v980 = vcombine.low %v952, %v959
        %v982 = vunpack.c.l.s4 1983009808
        %v983 = vunpack.c.0.s8 %v982
        %v984 = vlaneseq
        %v985 = vshrl.u32 %v984, 7
        %v986 = vsub.s32 %v983, %v985
        %v987 = vrot.slane %v980, %v986
        %v988 = vcombine.low %v962, %v963
        %v990 = vunpack.c.l.s4 1983009808
        %v991 = vunpack.c.0.s8 %v990
        %v992 = vlaneseq
        %v993 = vshrl.u32 %v992, 7
        %v994 = vsub.s32 %v991, %v993
        %v995 = vrot.slane %v988, %v994
        %v996 = vcombine.low %v971, %v979
        %v997 = vcombine.high %v971, %v979
        %v999 = vunpack.c.l.s4 1934713408
        %v1000 = vunpack.c.0.s8 %v999
        %v1001 = vlaneseq
        %v1002 = vshrl.u32 %v1001, 7
        %v1003 = vsub.s32 %v1000, %v1002
        %v1004 = vrot.slane %v996, %v1003
        %v1006 = vunpack.c.l.s4 1934713408
        %v1007 = vunpack.c.0.s8 %v1006
        %v1008 = vlaneseq
        %v1009 = vshrl.u32 %v1008, 7
        %v1010 = vsub.s32 %v1007, %v1009
        %v1011 = vrot.slane %v997, %v1010
        %v1012 = vcombine.low %v987, %v995
        %v1013 = vcombine.high %v987, %v995
        %v1015 = vunpack.c.l.s4 1934713408
        %v1016 = vunpack.c.0.s8 %v1015
        %v1017 = vlaneseq
        %v1018 = vshrl.u32 %v1017, 7
        %v1019 = vsub.s32 %v1016, %v1018
        %v1020 = vrot.slane %v1012, %v1019
        %v1022 = vunpack.c.l.s4 1934713408
        %v1023 = vunpack.c.0.s8 %v1022
        %v1024 = vlaneseq
        %v1025 = vshrl.u32 %v1024, 7
        %v1026 = vsub.s32 %v1023, %v1025
        %v1027 = vrot.slane %v1013, %v1026
        %v1028 = vcombine.low %v1004, %v1020
        %v1029 = vcombine.high %v1004, %v1020
        %v1030 = vcombine.low %v1011, %v1027
        %v1031 = vcombine.high %v1011, %v1027
        %v1032 = vpack.c.bf16 %v1028, %v1028
        %v1033 = vpack.c.bf16 %v1029, %v1029
        %v1034 = vpack.c.bf16 %v1030, %v1030
        %v1035 = vpack.c.bf16 %v1031, %v1031
        %1037 = vrot.lane.b32.xlu0 %v877, 120
        %v1038 = vpop.permute.xlu0 %1037
        %1039 = vrot.lane.b32.xlu0 %v877, 112
        %v1040 = vpop.permute.xlu0 %1039
        %1041 = vrot.lane.b32.xlu0 %v877, 104
        %v1042 = vpop.permute.xlu0 %1041
        %1043 = vrot.lane.b32.xlu0 %v877, 96
        %v1044 = vpop.permute.xlu0 %1043
        %1045 = vrot.lane.b32.xlu0 %v1038, 96
        %v1046 = vpop.permute.xlu0 %1045
        %1047 = vrot.lane.b32.xlu0 %v1040, 96
        %v1048 = vpop.permute.xlu0 %1047
        %1049 = vrot.lane.b32.xlu0 %v1042, 96
        %v1050 = vpop.permute.xlu0 %1049
        %v1055 = vcombine.low %v1044, %v1048
        %v1056 = vcombine.high %v1044, %v1048
        %v1058 = vunpack.c.l.s4 1983009808
        %v1059 = vunpack.c.0.s8 %v1058
        %v1060 = vlaneseq
        %v1061 = vshrl.u32 %v1060, 7
        %v1062 = vsub.s32 %v1059, %v1061
        %v1063 = vrot.slane %v1055, %v1062
        %v1065 = vunpack.c.l.s4 1983009808
        %v1066 = vunpack.c.0.s8 %v1065
        %v1067 = vlaneseq
        %v1068 = vshrl.u32 %v1067, 7
        %v1069 = vsub.s32 %v1066, %v1068
        %v1070 = vrot.slane %v1056, %v1069
        %v1071 = vcombine.low %v1046, %v1050
        %v1072 = vcombine.high %v1046, %v1050
        %v1074 = vunpack.c.l.s4 1983009808
        %v1075 = vunpack.c.0.s8 %v1074
        %v1076 = vlaneseq
        %v1077 = vshrl.u32 %v1076, 7
        %v1078 = vsub.s32 %v1075, %v1077
        %v1079 = vrot.slane %v1071, %v1078
        %v1081 = vunpack.c.l.s4 1983009808
        %v1082 = vunpack.c.0.s8 %v1081
        %v1083 = vlaneseq
        %v1084 = vshrl.u32 %v1083, 7
        %v1085 = vsub.s32 %v1082, %v1084
        %v1086 = vrot.slane %v1072, %v1085
        %v1087 = vcombine.low %v1063, %v1079
        %v1088 = vcombine.high %v1063, %v1079
        %v1090 = vunpack.c.l.s4 1934713408
        %v1091 = vunpack.c.0.s8 %v1090
        %v1092 = vlaneseq
        %v1093 = vshrl.u32 %v1092, 7
        %v1094 = vsub.s32 %v1091, %v1093
        %v1095 = vrot.slane %v1087, %v1094
        %v1097 = vunpack.c.l.s4 1934713408
        %v1098 = vunpack.c.0.s8 %v1097
        %v1099 = vlaneseq
        %v1100 = vshrl.u32 %v1099, 7
        %v1101 = vsub.s32 %v1098, %v1100
        %v1102 = vrot.slane %v1088, %v1101
        %v1103 = vcombine.low %v1070, %v1086
        %v1104 = vcombine.high %v1070, %v1086
        %v1106 = vunpack.c.l.s4 1934713408
        %v1107 = vunpack.c.0.s8 %v1106
        %v1108 = vlaneseq
        %v1109 = vshrl.u32 %v1108, 7
        %v1110 = vsub.s32 %v1107, %v1109
        %v1111 = vrot.slane %v1103, %v1110
        %v1113 = vunpack.c.l.s4 1934713408
        %v1114 = vunpack.c.0.s8 %v1113
        %v1115 = vlaneseq
        %v1116 = vshrl.u32 %v1115, 7
        %v1117 = vsub.s32 %v1114, %v1116
        %v1118 = vrot.slane %v1104, %v1117
        %v1119 = vcombine.high %v1095, 0.0
        %v1120 = vcombine.high %v1102, 0.0
        %v1121 = vcombine.high %v1111, 0.0
        %v1122 = vcombine.high %v1118, 0.0
        %v1123 = vcombine.low %v1095, %v1102
        %v1125 = vunpack.c.l.s4 1983009808
        %v1126 = vunpack.c.0.s8 %v1125
        %v1127 = vlaneseq
        %v1128 = vshrl.u32 %v1127, 7
        %v1129 = vsub.s32 %v1126, %v1128
        %v1130 = vrot.slane %v1123, %v1129
        %v1131 = vcombine.low %v1119, %v1120
        %v1133 = vunpack.c.l.s4 1983009808
        %v1134 = vunpack.c.0.s8 %v1133
        %v1135 = vlaneseq
        %v1136 = vshrl.u32 %v1135, 7
        %v1137 = vsub.s32 %v1134, %v1136
        %v1138 = vrot.slane %v1131, %v1137
        %v1139 = vcombine.low %v1111, %v1118
        %v1141 = vunpack.c.l.s4 1983009808
        %v1142 = vunpack.c.0.s8 %v1141
        %v1143 = vlaneseq
        %v1144 = vshrl.u32 %v1143, 7
        %v1145 = vsub.s32 %v1142, %v1144
        %v1146 = vrot.slane %v1139, %v1145
        %v1147 = vcombine.low %v1121, %v1122
        %v1149 = vunpack.c.l.s4 1983009808
        %v1150 = vunpack.c.0.s8 %v1149
        %v1151 = vlaneseq
        %v1152 = vshrl.u32 %v1151, 7
        %v1153 = vsub.s32 %v1150, %v1152
        %v1154 = vrot.slane %v1147, %v1153
        %v1155 = vcombine.low %v1130, %v1138
        %v1156 = vcombine.high %v1130, %v1138
        %v1158 = vunpack.c.l.s4 1934713408
        %v1159 = vunpack.c.0.s8 %v1158
        %v1160 = vlaneseq
        %v1161 = vshrl.u32 %v1160, 7
        %v1162 = vsub.s32 %v1159, %v1161
        %v1163 = vrot.slane %v1155, %v1162
        %v1165 = vunpack.c.l.s4 1934713408
        %v1166 = vunpack.c.0.s8 %v1165
        %v1167 = vlaneseq
        %v1168 = vshrl.u32 %v1167, 7
        %v1169 = vsub.s32 %v1166, %v1168
        %v1170 = vrot.slane %v1156, %v1169
        %v1171 = vcombine.low %v1146, %v1154
        %v1172 = vcombine.high %v1146, %v1154
        %v1174 = vunpack.c.l.s4 1934713408
        %v1175 = vunpack.c.0.s8 %v1174
        %v1176 = vlaneseq
        %v1177 = vshrl.u32 %v1176, 7
        %v1178 = vsub.s32 %v1175, %v1177
        %v1179 = vrot.slane %v1171, %v1178
        %v1181 = vunpack.c.l.s4 1934713408
        %v1182 = vunpack.c.0.s8 %v1181
        %v1183 = vlaneseq
        %v1184 = vshrl.u32 %v1183, 7
        %v1185 = vsub.s32 %v1182, %v1184
        %v1186 = vrot.slane %v1172, %v1185
        %v1187 = vcombine.low %v1163, %v1179
        %v1188 = vcombine.high %v1163, %v1179
        %v1189 = vcombine.low %v1170, %v1186
        %v1190 = vcombine.high %v1170, %v1186
        %v1191 = vpack.c.bf16 %v1187, %v1187
        %v1192 = vpack.c.bf16 %v1188, %v1188
        %v1193 = vpack.c.bf16 %v1189, %v1189
        %v1194 = vpack.c.bf16 %v1190, %v1190
        %1195 = vrot.lane.b32.xlu0 %v877, 64
        %v1196 = vpop.permute.xlu0 %1195
        %1197 = vrot.lane.b32.xlu0 %v1038, 64
        %v1198 = vpop.permute.xlu0 %1197
        %1199 = vrot.lane.b32.xlu0 %v1040, 64
        %v1200 = vpop.permute.xlu0 %1199
        %1201 = vrot.lane.b32.xlu0 %v1042, 64
        %v1202 = vpop.permute.xlu0 %1201
        %v1207 = vcombine.low %v1196, %v1200
        %v1208 = vcombine.high %v1196, %v1200
        %v1210 = vunpack.c.l.s4 1983009808
        %v1211 = vunpack.c.0.s8 %v1210
        %v1212 = vlaneseq
        %v1213 = vshrl.u32 %v1212, 7
        %v1214 = vsub.s32 %v1211, %v1213
        %v1215 = vrot.slane %v1207, %v1214
        %v1217 = vunpack.c.l.s4 1983009808
        %v1218 = vunpack.c.0.s8 %v1217
        %v1219 = vlaneseq
        %v1220 = vshrl.u32 %v1219, 7
        %v1221 = vsub.s32 %v1218, %v1220
        %v1222 = vrot.slane %v1208, %v1221
        %v1223 = vcombine.low %v1198, %v1202
        %v1224 = vcombine.high %v1198, %v1202
        %v1226 = vunpack.c.l.s4 1983009808
        %v1227 = vunpack.c.0.s8 %v1226
        %v1228 = vlaneseq
        %v1229 = vshrl.u32 %v1228, 7
        %v1230 = vsub.s32 %v1227, %v1229
        %v1231 = vrot.slane %v1223, %v1230
        %v1233 = vunpack.c.l.s4 1983009808
        %v1234 = vunpack.c.0.s8 %v1233
        %v1235 = vlaneseq
        %v1236 = vshrl.u32 %v1235, 7
        %v1237 = vsub.s32 %v1234, %v1236
        %v1238 = vrot.slane %v1224, %v1237
        %v1239 = vcombine.low %v1215, %v1231
        %v1240 = vcombine.high %v1215, %v1231
        %v1242 = vunpack.c.l.s4 1934713408
        %v1243 = vunpack.c.0.s8 %v1242
        %v1244 = vlaneseq
        %v1245 = vshrl.u32 %v1244, 7
        %v1246 = vsub.s32 %v1243, %v1245
        %v1247 = vrot.slane %v1239, %v1246
        %v1249 = vunpack.c.l.s4 1934713408
        %v1250 = vunpack.c.0.s8 %v1249
        %v1251 = vlaneseq
        %v1252 = vshrl.u32 %v1251, 7
        %v1253 = vsub.s32 %v1250, %v1252
        %v1254 = vrot.slane %v1240, %v1253
        %v1255 = vcombine.low %v1222, %v1238
        %v1256 = vcombine.high %v1222, %v1238
        %v1258 = vunpack.c.l.s4 1934713408
        %v1259 = vunpack.c.0.s8 %v1258
        %v1260 = vlaneseq
        %v1261 = vshrl.u32 %v1260, 7
        %v1262 = vsub.s32 %v1259, %v1261
        %v1263 = vrot.slane %v1255, %v1262
        %v1265 = vunpack.c.l.s4 1934713408
        %v1266 = vunpack.c.0.s8 %v1265
        %v1267 = vlaneseq
        %v1268 = vshrl.u32 %v1267, 7
        %v1269 = vsub.s32 %v1266, %v1268
        %v1270 = vrot.slane %v1256, %v1269
        %v1271 = vcombine.high %v1247, 0.0
        %v1272 = vcombine.high %v1254, 0.0
        %v1273 = vcombine.high %v1263, 0.0
        %v1274 = vcombine.high %v1270, 0.0
        %v1275 = vcombine.low %v1247, %v1254
        %v1277 = vunpack.c.l.s4 1983009808
        %v1278 = vunpack.c.0.s8 %v1277
        %v1279 = vlaneseq
        %v1280 = vshrl.u32 %v1279, 7
        %v1281 = vsub.s32 %v1278, %v1280
        %v1282 = vrot.slane %v1275, %v1281
        %v1283 = vcombine.low %v1271, %v1272
        %v1285 = vunpack.c.l.s4 1983009808
        %v1286 = vunpack.c.0.s8 %v1285
        %v1287 = vlaneseq
        %v1288 = vshrl.u32 %v1287, 7
        %v1289 = vsub.s32 %v1286, %v1288
        %v1290 = vrot.slane %v1283, %v1289
        %v1291 = vcombine.low %v1263, %v1270
        %v1293 = vunpack.c.l.s4 1983009808
        %v1294 = vunpack.c.0.s8 %v1293
        %v1295 = vlaneseq
        %v1296 = vshrl.u32 %v1295, 7
        %v1297 = vsub.s32 %v1294, %v1296
        %v1298 = vrot.slane %v1291, %v1297
        %v1299 = vcombine.low %v1273, %v1274
        %v1301 = vunpack.c.l.s4 1983009808
        %v1302 = vunpack.c.0.s8 %v1301
        %v1303 = vlaneseq
        %v1304 = vshrl.u32 %v1303, 7
        %v1305 = vsub.s32 %v1302, %v1304
        %v1306 = vrot.slane %v1299, %v1305
        %v1307 = vcombine.low %v1282, %v1290
        %v1308 = vcombine.high %v1282, %v1290
        %v1310 = vunpack.c.l.s4 1934713408
        %v1311 = vunpack.c.0.s8 %v1310
        %v1312 = vlaneseq
        %v1313 = vshrl.u32 %v1312, 7
        %v1314 = vsub.s32 %v1311, %v1313
        %v1315 = vrot.slane %v1307, %v1314
        %v1317 = vunpack.c.l.s4 1934713408
        %v1318 = vunpack.c.0.s8 %v1317
        %v1319 = vlaneseq
        %v1320 = vshrl.u32 %v1319, 7
        %v1321 = vsub.s32 %v1318, %v1320
        %v1322 = vrot.slane %v1308, %v1321
        %v1323 = vcombine.low %v1298, %v1306
        %v1324 = vcombine.high %v1298, %v1306
        %v1326 = vunpack.c.l.s4 1934713408
        %v1327 = vunpack.c.0.s8 %v1326
        %v1328 = vlaneseq
        %v1329 = vshrl.u32 %v1328, 7
        %v1330 = vsub.s32 %v1327, %v1329
        %v1331 = vrot.slane %v1323, %v1330
        %v1333 = vunpack.c.l.s4 1934713408
        %v1334 = vunpack.c.0.s8 %v1333
        %v1335 = vlaneseq
        %v1336 = vshrl.u32 %v1335, 7
        %v1337 = vsub.s32 %v1334, %v1336
        %v1338 = vrot.slane %v1324, %v1337
        %v1339 = vcombine.low %v1315, %v1331
        %v1340 = vcombine.high %v1315, %v1331
        %v1341 = vcombine.low %v1322, %v1338
        %v1342 = vcombine.high %v1322, %v1338
        %v1343 = vpack.c.bf16 %v1339, %v1339
        %v1344 = vpack.c.bf16 %v1340, %v1340
        %v1345 = vpack.c.bf16 %v1341, %v1341
        %v1346 = vpack.c.bf16 %v1342, %v1342
        %vm1347 = vcmask 64512
        %v1349 = vsel %vm1347, %v1032, 0
        %v1352 = vsel %vm1347, %v1191, 0
        %1354 = vmatprep.subr.bf16.mxu0 0
        %1355 = vmatpush1.bf16.xpose.msra.mxu0 %v1352
        %1356 = vmatprep.subr.bf16.mxu0 0
        %1357 = vmatpush1.bf16.xpose.msra.mxu0 0
        %1358 = vmatprep.subr.bf16.mxu0 0
        %1359 = vmatpush1.bf16.xpose.msra.mxu0 0
        %1360 = vmatprep.subr.bf16.mxu0 0
        %1361 = vmatpush1.bf16.xpose.msra.mxu0 0
        %1362 = vmatprep.subr.bf16.mxu0 0
        %1363 = vmatpush1.bf16.xpose.msra.mxu0 0
        %1364 = vmatprep.subr.bf16.mxu0 0
        %1365 = vmatpush1.bf16.xpose.msra.mxu0 0
        %1366 = vmatprep.subr.bf16.mxu0 0
        %1367 = vmatpush1.bf16.xpose.msra.mxu0 0
        %1368 = vmatprep.subr.bf16.mxu0 0
        %1369 = vmatpush1.bf16.xpose.msra.mxu0 0
        %1370 = vmatprep.subr.bf16.mxu0 0
        %1371 = vmatpush1.bf16.xpose.msra.mxu0 0
        %1372 = vmatprep.subr.bf16.mxu0 0
        %1373 = vmatpush1.bf16.xpose.msra.mxu0 0
        %1374 = vmatprep.subr.bf16.mxu0 0
        %1375 = vmatpush1.bf16.xpose.msra.mxu0 0
        %1376 = vmatprep.subr.bf16.mxu0 0
        %1377 = vmatpush1.bf16.xpose.msra.mxu0 0
        %1378 = vmatprep.subr.bf16.mxu0 0
        %1379 = vmatpush1.bf16.xpose.msra.mxu0 0
        %1380 = vmatprep.subr.bf16.mxu0 0
        %1381 = vmatpush1.bf16.xpose.msra.mxu0 0
        %1382 = vmatprep.subr.bf16.mxu0 0
        %1383 = vmatpush1.bf16.xpose.msra.mxu0 0
        %1384 = vmatprep.subr.bf16.mxu0 0
        %1385 = vmatpush1.bf16.xpose.msra.mxu0 0
        %1386 = vmatprep.mubr.bf16.mxu0 0
        %1387 = vmatmul.mubr.bf16.gmra.mrb[0].mxu0 %v1349
        %v1388 = vpop.f32.mrb[0].mxu0
        %v1389 = vadd.f32 %v885, %v1388
        %v1390 = vpop.f32.mrb[0].mxu0
        %v1391 = vpop.f32.mrb[0].mxu0
        %v1392 = vpop.f32.mrb[0].mxu0
        %1393 = vdwg.mxu0
        %v1395 = vsel %vm1347, %v1033, 0
        %v1398 = vsel %vm1347, %v1192, 0
        %1400 = vmatprep.subr.bf16.mxu0 0
        %1401 = vmatpush1.bf16.xpose.msra.mxu0 %v1398
        %1402 = vmatprep.subr.bf16.mxu0 0
        %1403 = vmatpush1.bf16.xpose.msra.mxu0 0
        %1404 = vmatprep.subr.bf16.mxu0 0
        %1405 = vmatpush1.bf16.xpose.msra.mxu0 0
        %1406 = vmatprep.subr.bf16.mxu0 0
        %1407 = vmatpush1.bf16.xpose.msra.mxu0 0
        %1408 = vmatprep.subr.bf16.mxu0 0
        %1409 = vmatpush1.bf16.xpose.msra.mxu0 0
        %1410 = vmatprep.subr.bf16.mxu0 0
        %1411 = vmatpush1.bf16.xpose.msra.mxu0 0
        %1412 = vmatprep.subr.bf16.mxu0 0
        %1413 = vmatpush1.bf16.xpose.msra.mxu0 0
        %1414 = vmatprep.subr.bf16.mxu0 0
        %1415 = vmatpush1.bf16.xpose.msra.mxu0 0
        %1416 = vmatprep.subr.bf16.mxu0 0
        %1417 = vmatpush1.bf16.xpose.msra.mxu0 0
        %1418 = vmatprep.subr.bf16.mxu0 0
        %1419 = vmatpush1.bf16.xpose.msra.mxu0 0
        %1420 = vmatprep.subr.bf16.mxu0 0
        %1421 = vmatpush1.bf16.xpose.msra.mxu0 0
        %1422 = vmatprep.subr.bf16.mxu0 0
        %1423 = vmatpush1.bf16.xpose.msra.mxu0 0
        %1424 = vmatprep.subr.bf16.mxu0 0
        %1425 = vmatpush1.bf16.xpose.msra.mxu0 0
        %1426 = vmatprep.subr.bf16.mxu0 0
        %1427 = vmatpush1.bf16.xpose.msra.mxu0 0
        %1428 = vmatprep.subr.bf16.mxu0 0
        %1429 = vmatpush1.bf16.xpose.msra.mxu0 0
        %1430 = vmatprep.subr.bf16.mxu0 0
        %1431 = vmatpush1.bf16.xpose.msra.mxu0 0
        %1432 = vmatprep.mubr.bf16.mxu0 0
        %1433 = vmatmul.mubr.bf16.gmra.mrb[0].mxu0 %v1395
        %v1434 = vpop.f32.mrb[0].mxu0
        %v1435 = vadd.f32 %v885, %v1434
        %v1436 = vpop.f32.mrb[0].mxu0
        %v1437 = vpop.f32.mrb[0].mxu0
        %v1438 = vpop.f32.mrb[0].mxu0
        %1439 = vdwg.mxu0
        %v1441 = vsel %vm1347, %v1034, 0
        %v1444 = vsel %vm1347, %v1193, 0
        %1446 = vmatprep.subr.bf16.mxu0 0
        %1447 = vmatpush1.bf16.xpose.msra.mxu0 %v1444
        %1448 = vmatprep.subr.bf16.mxu0 0
        %1449 = vmatpush1.bf16.xpose.msra.mxu0 0
        %1450 = vmatprep.subr.bf16.mxu0 0
        %1451 = vmatpush1.bf16.xpose.msra.mxu0 0
        %1452 = vmatprep.subr.bf16.mxu0 0
        %1453 = vmatpush1.bf16.xpose.msra.mxu0 0
        %1454 = vmatprep.subr.bf16.mxu0 0
        %1455 = vmatpush1.bf16.xpose.msra.mxu0 0
        %1456 = vmatprep.subr.bf16.mxu0 0
        %1457 = vmatpush1.bf16.xpose.msra.mxu0 0
        %1458 = vmatprep.subr.bf16.mxu0 0
        %1459 = vmatpush1.bf16.xpose.msra.mxu0 0
        %1460 = vmatprep.subr.bf16.mxu0 0
        %1461 = vmatpush1.bf16.xpose.msra.mxu0 0
        %1462 = vmatprep.subr.bf16.mxu0 0
        %1463 = vmatpush1.bf16.xpose.msra.mxu0 0
        %1464 = vmatprep.subr.bf16.mxu0 0
        %1465 = vmatpush1.bf16.xpose.msra.mxu0 0
        %1466 = vmatprep.subr.bf16.mxu0 0
        %1467 = vmatpush1.bf16.xpose.msra.mxu0 0
        %1468 = vmatprep.subr.bf16.mxu0 0
        %1469 = vmatpush1.bf16.xpose.msra.mxu0 0
        %1470 = vmatprep.subr.bf16.mxu0 0
        %1471 = vmatpush1.bf16.xpose.msra.mxu0 0
        %1472 = vmatprep.subr.bf16.mxu0 0
        %1473 = vmatpush1.bf16.xpose.msra.mxu0 0
        %1474 = vmatprep.subr.bf16.mxu0 0
        %1475 = vmatpush1.bf16.xpose.msra.mxu0 0
        %1476 = vmatprep.subr.bf16.mxu0 0
        %1477 = vmatpush1.bf16.xpose.msra.mxu0 0
        %1478 = vmatprep.mubr.bf16.mxu0 0
        %1479 = vmatmul.mubr.bf16.gmra.mrb[0].mxu0 %v1441
        %v1480 = vpop.f32.mrb[0].mxu0
        %v1481 = vadd.f32 %v885, %v1480
        %v1482 = vpop.f32.mrb[0].mxu0
        %v1483 = vpop.f32.mrb[0].mxu0
        %v1484 = vpop.f32.mrb[0].mxu0
        %1485 = vdwg.mxu0
        %v1487 = vsel %vm1347, %v1035, 0
        %v1490 = vsel %vm1347, %v1194, 0
        %1492 = vmatprep.subr.bf16.mxu0 0
        %1493 = vmatpush1.bf16.xpose.msra.mxu0 %v1490
        %1494 = vmatprep.subr.bf16.mxu0 0
        %1495 = vmatpush1.bf16.xpose.msra.mxu0 0
        %1496 = vmatprep.subr.bf16.mxu0 0
        %1497 = vmatpush1.bf16.xpose.msra.mxu0 0
        %1498 = vmatprep.subr.bf16.mxu0 0
        %1499 = vmatpush1.bf16.xpose.msra.mxu0 0
        %1500 = vmatprep.subr.bf16.mxu0 0
        %1501 = vmatpush1.bf16.xpose.msra.mxu0 0
        %1502 = vmatprep.subr.bf16.mxu0 0
        %1503 = vmatpush1.bf16.xpose.msra.mxu0 0
        %1504 = vmatprep.subr.bf16.mxu0 0
        %1505 = vmatpush1.bf16.xpose.msra.mxu0 0
        %1506 = vmatprep.subr.bf16.mxu0 0
        %1507 = vmatpush1.bf16.xpose.msra.mxu0 0
        %1508 = vmatprep.subr.bf16.mxu0 0
        %1509 = vmatpush1.bf16.xpose.msra.mxu0 0
        %1510 = vmatprep.subr.bf16.mxu0 0
        %1511 = vmatpush1.bf16.xpose.msra.mxu0 0
        %1512 = vmatprep.subr.bf16.mxu0 0
        %1513 = vmatpush1.bf16.xpose.msra.mxu0 0
        %1514 = vmatprep.subr.bf16.mxu0 0
        %1515 = vmatpush1.bf16.xpose.msra.mxu0 0
        %1516 = vmatprep.subr.bf16.mxu0 0
        %1517 = vmatpush1.bf16.xpose.msra.mxu0 0
        %1518 = vmatprep.subr.bf16.mxu0 0
        %1519 = vmatpush1.bf16.xpose.msra.mxu0 0
        %1520 = vmatprep.subr.bf16.mxu0 0
        %1521 = vmatpush1.bf16.xpose.msra.mxu0 0
        %1522 = vmatprep.subr.bf16.mxu0 0
        %1523 = vmatpush1.bf16.xpose.msra.mxu0 0
        %1524 = vmatprep.mubr.bf16.mxu0 0
        %1525 = vmatmul.mubr.bf16.gmra.mrb[0].mxu0 %v1487
        %v1526 = vpop.f32.mrb[0].mxu0
        %v1527 = vadd.f32 %v885, %v1526
        %v1528 = vpop.f32.mrb[0].mxu0
        %v1529 = vpop.f32.mrb[0].mxu0
        %v1530 = vpop.f32.mrb[0].mxu0
        %1531 = vdwg.mxu0
        %v1532 = vsel %vm1347, %v1389, -inf
        %1533 = vmax.xlane.f32.xlu0 %v1532
        %v1534 = vpop.xlane.xlu0 %1533
        %v1535 = vsel %vm1347, %v1435, -inf
        %1536 = vmax.xlane.f32.xlu0 %v1535
        %v1537 = vpop.xlane.xlu0 %1536
        %v1538 = vsel %vm1347, %v1481, -inf
        %1539 = vmax.xlane.f32.xlu0 %v1538
        %v1540 = vpop.xlane.xlu0 %1539
        %v1541 = vsel %vm1347, %v1527, -inf
        %1542 = vmax.xlane.f32.xlu0 %v1541
        %v1543 = vpop.xlane.xlu0 %1542
        %v1544 = vsub.f32 %v1389, %v1534
        %v1545 = vsub.f32 %v1435, %v1537
        %v1546 = vsub.f32 %v1481, %v1540
        %v1547 = vsub.f32 %v1527, %v1543
        %v1548 = vmul.f32 %v1544, 1.442695
        %v1549 = vpow.pop %v1548
        %v1550 = vmul.f32 %v1545, 1.442695
        %v1551 = vpow.pop %v1550
        %v1552 = vmul.f32 %v1546, 1.442695
        %v1553 = vpow.pop %v1552
        %v1554 = vmul.f32 %v1547, 1.442695
        %v1555 = vpow.pop %v1554
        %v1556 = vsel %vm1347, %v1549, 0.0
        %1557 = vadd.xlane.f32.xlu0 %v1556
        %v1558 = vpop.xlane.xlu0 %1557
        %v1559 = vsel %vm1347, %v1551, 0.0
        %1560 = vadd.xlane.f32.xlu0 %v1559
        %v1561 = vpop.xlane.xlu0 %1560
        %v1562 = vsel %vm1347, %v1553, 0.0
        %1563 = vadd.xlane.f32.xlu0 %v1562
        %v1564 = vpop.xlane.xlu0 %1563
        %v1565 = vsel %vm1347, %v1555, 0.0
        %1566 = vadd.xlane.f32.xlu0 %v1565
        %v1567 = vpop.xlane.xlu0 %1566
        %v1568 = vrcp.pop %v1558
        %v1569 = vrcp.pop %v1561
        %v1570 = vrcp.pop %v1564
        %v1571 = vrcp.pop %v1567
        %v1572 = vmul.f32 %v1549, %v1568
        %v1573 = vmul.f32 %v1551, %v1569
        %v1574 = vmul.f32 %v1553, %v1570
        %v1575 = vmul.f32 %v1555, %v1571
        %v1576 = vpack.c.bf16 %v1572, %v1572
        %v1577 = vpack.c.bf16 %v1573, %v1573
        %v1578 = vpack.c.bf16 %v1574, %v1574
        %v1579 = vpack.c.bf16 %v1575, %v1575
        %v1581 = vsel %vm1347, %v1576, 0
        %vm1583 = vcmask 1043456
        %v1585 = vsel %vm1583, %v1343, 0
        %1587 = vmatprep.subr.bf16.mxu0 0
        %1588 = vmatpush1.bf16.msra.mxu0 %v1585
        %1589 = vmatprep.subr.bf16.mxu0 0
        %1590 = vmatpush1.bf16.msra.mxu0 0
        %1591 = vmatprep.subr.bf16.mxu0 0
        %1592 = vmatpush1.bf16.msra.mxu0 0
        %1593 = vmatprep.subr.bf16.mxu0 0
        %1594 = vmatpush1.bf16.msra.mxu0 0
        %1595 = vmatprep.subr.bf16.mxu0 0
        %1596 = vmatpush1.bf16.msra.mxu0 0
        %1597 = vmatprep.subr.bf16.mxu0 0
        %1598 = vmatpush1.bf16.msra.mxu0 0
        %1599 = vmatprep.subr.bf16.mxu0 0
        %1600 = vmatpush1.bf16.msra.mxu0 0
        %1601 = vmatprep.subr.bf16.mxu0 0
        %1602 = vmatpush1.bf16.msra.mxu0 0
        %1603 = vmatprep.subr.bf16.mxu0 0
        %1604 = vmatpush1.bf16.msra.mxu0 0
        %1605 = vmatprep.subr.bf16.mxu0 0
        %1606 = vmatpush1.bf16.msra.mxu0 0
        %1607 = vmatprep.subr.bf16.mxu0 0
        %1608 = vmatpush1.bf16.msra.mxu0 0
        %1609 = vmatprep.subr.bf16.mxu0 0
        %1610 = vmatpush1.bf16.msra.mxu0 0
        %1611 = vmatprep.subr.bf16.mxu0 0
        %1612 = vmatpush1.bf16.msra.mxu0 0
        %1613 = vmatprep.subr.bf16.mxu0 0
        %1614 = vmatpush1.bf16.msra.mxu0 0
        %1615 = vmatprep.subr.bf16.mxu0 0
        %1616 = vmatpush1.bf16.msra.mxu0 0
        %1617 = vmatprep.subr.bf16.mxu0 0
        %1618 = vmatpush1.bf16.msra.mxu0 0
        %1619 = vmatprep.mubr.bf16.mxu0 0
        %1620 = vmatmul.mubr.bf16.gmra.mrb[0].mxu0 %v1581
        %v1621 = vpop.f32.mrb[0].mxu0
        %v1622 = vadd.f32 0.0, %v1621
        %v1623 = vpop.f32.mrb[0].mxu0
        %v1624 = vpop.f32.mrb[0].mxu0
        %v1625 = vpop.f32.mrb[0].mxu0
        %1626 = vdwg.mxu0
        %v1628 = vsel %vm1347, %v1577, 0
        %v1631 = vsel %vm1583, %v1344, 0
        %1633 = vmatprep.subr.bf16.mxu0 0
        %1634 = vmatpush1.bf16.msra.mxu0 %v1631
        %1635 = vmatprep.subr.bf16.mxu0 0
        %1636 = vmatpush1.bf16.msra.mxu0 0
        %1637 = vmatprep.subr.bf16.mxu0 0
        %1638 = vmatpush1.bf16.msra.mxu0 0
        %1639 = vmatprep.subr.bf16.mxu0 0
        %1640 = vmatpush1.bf16.msra.mxu0 0
        %1641 = vmatprep.subr.bf16.mxu0 0
        %1642 = vmatpush1.bf16.msra.mxu0 0
        %1643 = vmatprep.subr.bf16.mxu0 0
        %1644 = vmatpush1.bf16.msra.mxu0 0
        %1645 = vmatprep.subr.bf16.mxu0 0
        %1646 = vmatpush1.bf16.msra.mxu0 0
        %1647 = vmatprep.subr.bf16.mxu0 0
        %1648 = vmatpush1.bf16.msra.mxu0 0
        %1649 = vmatprep.subr.bf16.mxu0 0
        %1650 = vmatpush1.bf16.msra.mxu0 0
        %1651 = vmatprep.subr.bf16.mxu0 0
        %1652 = vmatpush1.bf16.msra.mxu0 0
        %1653 = vmatprep.subr.bf16.mxu0 0
        %1654 = vmatpush1.bf16.msra.mxu0 0
        %1655 = vmatprep.subr.bf16.mxu0 0
        %1656 = vmatpush1.bf16.msra.mxu0 0
        %1657 = vmatprep.subr.bf16.mxu0 0
        %1658 = vmatpush1.bf16.msra.mxu0 0
        %1659 = vmatprep.subr.bf16.mxu0 0
        %1660 = vmatpush1.bf16.msra.mxu0 0
        %1661 = vmatprep.subr.bf16.mxu0 0
        %1662 = vmatpush1.bf16.msra.mxu0 0
        %1663 = vmatprep.subr.bf16.mxu0 0
        %1664 = vmatpush1.bf16.msra.mxu0 0
        %1665 = vmatprep.mubr.bf16.mxu0 0
        %1666 = vmatmul.mubr.bf16.gmra.mrb[0].mxu0 %v1628
        %v1667 = vpop.f32.mrb[0].mxu0
        %v1668 = vadd.f32 0.0, %v1667
        %v1669 = vpop.f32.mrb[0].mxu0
        %v1670 = vpop.f32.mrb[0].mxu0
        %v1671 = vpop.f32.mrb[0].mxu0
        %1672 = vdwg.mxu0
        %v1674 = vsel %vm1347, %v1578, 0
        %v1677 = vsel %vm1583, %v1345, 0
        %1679 = vmatprep.subr.bf16.mxu0 0
        %1680 = vmatpush1.bf16.msra.mxu0 %v1677
        %1681 = vmatprep.subr.bf16.mxu0 0
        %1682 = vmatpush1.bf16.msra.mxu0 0
        %1683 = vmatprep.subr.bf16.mxu0 0
        %1684 = vmatpush1.bf16.msra.mxu0 0
        %1685 = vmatprep.subr.bf16.mxu0 0
        %1686 = vmatpush1.bf16.msra.mxu0 0
        %1687 = vmatprep.subr.bf16.mxu0 0
        %1688 = vmatpush1.bf16.msra.mxu0 0
        %1689 = vmatprep.subr.bf16.mxu0 0
        %1690 = vmatpush1.bf16.msra.mxu0 0
        %1691 = vmatprep.subr.bf16.mxu0 0
        %1692 = vmatpush1.bf16.msra.mxu0 0
        %1693 = vmatprep.subr.bf16.mxu0 0
        %1694 = vmatpush1.bf16.msra.mxu0 0
        %1695 = vmatprep.subr.bf16.mxu0 0
        %1696 = vmatpush1.bf16.msra.mxu0 0
        %1697 = vmatprep.subr.bf16.mxu0 0
        %1698 = vmatpush1.bf16.msra.mxu0 0
        %1699 = vmatprep.subr.bf16.mxu0 0
        %1700 = vmatpush1.bf16.msra.mxu0 0
        %1701 = vmatprep.subr.bf16.mxu0 0
        %1702 = vmatpush1.bf16.msra.mxu0 0
        %1703 = vmatprep.subr.bf16.mxu0 0
        %1704 = vmatpush1.bf16.msra.mxu0 0
        %1705 = vmatprep.subr.bf16.mxu0 0
        %1706 = vmatpush1.bf16.msra.mxu0 0
        %1707 = vmatprep.subr.bf16.mxu0 0
        %1708 = vmatpush1.bf16.msra.mxu0 0
        %1709 = vmatprep.subr.bf16.mxu0 0
        %1710 = vmatpush1.bf16.msra.mxu0 0
        %1711 = vmatprep.mubr.bf16.mxu0 0
        %1712 = vmatmul.mubr.bf16.gmra.mrb[0].mxu0 %v1674
        %v1713 = vpop.f32.mrb[0].mxu0
        %v1714 = vadd.f32 0.0, %v1713
        %v1715 = vpop.f32.mrb[0].mxu0
        %v1716 = vpop.f32.mrb[0].mxu0
        %v1717 = vpop.f32.mrb[0].mxu0
        %1718 = vdwg.mxu0
        %v1720 = vsel %vm1347, %v1579, 0
        %v1723 = vsel %vm1583, %v1346, 0
        %1725 = vmatprep.subr.bf16.mxu0 0
        %1726 = vmatpush1.bf16.msra.mxu0 %v1723
        %1727 = vmatprep.subr.bf16.mxu0 0
        %1728 = vmatpush1.bf16.msra.mxu0 0
        %1729 = vmatprep.subr.bf16.mxu0 0
        %1730 = vmatpush1.bf16.msra.mxu0 0
        %1731 = vmatprep.subr.bf16.mxu0 0
        %1732 = vmatpush1.bf16.msra.mxu0 0
        %1733 = vmatprep.subr.bf16.mxu0 0
        %1734 = vmatpush1.bf16.msra.mxu0 0
        %1735 = vmatprep.subr.bf16.mxu0 0
        %1736 = vmatpush1.bf16.msra.mxu0 0
        %1737 = vmatprep.subr.bf16.mxu0 0
        %1738 = vmatpush1.bf16.msra.mxu0 0
        %1739 = vmatprep.subr.bf16.mxu0 0
        %1740 = vmatpush1.bf16.msra.mxu0 0
        %1741 = vmatprep.subr.bf16.mxu0 0
        %1742 = vmatpush1.bf16.msra.mxu0 0
        %1743 = vmatprep.subr.bf16.mxu0 0
        %1744 = vmatpush1.bf16.msra.mxu0 0
        %1745 = vmatprep.subr.bf16.mxu0 0
        %1746 = vmatpush1.bf16.msra.mxu0 0
        %1747 = vmatprep.subr.bf16.mxu0 0
        %1748 = vmatpush1.bf16.msra.mxu0 0
        %1749 = vmatprep.subr.bf16.mxu0 0
        %1750 = vmatpush1.bf16.msra.mxu0 0
        %1751 = vmatprep.subr.bf16.mxu0 0
        %1752 = vmatpush1.bf16.msra.mxu0 0
        %1753 = vmatprep.subr.bf16.mxu0 0
        %1754 = vmatpush1.bf16.msra.mxu0 0
        %1755 = vmatprep.subr.bf16.mxu0 0
        %1756 = vmatpush1.bf16.msra.mxu0 0
        %1757 = vmatprep.mubr.bf16.mxu0 0
        %1758 = vmatmul.mubr.bf16.gmra.mrb[0].mxu0 %v1720
        %v1759 = vpop.f32.mrb[0].mxu0
        %v1760 = vadd.f32 0.0, %v1759
        %v1761 = vpop.f32.mrb[0].mxu0
        %v1762 = vpop.f32.mrb[0].mxu0
        %v1763 = vpop.f32.mrb[0].mxu0
        %1764 = vdwg.mxu0
        %v1765 = vcombine.low %v1622, %v1714
        %v1766 = vcombine.high %v1622, %v1714
        %v1768 = vunpack.c.l.s4 1983009808
        %v1769 = vunpack.c.0.s8 %v1768
        %v1770 = vlaneseq
        %v1771 = vshrl.u32 %v1770, 7
        %v1772 = vsub.s32 %v1769, %v1771
        %v1773 = vrot.slane %v1765, %v1772
        %v1775 = vunpack.c.l.s4 1983009808
        %v1776 = vunpack.c.0.s8 %v1775
        %v1777 = vlaneseq
        %v1778 = vshrl.u32 %v1777, 7
        %v1779 = vsub.s32 %v1776, %v1778
        %v1780 = vrot.slane %v1766, %v1779
        %v1781 = vcombine.low %v1668, %v1760
        %v1782 = vcombine.high %v1668, %v1760
        %v1784 = vunpack.c.l.s4 1983009808
        %v1785 = vunpack.c.0.s8 %v1784
        %v1786 = vlaneseq
        %v1787 = vshrl.u32 %v1786, 7
        %v1788 = vsub.s32 %v1785, %v1787
        %v1789 = vrot.slane %v1781, %v1788
        %v1791 = vunpack.c.l.s4 1983009808
        %v1792 = vunpack.c.0.s8 %v1791
        %v1793 = vlaneseq
        %v1794 = vshrl.u32 %v1793, 7
        %v1795 = vsub.s32 %v1792, %v1794
        %v1796 = vrot.slane %v1782, %v1795
        %v1797 = vcombine.low %v1773, %v1789
        %v1798 = vcombine.high %v1773, %v1789
        %v1800 = vunpack.c.l.s4 1934713408
        %v1801 = vunpack.c.0.s8 %v1800
        %v1802 = vlaneseq
        %v1803 = vshrl.u32 %v1802, 7
        %v1804 = vsub.s32 %v1801, %v1803
        %v1805 = vrot.slane %v1797, %v1804
        %v1807 = vunpack.c.l.s4 1934713408
        %v1808 = vunpack.c.0.s8 %v1807
        %v1809 = vlaneseq
        %v1810 = vshrl.u32 %v1809, 7
        %v1811 = vsub.s32 %v1808, %v1810
        %v1812 = vrot.slane %v1798, %v1811
        %v1813 = vcombine.low %v1780, %v1796
        %v1814 = vcombine.high %v1780, %v1796
        %v1816 = vunpack.c.l.s4 1934713408
        %v1817 = vunpack.c.0.s8 %v1816
        %v1818 = vlaneseq
        %v1819 = vshrl.u32 %v1818, 7
        %v1820 = vsub.s32 %v1817, %v1819
        %v1821 = vrot.slane %v1813, %v1820
        %v1823 = vunpack.c.l.s4 1934713408
        %v1824 = vunpack.c.0.s8 %v1823
        %v1825 = vlaneseq
        %v1826 = vshrl.u32 %v1825, 7
        %v1827 = vsub.s32 %v1824, %v1826
        %v1828 = vrot.slane %v1814, %v1827
        %v1829 = vcombine.high %v1805, 0.0
        %v1830 = vcombine.high %v1812, 0.0
        %v1831 = vcombine.high %v1821, 0.0
        %v1832 = vcombine.high %v1828, 0.0
        %v1833 = vcombine.low %v1805, %v1812
        %v1835 = vunpack.c.l.s4 1983009808
        %v1836 = vunpack.c.0.s8 %v1835
        %v1837 = vlaneseq
        %v1838 = vshrl.u32 %v1837, 7
        %v1839 = vsub.s32 %v1836, %v1838
        %v1840 = vrot.slane %v1833, %v1839
        %v1841 = vcombine.low %v1829, %v1830
        %v1843 = vunpack.c.l.s4 1983009808
        %v1844 = vunpack.c.0.s8 %v1843
        %v1845 = vlaneseq
        %v1846 = vshrl.u32 %v1845, 7
        %v1847 = vsub.s32 %v1844, %v1846
        %v1848 = vrot.slane %v1841, %v1847
        %v1849 = vcombine.low %v1821, %v1828
        %v1851 = vunpack.c.l.s4 1983009808
        %v1852 = vunpack.c.0.s8 %v1851
        %v1853 = vlaneseq
        %v1854 = vshrl.u32 %v1853, 7
        %v1855 = vsub.s32 %v1852, %v1854
        %v1856 = vrot.slane %v1849, %v1855
        %v1857 = vcombine.low %v1831, %v1832
        %v1859 = vunpack.c.l.s4 1983009808
        %v1860 = vunpack.c.0.s8 %v1859
        %v1861 = vlaneseq
        %v1862 = vshrl.u32 %v1861, 7
        %v1863 = vsub.s32 %v1860, %v1862
        %v1864 = vrot.slane %v1857, %v1863
        %v1865 = vcombine.low %v1840, %v1848
        %v1866 = vcombine.high %v1840, %v1848
        %v1868 = vunpack.c.l.s4 1934713408
        %v1869 = vunpack.c.0.s8 %v1868
        %v1870 = vlaneseq
        %v1871 = vshrl.u32 %v1870, 7
        %v1872 = vsub.s32 %v1869, %v1871
        %v1873 = vrot.slane %v1865, %v1872
        %v1875 = vunpack.c.l.s4 1934713408
        %v1876 = vunpack.c.0.s8 %v1875
        %v1877 = vlaneseq
        %v1878 = vshrl.u32 %v1877, 7
        %v1879 = vsub.s32 %v1876, %v1878
        %v1880 = vrot.slane %v1866, %v1879
        %v1881 = vcombine.low %v1856, %v1864
        %v1882 = vcombine.high %v1856, %v1864
        %v1884 = vunpack.c.l.s4 1934713408
        %v1885 = vunpack.c.0.s8 %v1884
        %v1886 = vlaneseq
        %v1887 = vshrl.u32 %v1886, 7
        %v1888 = vsub.s32 %v1885, %v1887
        %v1889 = vrot.slane %v1881, %v1888
        %v1891 = vunpack.c.l.s4 1934713408
        %v1892 = vunpack.c.0.s8 %v1891
        %v1893 = vlaneseq
        %v1894 = vshrl.u32 %v1893, 7
        %v1895 = vsub.s32 %v1892, %v1894
        %v1896 = vrot.slane %v1882, %v1895
        %v1897 = vcombine.low %v1873, %v1889
        %v1898 = vcombine.high %v1873, %v1889
        %v1899 = vcombine.low %v1880, %v1896
        %v1900 = vcombine.high %v1880, %v1896
        %1902 = vrot.lane.b32.xlu0 %v1898, 8
        %v1903 = vpop.permute.xlu0 %1902
        %1906 = vrot.lane.b32.xlu0 %v1899, 16
        %v1907 = vpop.permute.xlu0 %1906
        %1910 = vrot.lane.b32.xlu0 %v1900, 24
        %v1911 = vpop.permute.xlu0 %1910
        %v1913 = vsel %vm1347, %v1897, %v1903
        %vm1914 = vcmask 130048
        %v1915 = vsel %vm1914, %v1913, %v1907
        %vm1916 = vcmask 195584
        %v1917 = vsel %vm1916, %v1915, %v1911
        %s1918 = scalar_lea.vmem [#allocation4], 8
        %v1919 = vld [vmem:[%s1918] sm:$0xff]
        %1921 = vrot.lane.b32.xlu0 %v884, 120
        %v1922 = vpop.permute.xlu0 %1921
        %1924 = vrot.lane.b32.xlu0 %v884, 112
        %v1925 = vpop.permute.xlu0 %1924
        %1927 = vrot.lane.b32.xlu0 %v884, 104
        %v1928 = vpop.permute.xlu0 %1927
        %v1930 = vcombine.low %v884, %v1925
        %v1931 = vcombine.high %v884, %v1925
        %v1933 = vunpack.c.l.s4 1983009808
        %v1934 = vunpack.c.0.s8 %v1933
        %v1935 = vlaneseq
        %v1936 = vshrl.u32 %v1935, 7
        %v1937 = vsub.s32 %v1934, %v1936
        %v1938 = vrot.slane %v1930, %v1937
        %v1940 = vunpack.c.l.s4 1983009808
        %v1941 = vunpack.c.0.s8 %v1940
        %v1942 = vlaneseq
        %v1943 = vshrl.u32 %v1942, 7
        %v1944 = vsub.s32 %v1941, %v1943
        %v1945 = vrot.slane %v1931, %v1944
        %v1946 = vcombine.low %v1922, %v1928
        %v1947 = vcombine.high %v1922, %v1928
        %v1949 = vunpack.c.l.s4 1983009808
        %v1950 = vunpack.c.0.s8 %v1949
        %v1951 = vlaneseq
        %v1952 = vshrl.u32 %v1951, 7
        %v1953 = vsub.s32 %v1950, %v1952
        %v1954 = vrot.slane %v1946, %v1953
        %v1956 = vunpack.c.l.s4 1983009808
        %v1957 = vunpack.c.0.s8 %v1956
        %v1958 = vlaneseq
        %v1959 = vshrl.u32 %v1958, 7
        %v1960 = vsub.s32 %v1957, %v1959
        %v1961 = vrot.slane %v1947, %v1960
        %v1962 = vcombine.low %v1938, %v1954
        %v1963 = vcombine.high %v1938, %v1954
        %v1965 = vunpack.c.l.s4 1934713408
        %v1966 = vunpack.c.0.s8 %v1965
        %v1967 = vlaneseq
        %v1968 = vshrl.u32 %v1967, 7
        %v1969 = vsub.s32 %v1966, %v1968
        %v1970 = vrot.slane %v1962, %v1969
        %v1972 = vunpack.c.l.s4 1934713408
        %v1973 = vunpack.c.0.s8 %v1972
        %v1974 = vlaneseq
        %v1975 = vshrl.u32 %v1974, 7
        %v1976 = vsub.s32 %v1973, %v1975
        %v1977 = vrot.slane %v1963, %v1976
        %v1978 = vcombine.low %v1945, %v1961
        %v1979 = vcombine.high %v1945, %v1961
        %v1981 = vunpack.c.l.s4 1934713408
        %v1982 = vunpack.c.0.s8 %v1981
        %v1983 = vlaneseq
        %v1984 = vshrl.u32 %v1983, 7
        %v1985 = vsub.s32 %v1982, %v1984
        %v1986 = vrot.slane %v1978, %v1985
        %v1988 = vunpack.c.l.s4 1934713408
        %v1989 = vunpack.c.0.s8 %v1988
        %v1990 = vlaneseq
        %v1991 = vshrl.u32 %v1990, 7
        %v1992 = vsub.s32 %v1989, %v1991
        %v1993 = vrot.slane %v1979, %v1992
        %v1994 = vcombine.high %v1970, 0.0
        %v1995 = vcombine.high %v1977, 0.0
        %v1996 = vcombine.high %v1986, 0.0
        %v1997 = vcombine.high %v1993, 0.0
        %v1998 = vcombine.low %v1970, %v1977
        %v2000 = vunpack.c.l.s4 1983009808
        %v2001 = vunpack.c.0.s8 %v2000
        %v2002 = vlaneseq
        %v2003 = vshrl.u32 %v2002, 7
        %v2004 = vsub.s32 %v2001, %v2003
        %v2005 = vrot.slane %v1998, %v2004
        %v2006 = vcombine.low %v1994, %v1995
        %v2008 = vunpack.c.l.s4 1983009808
        %v2009 = vunpack.c.0.s8 %v2008
        %v2010 = vlaneseq
        %v2011 = vshrl.u32 %v2010, 7
        %v2012 = vsub.s32 %v2009, %v2011
        %v2013 = vrot.slane %v2006, %v2012
        %v2014 = vcombine.low %v1986, %v1993
        %v2016 = vunpack.c.l.s4 1983009808
        %v2017 = vunpack.c.0.s8 %v2016
        %v2018 = vlaneseq
        %v2019 = vshrl.u32 %v2018, 7
        %v2020 = vsub.s32 %v2017, %v2019
        %v2021 = vrot.slane %v2014, %v2020
        %v2022 = vcombine.low %v1996, %v1997
        %v2024 = vunpack.c.l.s4 1983009808
        %v2025 = vunpack.c.0.s8 %v2024
        %v2026 = vlaneseq
        %v2027 = vshrl.u32 %v2026, 7
        %v2028 = vsub.s32 %v2025, %v2027
        %v2029 = vrot.slane %v2022, %v2028
        %v2030 = vcombine.low %v2005, %v2013
        %v2031 = vcombine.high %v2005, %v2013
        %v2033 = vunpack.c.l.s4 1934713408
        %v2034 = vunpack.c.0.s8 %v2033
        %v2035 = vlaneseq
        %v2036 = vshrl.u32 %v2035, 7
        %v2037 = vsub.s32 %v2034, %v2036
        %v2038 = vrot.slane %v2030, %v2037
        %v2040 = vunpack.c.l.s4 1934713408
        %v2041 = vunpack.c.0.s8 %v2040
        %v2042 = vlaneseq
        %v2043 = vshrl.u32 %v2042, 7
        %v2044 = vsub.s32 %v2041, %v2043
        %v2045 = vrot.slane %v2031, %v2044
        %v2046 = vcombine.low %v2021, %v2029
        %v2047 = vcombine.high %v2021, %v2029
        %v2049 = vunpack.c.l.s4 1934713408
        %v2050 = vunpack.c.0.s8 %v2049
        %v2051 = vlaneseq
        %v2052 = vshrl.u32 %v2051, 7
        %v2053 = vsub.s32 %v2050, %v2052
        %v2054 = vrot.slane %v2046, %v2053
        %v2056 = vunpack.c.l.s4 1934713408
        %v2057 = vunpack.c.0.s8 %v2056
        %v2058 = vlaneseq
        %v2059 = vshrl.u32 %v2058, 7
        %v2060 = vsub.s32 %v2057, %v2059
        %v2061 = vrot.slane %v2047, %v2060
        %v2062 = vcombine.low %v2038, %v2054
        %v2063 = vcombine.high %v2038, %v2054
        %v2064 = vcombine.low %v2045, %v2061
        %v2065 = vcombine.high %v2045, %v2061
        %v2066 = vpack.c.bf16 %v2062, %v2062
        %v2067 = vpack.c.bf16 %v2063, %v2063
        %v2068 = vpack.c.bf16 %v2064, %v2064
        %v2069 = vpack.c.bf16 %v2065, %v2065
        %2071 = vrot.lane.b32.xlu0 %v880, 120
        %v2072 = vpop.permute.xlu0 %2071
        %2073 = vrot.lane.b32.xlu0 %v880, 112
        %v2074 = vpop.permute.xlu0 %2073
        %2075 = vrot.lane.b32.xlu0 %v880, 104
        %v2076 = vpop.permute.xlu0 %2075
        %2077 = vrot.lane.b32.xlu0 %v880, 96
        %v2078 = vpop.permute.xlu0 %2077
        %2079 = vrot.lane.b32.xlu0 %v2072, 96
        %v2080 = vpop.permute.xlu0 %2079
        %2081 = vrot.lane.b32.xlu0 %v2074, 96
        %v2082 = vpop.permute.xlu0 %2081
        %2083 = vrot.lane.b32.xlu0 %v2076, 96
        %v2084 = vpop.permute.xlu0 %2083
        %v2089 = vcombine.low %v2078, %v2082
        %v2090 = vcombine.high %v2078, %v2082
        %v2092 = vunpack.c.l.s4 1983009808
        %v2093 = vunpack.c.0.s8 %v2092
        %v2094 = vlaneseq
        %v2095 = vshrl.u32 %v2094, 7
        %v2096 = vsub.s32 %v2093, %v2095
        %v2097 = vrot.slane %v2089, %v2096
        %v2099 = vunpack.c.l.s4 1983009808
        %v2100 = vunpack.c.0.s8 %v2099
        %v2101 = vlaneseq
        %v2102 = vshrl.u32 %v2101, 7
        %v2103 = vsub.s32 %v2100, %v2102
        %v2104 = vrot.slane %v2090, %v2103
        %v2105 = vcombine.low %v2080, %v2084
        %v2106 = vcombine.high %v2080, %v2084
        %v2108 = vunpack.c.l.s4 1983009808
        %v2109 = vunpack.c.0.s8 %v2108
        %v2110 = vlaneseq
        %v2111 = vshrl.u32 %v2110, 7
        %v2112 = vsub.s32 %v2109, %v2111
        %v2113 = vrot.slane %v2105, %v2112
        %v2115 = vunpack.c.l.s4 1983009808
        %v2116 = vunpack.c.0.s8 %v2115
        %v2117 = vlaneseq
        %v2118 = vshrl.u32 %v2117, 7
        %v2119 = vsub.s32 %v2116, %v2118
        %v2120 = vrot.slane %v2106, %v2119
        %v2121 = vcombine.low %v2097, %v2113
        %v2122 = vcombine.high %v2097, %v2113
        %v2124 = vunpack.c.l.s4 1934713408
        %v2125 = vunpack.c.0.s8 %v2124
        %v2126 = vlaneseq
        %v2127 = vshrl.u32 %v2126, 7
        %v2128 = vsub.s32 %v2125, %v2127
        %v2129 = vrot.slane %v2121, %v2128
        %v2131 = vunpack.c.l.s4 1934713408
        %v2132 = vunpack.c.0.s8 %v2131
        %v2133 = vlaneseq
        %v2134 = vshrl.u32 %v2133, 7
        %v2135 = vsub.s32 %v2132, %v2134
        %v2136 = vrot.slane %v2122, %v2135
        %v2137 = vcombine.low %v2104, %v2120
        %v2138 = vcombine.high %v2104, %v2120
        %v2140 = vunpack.c.l.s4 1934713408
        %v2141 = vunpack.c.0.s8 %v2140
        %v2142 = vlaneseq
        %v2143 = vshrl.u32 %v2142, 7
        %v2144 = vsub.s32 %v2141, %v2143
        %v2145 = vrot.slane %v2137, %v2144
        %v2147 = vunpack.c.l.s4 1934713408
        %v2148 = vunpack.c.0.s8 %v2147
        %v2149 = vlaneseq
        %v2150 = vshrl.u32 %v2149, 7
        %v2151 = vsub.s32 %v2148, %v2150
        %v2152 = vrot.slane %v2138, %v2151
        %v2153 = vcombine.high %v2129, 0.0
        %v2154 = vcombine.high %v2136, 0.0
        %v2155 = vcombine.high %v2145, 0.0
        %v2156 = vcombine.high %v2152, 0.0
        %v2157 = vcombine.low %v2129, %v2136
        %v2159 = vunpack.c.l.s4 1983009808
        %v2160 = vunpack.c.0.s8 %v2159
        %v2161 = vlaneseq
        %v2162 = vshrl.u32 %v2161, 7
        %v2163 = vsub.s32 %v2160, %v2162
        %v2164 = vrot.slane %v2157, %v2163
        %v2165 = vcombine.low %v2153, %v2154
        %v2167 = vunpack.c.l.s4 1983009808
        %v2168 = vunpack.c.0.s8 %v2167
        %v2169 = vlaneseq
        %v2170 = vshrl.u32 %v2169, 7
        %v2171 = vsub.s32 %v2168, %v2170
        %v2172 = vrot.slane %v2165, %v2171
        %v2173 = vcombine.low %v2145, %v2152
        %v2175 = vunpack.c.l.s4 1983009808
        %v2176 = vunpack.c.0.s8 %v2175
        %v2177 = vlaneseq
        %v2178 = vshrl.u32 %v2177, 7
        %v2179 = vsub.s32 %v2176, %v2178
        %v2180 = vrot.slane %v2173, %v2179
        %v2181 = vcombine.low %v2155, %v2156
        %v2183 = vunpack.c.l.s4 1983009808
        %v2184 = vunpack.c.0.s8 %v2183
        %v2185 = vlaneseq
        %v2186 = vshrl.u32 %v2185, 7
        %v2187 = vsub.s32 %v2184, %v2186
        %v2188 = vrot.slane %v2181, %v2187
        %v2189 = vcombine.low %v2164, %v2172
        %v2190 = vcombine.high %v2164, %v2172
        %v2192 = vunpack.c.l.s4 1934713408
        %v2193 = vunpack.c.0.s8 %v2192
        %v2194 = vlaneseq
        %v2195 = vshrl.u32 %v2194, 7
        %v2196 = vsub.s32 %v2193, %v2195
        %v2197 = vrot.slane %v2189, %v2196
        %v2199 = vunpack.c.l.s4 1934713408
        %v2200 = vunpack.c.0.s8 %v2199
        %v2201 = vlaneseq
        %v2202 = vshrl.u32 %v2201, 7
        %v2203 = vsub.s32 %v2200, %v2202
        %v2204 = vrot.slane %v2190, %v2203
        %v2205 = vcombine.low %v2180, %v2188
        %v2206 = vcombine.high %v2180, %v2188
        %v2208 = vunpack.c.l.s4 1934713408
        %v2209 = vunpack.c.0.s8 %v2208
        %v2210 = vlaneseq
        %v2211 = vshrl.u32 %v2210, 7
        %v2212 = vsub.s32 %v2209, %v2211
        %v2213 = vrot.slane %v2205, %v2212
        %v2215 = vunpack.c.l.s4 1934713408
        %v2216 = vunpack.c.0.s8 %v2215
        %v2217 = vlaneseq
        %v2218 = vshrl.u32 %v2217, 7
        %v2219 = vsub.s32 %v2216, %v2218
        %v2220 = vrot.slane %v2206, %v2219
        %v2221 = vcombine.low %v2197, %v2213
        %v2222 = vcombine.high %v2197, %v2213
        %v2223 = vcombine.low %v2204, %v2220
        %v2224 = vcombine.high %v2204, %v2220
        %v2225 = vpack.c.bf16 %v2221, %v2221
        %v2226 = vpack.c.bf16 %v2222, %v2222
        %v2227 = vpack.c.bf16 %v2223, %v2223
        %v2228 = vpack.c.bf16 %v2224, %v2224
        %2229 = vrot.lane.b32.xlu0 %v880, 64
        %v2230 = vpop.permute.xlu0 %2229
        %2231 = vrot.lane.b32.xlu0 %v2072, 64
        %v2232 = vpop.permute.xlu0 %2231
        %2233 = vrot.lane.b32.xlu0 %v2074, 64
        %v2234 = vpop.permute.xlu0 %2233
        %2235 = vrot.lane.b32.xlu0 %v2076, 64
        %v2236 = vpop.permute.xlu0 %2235
        %v2241 = vcombine.low %v2230, %v2234
        %v2242 = vcombine.high %v2230, %v2234
        %v2244 = vunpack.c.l.s4 1983009808
        %v2245 = vunpack.c.0.s8 %v2244
        %v2246 = vlaneseq
        %v2247 = vshrl.u32 %v2246, 7
        %v2248 = vsub.s32 %v2245, %v2247
        %v2249 = vrot.slane %v2241, %v2248
        %v2251 = vunpack.c.l.s4 1983009808
        %v2252 = vunpack.c.0.s8 %v2251
        %v2253 = vlaneseq
        %v2254 = vshrl.u32 %v2253, 7
        %v2255 = vsub.s32 %v2252, %v2254
        %v2256 = vrot.slane %v2242, %v2255
        %v2257 = vcombine.low %v2232, %v2236
        %v2258 = vcombine.high %v2232, %v2236
        %v2260 = vunpack.c.l.s4 1983009808
        %v2261 = vunpack.c.0.s8 %v2260
        %v2262 = vlaneseq
        %v2263 = vshrl.u32 %v2262, 7
        %v2264 = vsub.s32 %v2261, %v2263
        %v2265 = vrot.slane %v2257, %v2264
        %v2267 = vunpack.c.l.s4 1983009808
        %v2268 = vunpack.c.0.s8 %v2267
        %v2269 = vlaneseq
        %v2270 = vshrl.u32 %v2269, 7
        %v2271 = vsub.s32 %v2268, %v2270
        %v2272 = vrot.slane %v2258, %v2271
        %v2273 = vcombine.low %v2249, %v2265
        %v2274 = vcombine.high %v2249, %v2265
        %v2276 = vunpack.c.l.s4 1934713408
        %v2277 = vunpack.c.0.s8 %v2276
        %v2278 = vlaneseq
        %v2279 = vshrl.u32 %v2278, 7
        %v2280 = vsub.s32 %v2277, %v2279
        %v2281 = vrot.slane %v2273, %v2280
        %v2283 = vunpack.c.l.s4 1934713408
        %v2284 = vunpack.c.0.s8 %v2283
        %v2285 = vlaneseq
        %v2286 = vshrl.u32 %v2285, 7
        %v2287 = vsub.s32 %v2284, %v2286
        %v2288 = vrot.slane %v2274, %v2287
        %v2289 = vcombine.low %v2256, %v2272
        %v2290 = vcombine.high %v2256, %v2272
        %v2292 = vunpack.c.l.s4 1934713408
        %v2293 = vunpack.c.0.s8 %v2292
        %v2294 = vlaneseq
        %v2295 = vshrl.u32 %v2294, 7
        %v2296 = vsub.s32 %v2293, %v2295
        %v2297 = vrot.slane %v2289, %v2296
        %v2299 = vunpack.c.l.s4 1934713408
        %v2300 = vunpack.c.0.s8 %v2299
        %v2301 = vlaneseq
        %v2302 = vshrl.u32 %v2301, 7
        %v2303 = vsub.s32 %v2300, %v2302
        %v2304 = vrot.slane %v2290, %v2303
        %v2305 = vcombine.high %v2281, 0.0
        %v2306 = vcombine.high %v2288, 0.0
        %v2307 = vcombine.high %v2297, 0.0
        %v2308 = vcombine.high %v2304, 0.0
        %v2309 = vcombine.low %v2281, %v2288
        %v2311 = vunpack.c.l.s4 1983009808
        %v2312 = vunpack.c.0.s8 %v2311
        %v2313 = vlaneseq
        %v2314 = vshrl.u32 %v2313, 7
        %v2315 = vsub.s32 %v2312, %v2314
        %v2316 = vrot.slane %v2309, %v2315
        %v2317 = vcombine.low %v2305, %v2306
        %v2319 = vunpack.c.l.s4 1983009808
        %v2320 = vunpack.c.0.s8 %v2319
        %v2321 = vlaneseq
        %v2322 = vshrl.u32 %v2321, 7
        %v2323 = vsub.s32 %v2320, %v2322
        %v2324 = vrot.slane %v2317, %v2323
        %v2325 = vcombine.low %v2297, %v2304
        %v2327 = vunpack.c.l.s4 1983009808
        %v2328 = vunpack.c.0.s8 %v2327
        %v2329 = vlaneseq
        %v2330 = vshrl.u32 %v2329, 7
        %v2331 = vsub.s32 %v2328, %v2330
        %v2332 = vrot.slane %v2325, %v2331
        %v2333 = vcombine.low %v2307, %v2308
        %v2335 = vunpack.c.l.s4 1983009808
        %v2336 = vunpack.c.0.s8 %v2335
        %v2337 = vlaneseq
        %v2338 = vshrl.u32 %v2337, 7
        %v2339 = vsub.s32 %v2336, %v2338
        %v2340 = vrot.slane %v2333, %v2339
        %v2341 = vcombine.low %v2316, %v2324
        %v2342 = vcombine.high %v2316, %v2324
        %v2344 = vunpack.c.l.s4 1934713408
        %v2345 = vunpack.c.0.s8 %v2344
        %v2346 = vlaneseq
        %v2347 = vshrl.u32 %v2346, 7
        %v2348 = vsub.s32 %v2345, %v2347
        %v2349 = vrot.slane %v2341, %v2348
        %v2351 = vunpack.c.l.s4 1934713408
        %v2352 = vunpack.c.0.s8 %v2351
        %v2353 = vlaneseq
        %v2354 = vshrl.u32 %v2353, 7
        %v2355 = vsub.s32 %v2352, %v2354
        %v2356 = vrot.slane %v2342, %v2355
        %v2357 = vcombine.low %v2332, %v2340
        %v2358 = vcombine.high %v2332, %v2340
        %v2360 = vunpack.c.l.s4 1934713408
        %v2361 = vunpack.c.0.s8 %v2360
        %v2362 = vlaneseq
        %v2363 = vshrl.u32 %v2362, 7
        %v2364 = vsub.s32 %v2361, %v2363
        %v2365 = vrot.slane %v2357, %v2364
        %v2367 = vunpack.c.l.s4 1934713408
        %v2368 = vunpack.c.0.s8 %v2367
        %v2369 = vlaneseq
        %v2370 = vshrl.u32 %v2369, 7
        %v2371 = vsub.s32 %v2368, %v2370
        %v2372 = vrot.slane %v2358, %v2371
        %v2373 = vcombine.low %v2349, %v2365
        %v2374 = vcombine.high %v2349, %v2365
        %v2375 = vcombine.low %v2356, %v2372
        %v2376 = vcombine.high %v2356, %v2372
        %v2377 = vpack.c.bf16 %v2373, %v2373
        %v2378 = vpack.c.bf16 %v2374, %v2374
        %v2379 = vpack.c.bf16 %v2375, %v2375
        %v2380 = vpack.c.bf16 %v2376, %v2376
        %v2382 = vsel %vm1347, %v2066, 0
        %v2385 = vsel %vm1347, %v2225, 0
        %2387 = vmatprep.subr.bf16.mxu0 0
        %2388 = vmatpush1.bf16.xpose.msra.mxu0 %v2385
        %2389 = vmatprep.subr.bf16.mxu0 0
        %2390 = vmatpush1.bf16.xpose.msra.mxu0 0
        %2391 = vmatprep.subr.bf16.mxu0 0
        %2392 = vmatpush1.bf16.xpose.msra.mxu0 0
        %2393 = vmatprep.subr.bf16.mxu0 0
        %2394 = vmatpush1.bf16.xpose.msra.mxu0 0
        %2395 = vmatprep.subr.bf16.mxu0 0
        %2396 = vmatpush1.bf16.xpose.msra.mxu0 0
        %2397 = vmatprep.subr.bf16.mxu0 0
        %2398 = vmatpush1.bf16.xpose.msra.mxu0 0
        %2399 = vmatprep.subr.bf16.mxu0 0
        %2400 = vmatpush1.bf16.xpose.msra.mxu0 0
        %2401 = vmatprep.subr.bf16.mxu0 0
        %2402 = vmatpush1.bf16.xpose.msra.mxu0 0
        %2403 = vmatprep.subr.bf16.mxu0 0
        %2404 = vmatpush1.bf16.xpose.msra.mxu0 0
        %2405 = vmatprep.subr.bf16.mxu0 0
        %2406 = vmatpush1.bf16.xpose.msra.mxu0 0
        %2407 = vmatprep.subr.bf16.mxu0 0
        %2408 = vmatpush1.bf16.xpose.msra.mxu0 0
        %2409 = vmatprep.subr.bf16.mxu0 0
        %2410 = vmatpush1.bf16.xpose.msra.mxu0 0
        %2411 = vmatprep.subr.bf16.mxu0 0
        %2412 = vmatpush1.bf16.xpose.msra.mxu0 0
        %2413 = vmatprep.subr.bf16.mxu0 0
        %2414 = vmatpush1.bf16.xpose.msra.mxu0 0
        %2415 = vmatprep.subr.bf16.mxu0 0
        %2416 = vmatpush1.bf16.xpose.msra.mxu0 0
        %2417 = vmatprep.subr.bf16.mxu0 0
        %2418 = vmatpush1.bf16.xpose.msra.mxu0 0
        %2419 = vmatprep.mubr.bf16.mxu0 0
        %2420 = vmatmul.mubr.bf16.gmra.mrb[0].mxu0 %v2382
        %v2421 = vpop.f32.mrb[0].mxu0
        %v2422 = vadd.f32 %v1919, %v2421
        %v2423 = vpop.f32.mrb[0].mxu0
        %v2424 = vpop.f32.mrb[0].mxu0
        %v2425 = vpop.f32.mrb[0].mxu0
        %2426 = vdwg.mxu0
        %v2428 = vsel %vm1347, %v2067, 0
        %v2431 = vsel %vm1347, %v2226, 0
        %2433 = vmatprep.subr.bf16.mxu0 0
        %2434 = vmatpush1.bf16.xpose.msra.mxu0 %v2431
        %2435 = vmatprep.subr.bf16.mxu0 0
        %2436 = vmatpush1.bf16.xpose.msra.mxu0 0
        %2437 = vmatprep.subr.bf16.mxu0 0
        %2438 = vmatpush1.bf16.xpose.msra.mxu0 0
        %2439 = vmatprep.subr.bf16.mxu0 0
        %2440 = vmatpush1.bf16.xpose.msra.mxu0 0
        %2441 = vmatprep.subr.bf16.mxu0 0
        %2442 = vmatpush1.bf16.xpose.msra.mxu0 0
        %2443 = vmatprep.subr.bf16.mxu0 0
        %2444 = vmatpush1.bf16.xpose.msra.mxu0 0
        %2445 = vmatprep.subr.bf16.mxu0 0
        %2446 = vmatpush1.bf16.xpose.msra.mxu0 0
        %2447 = vmatprep.subr.bf16.mxu0 0
        %2448 = vmatpush1.bf16.xpose.msra.mxu0 0
        %2449 = vmatprep.subr.bf16.mxu0 0
        %2450 = vmatpush1.bf16.xpose.msra.mxu0 0
        %2451 = vmatprep.subr.bf16.mxu0 0
        %2452 = vmatpush1.bf16.xpose.msra.mxu0 0
        %2453 = vmatprep.subr.bf16.mxu0 0
        %2454 = vmatpush1.bf16.xpose.msra.mxu0 0
        %2455 = vmatprep.subr.bf16.mxu0 0
        %2456 = vmatpush1.bf16.xpose.msra.mxu0 0
        %2457 = vmatprep.subr.bf16.mxu0 0
        %2458 = vmatpush1.bf16.xpose.msra.mxu0 0
        %2459 = vmatprep.subr.bf16.mxu0 0
        %2460 = vmatpush1.bf16.xpose.msra.mxu0 0
        %2461 = vmatprep.subr.bf16.mxu0 0
        %2462 = vmatpush1.bf16.xpose.msra.mxu0 0
        %2463 = vmatprep.subr.bf16.mxu0 0
        %2464 = vmatpush1.bf16.xpose.msra.mxu0 0
        %2465 = vmatprep.mubr.bf16.mxu0 0
        %2466 = vmatmul.mubr.bf16.gmra.mrb[0].mxu0 %v2428
        %v2467 = vpop.f32.mrb[0].mxu0
        %v2468 = vadd.f32 %v1919, %v2467
        %v2469 = vpop.f32.mrb[0].mxu0
        %v2470 = vpop.f32.mrb[0].mxu0
        %v2471 = vpop.f32.mrb[0].mxu0
        %2472 = vdwg.mxu0
        %v2474 = vsel %vm1347, %v2068, 0
        %v2477 = vsel %vm1347, %v2227, 0
        %2479 = vmatprep.subr.bf16.mxu0 0
        %2480 = vmatpush1.bf16.xpose.msra.mxu0 %v2477
        %2481 = vmatprep.subr.bf16.mxu0 0
        %2482 = vmatpush1.bf16.xpose.msra.mxu0 0
        %2483 = vmatprep.subr.bf16.mxu0 0
        %2484 = vmatpush1.bf16.xpose.msra.mxu0 0
        %2485 = vmatprep.subr.bf16.mxu0 0
        %2486 = vmatpush1.bf16.xpose.msra.mxu0 0
        %2487 = vmatprep.subr.bf16.mxu0 0
        %2488 = vmatpush1.bf16.xpose.msra.mxu0 0
        %2489 = vmatprep.subr.bf16.mxu0 0
        %2490 = vmatpush1.bf16.xpose.msra.mxu0 0
        %2491 = vmatprep.subr.bf16.mxu0 0
        %2492 = vmatpush1.bf16.xpose.msra.mxu0 0
        %2493 = vmatprep.subr.bf16.mxu0 0
        %2494 = vmatpush1.bf16.xpose.msra.mxu0 0
        %2495 = vmatprep.subr.bf16.mxu0 0
        %2496 = vmatpush1.bf16.xpose.msra.mxu0 0
        %2497 = vmatprep.subr.bf16.mxu0 0
        %2498 = vmatpush1.bf16.xpose.msra.mxu0 0
        %2499 = vmatprep.subr.bf16.mxu0 0
        %2500 = vmatpush1.bf16.xpose.msra.mxu0 0
        %2501 = vmatprep.subr.bf16.mxu0 0
        %2502 = vmatpush1.bf16.xpose.msra.mxu0 0
        %2503 = vmatprep.subr.bf16.mxu0 0
        %2504 = vmatpush1.bf16.xpose.msra.mxu0 0
        %2505 = vmatprep.subr.bf16.mxu0 0
        %2506 = vmatpush1.bf16.xpose.msra.mxu0 0
        %2507 = vmatprep.subr.bf16.mxu0 0
        %2508 = vmatpush1.bf16.xpose.msra.mxu0 0
        %2509 = vmatprep.subr.bf16.mxu0 0
        %2510 = vmatpush1.bf16.xpose.msra.mxu0 0
        %2511 = vmatprep.mubr.bf16.mxu0 0
        %2512 = vmatmul.mubr.bf16.gmra.mrb[0].mxu0 %v2474
        %v2513 = vpop.f32.mrb[0].mxu0
        %v2514 = vadd.f32 %v1919, %v2513
        %v2515 = vpop.f32.mrb[0].mxu0
        %v2516 = vpop.f32.mrb[0].mxu0
        %v2517 = vpop.f32.mrb[0].mxu0
        %2518 = vdwg.mxu0
        %v2520 = vsel %vm1347, %v2069, 0
        %v2523 = vsel %vm1347, %v2228, 0
        %2525 = vmatprep.subr.bf16.mxu0 0
        %2526 = vmatpush1.bf16.xpose.msra.mxu0 %v2523
        %2527 = vmatprep.subr.bf16.mxu0 0
        %2528 = vmatpush1.bf16.xpose.msra.mxu0 0
        %2529 = vmatprep.subr.bf16.mxu0 0
        %2530 = vmatpush1.bf16.xpose.msra.mxu0 0
        %2531 = vmatprep.subr.bf16.mxu0 0
        %2532 = vmatpush1.bf16.xpose.msra.mxu0 0
        %2533 = vmatprep.subr.bf16.mxu0 0
        %2534 = vmatpush1.bf16.xpose.msra.mxu0 0
        %2535 = vmatprep.subr.bf16.mxu0 0
        %2536 = vmatpush1.bf16.xpose.msra.mxu0 0
        %2537 = vmatprep.subr.bf16.mxu0 0
        %2538 = vmatpush1.bf16.xpose.msra.mxu0 0
        %2539 = vmatprep.subr.bf16.mxu0 0
        %2540 = vmatpush1.bf16.xpose.msra.mxu0 0
        %2541 = vmatprep.subr.bf16.mxu0 0
        %2542 = vmatpush1.bf16.xpose.msra.mxu0 0
        %2543 = vmatprep.subr.bf16.mxu0 0
        %2544 = vmatpush1.bf16.xpose.msra.mxu0 0
        %2545 = vmatprep.subr.bf16.mxu0 0
        %2546 = vmatpush1.bf16.xpose.msra.mxu0 0
        %2547 = vmatprep.subr.bf16.mxu0 0
        %2548 = vmatpush1.bf16.xpose.msra.mxu0 0
        %2549 = vmatprep.subr.bf16.mxu0 0
        %2550 = vmatpush1.bf16.xpose.msra.mxu0 0
        %2551 = vmatprep.subr.bf16.mxu0 0
        %2552 = vmatpush1.bf16.xpose.msra.mxu0 0
        %2553 = vmatprep.subr.bf16.mxu0 0
        %2554 = vmatpush1.bf16.xpose.msra.mxu0 0
        %2555 = vmatprep.subr.bf16.mxu0 0
        %2556 = vmatpush1.bf16.xpose.msra.mxu0 0
        %2557 = vmatprep.mubr.bf16.mxu0 0
        %2558 = vmatmul.mubr.bf16.gmra.mrb[0].mxu0 %v2520
        %v2559 = vpop.f32.mrb[0].mxu0
        %v2560 = vadd.f32 %v1919, %v2559
        %v2561 = vpop.f32.mrb[0].mxu0
        %v2562 = vpop.f32.mrb[0].mxu0
        %v2563 = vpop.f32.mrb[0].mxu0
        %2564 = vdwg.mxu0
        %v2565 = vsel %vm1347, %v2422, -inf
        %2566 = vmax.xlane.f32.xlu0 %v2565
        %v2567 = vpop.xlane.xlu0 %2566
        %v2568 = vsel %vm1347, %v2468, -inf
        %2569 = vmax.xlane.f32.xlu0 %v2568
        %v2570 = vpop.xlane.xlu0 %2569
        %v2571 = vsel %vm1347, %v2514, -inf
        %2572 = vmax.xlane.f32.xlu0 %v2571
        %v2573 = vpop.xlane.xlu0 %2572
        %v2574 = vsel %vm1347, %v2560, -inf
        %2575 = vmax.xlane.f32.xlu0 %v2574
        %v2576 = vpop.xlane.xlu0 %2575
        %v2577 = vsub.f32 %v2422, %v2567
        %v2578 = vsub.f32 %v2468, %v2570
        %v2579 = vsub.f32 %v2514, %v2573
        %v2580 = vsub.f32 %v2560, %v2576
        %v2581 = vmul.f32 %v2577, 1.442695
        %v2582 = vpow.pop %v2581
        %v2583 = vmul.f32 %v2578, 1.442695
        %v2584 = vpow.pop %v2583
        %v2585 = vmul.f32 %v2579, 1.442695
        %v2586 = vpow.pop %v2585
        %v2587 = vmul.f32 %v2580, 1.442695
        %v2588 = vpow.pop %v2587
        %v2589 = vsel %vm1347, %v2582, 0.0
        %2590 = vadd.xlane.f32.xlu0 %v2589
        %v2591 = vpop.xlane.xlu0 %2590
        %v2592 = vsel %vm1347, %v2584, 0.0
        %2593 = vadd.xlane.f32.xlu0 %v2592
        %v2594 = vpop.xlane.xlu0 %2593
        %v2595 = vsel %vm1347, %v2586, 0.0
        %2596 = vadd.xlane.f32.xlu0 %v2595
        %v2597 = vpop.xlane.xlu0 %2596
        %v2598 = vsel %vm1347, %v2588, 0.0
        %2599 = vadd.xlane.f32.xlu0 %v2598
        %v2600 = vpop.xlane.xlu0 %2599
        %v2601 = vrcp.pop %v2591
        %v2602 = vrcp.pop %v2594
        %v2603 = vrcp.pop %v2597
        %v2604 = vrcp.pop %v2600
        %v2605 = vmul.f32 %v2582, %v2601
        %v2606 = vmul.f32 %v2584, %v2602
        %v2607 = vmul.f32 %v2586, %v2603
        %v2608 = vmul.f32 %v2588, %v2604
        %v2609 = vpack.c.bf16 %v2605, %v2605
        %v2610 = vpack.c.bf16 %v2606, %v2606
        %v2611 = vpack.c.bf16 %v2607, %v2607
        %v2612 = vpack.c.bf16 %v2608, %v2608
        %v2614 = vsel %vm1347, %v2609, 0
        %v2617 = vsel %vm1583, %v2377, 0
        %2619 = vmatprep.subr.bf16.mxu0 0
        %2620 = vmatpush1.bf16.msra.mxu0 %v2617
        %2621 = vmatprep.subr.bf16.mxu0 0
        %2622 = vmatpush1.bf16.msra.mxu0 0
        %2623 = vmatprep.subr.bf16.mxu0 0
        %2624 = vmatpush1.bf16.msra.mxu0 0
        %2625 = vmatprep.subr.bf16.mxu0 0
        %2626 = vmatpush1.bf16.msra.mxu0 0
        %2627 = vmatprep.subr.bf16.mxu0 0
        %2628 = vmatpush1.bf16.msra.mxu0 0
        %2629 = vmatprep.subr.bf16.mxu0 0
        %2630 = vmatpush1.bf16.msra.mxu0 0
        %2631 = vmatprep.subr.bf16.mxu0 0
        %2632 = vmatpush1.bf16.msra.mxu0 0
        %2633 = vmatprep.subr.bf16.mxu0 0
        %2634 = vmatpush1.bf16.msra.mxu0 0
        %2635 = vmatprep.subr.bf16.mxu0 0
        %2636 = vmatpush1.bf16.msra.mxu0 0
        %2637 = vmatprep.subr.bf16.mxu0 0
        %2638 = vmatpush1.bf16.msra.mxu0 0
        %2639 = vmatprep.subr.bf16.mxu0 0
        %2640 = vmatpush1.bf16.msra.mxu0 0
        %2641 = vmatprep.subr.bf16.mxu0 0
        %2642 = vmatpush1.bf16.msra.mxu0 0
        %2643 = vmatprep.subr.bf16.mxu0 0
        %2644 = vmatpush1.bf16.msra.mxu0 0
        %2645 = vmatprep.subr.bf16.mxu0 0
        %2646 = vmatpush1.bf16.msra.mxu0 0
        %2647 = vmatprep.subr.bf16.mxu0 0
        %2648 = vmatpush1.bf16.msra.mxu0 0
        %2649 = vmatprep.subr.bf16.mxu0 0
        %2650 = vmatpush1.bf16.msra.mxu0 0
        %2651 = vmatprep.mubr.bf16.mxu0 0
        %2652 = vmatmul.mubr.bf16.gmra.mrb[0].mxu0 %v2614
        %v2653 = vpop.f32.mrb[0].mxu0
        %v2654 = vadd.f32 0.0, %v2653
        %v2655 = vpop.f32.mrb[0].mxu0
        %v2656 = vpop.f32.mrb[0].mxu0
        %v2657 = vpop.f32.mrb[0].mxu0
        %2658 = vdwg.mxu0
        %v2660 = vsel %vm1347, %v2610, 0
        %v2663 = vsel %vm1583, %v2378, 0
        %2665 = vmatprep.subr.bf16.mxu0 0
        %2666 = vmatpush1.bf16.msra.mxu0 %v2663
        %2667 = vmatprep.subr.bf16.mxu0 0
        %2668 = vmatpush1.bf16.msra.mxu0 0
        %2669 = vmatprep.subr.bf16.mxu0 0
        %2670 = vmatpush1.bf16.msra.mxu0 0
        %2671 = vmatprep.subr.bf16.mxu0 0
        %2672 = vmatpush1.bf16.msra.mxu0 0
        %2673 = vmatprep.subr.bf16.mxu0 0
        %2674 = vmatpush1.bf16.msra.mxu0 0
        %2675 = vmatprep.subr.bf16.mxu0 0
        %2676 = vmatpush1.bf16.msra.mxu0 0
        %2677 = vmatprep.subr.bf16.mxu0 0
        %2678 = vmatpush1.bf16.msra.mxu0 0
        %2679 = vmatprep.subr.bf16.mxu0 0
        %2680 = vmatpush1.bf16.msra.mxu0 0
        %2681 = vmatprep.subr.bf16.mxu0 0
        %2682 = vmatpush1.bf16.msra.mxu0 0
        %2683 = vmatprep.subr.bf16.mxu0 0
        %2684 = vmatpush1.bf16.msra.mxu0 0
        %2685 = vmatprep.subr.bf16.mxu0 0
        %2686 = vmatpush1.bf16.msra.mxu0 0
        %2687 = vmatprep.subr.bf16.mxu0 0
        %2688 = vmatpush1.bf16.msra.mxu0 0
        %2689 = vmatprep.subr.bf16.mxu0 0
        %2690 = vmatpush1.bf16.msra.mxu0 0
        %2691 = vmatprep.subr.bf16.mxu0 0
        %2692 = vmatpush1.bf16.msra.mxu0 0
        %2693 = vmatprep.subr.bf16.mxu0 0
        %2694 = vmatpush1.bf16.msra.mxu0 0
        %2695 = vmatprep.subr.bf16.mxu0 0
        %2696 = vmatpush1.bf16.msra.mxu0 0
        %2697 = vmatprep.mubr.bf16.mxu0 0
        %2698 = vmatmul.mubr.bf16.gmra.mrb[0].mxu0 %v2660
        %v2699 = vpop.f32.mrb[0].mxu0
        %v2700 = vadd.f32 0.0, %v2699
        %v2701 = vpop.f32.mrb[0].mxu0
        %v2702 = vpop.f32.mrb[0].mxu0
        %v2703 = vpop.f32.mrb[0].mxu0
        %2704 = vdwg.mxu0
        %v2706 = vsel %vm1347, %v2611, 0
        %v2709 = vsel %vm1583, %v2379, 0
        %2711 = vmatprep.subr.bf16.mxu0 0
        %2712 = vmatpush1.bf16.msra.mxu0 %v2709
        %2713 = vmatprep.subr.bf16.mxu0 0
        %2714 = vmatpush1.bf16.msra.mxu0 0
        %2715 = vmatprep.subr.bf16.mxu0 0
        %2716 = vmatpush1.bf16.msra.mxu0 0
        %2717 = vmatprep.subr.bf16.mxu0 0
        %2718 = vmatpush1.bf16.msra.mxu0 0
        %2719 = vmatprep.subr.bf16.mxu0 0
        %2720 = vmatpush1.bf16.msra.mxu0 0
        %2721 = vmatprep.subr.bf16.mxu0 0
        %2722 = vmatpush1.bf16.msra.mxu0 0
        %2723 = vmatprep.subr.bf16.mxu0 0
        %2724 = vmatpush1.bf16.msra.mxu0 0
        %2725 = vmatprep.subr.bf16.mxu0 0
        %2726 = vmatpush1.bf16.msra.mxu0 0
        %2727 = vmatprep.subr.bf16.mxu0 0
        %2728 = vmatpush1.bf16.msra.mxu0 0
        %2729 = vmatprep.subr.bf16.mxu0 0
        %2730 = vmatpush1.bf16.msra.mxu0 0
        %2731 = vmatprep.subr.bf16.mxu0 0
        %2732 = vmatpush1.bf16.msra.mxu0 0
        %2733 = vmatprep.subr.bf16.mxu0 0
        %2734 = vmatpush1.bf16.msra.mxu0 0
        %2735 = vmatprep.subr.bf16.mxu0 0
        %2736 = vmatpush1.bf16.msra.mxu0 0
        %2737 = vmatprep.subr.bf16.mxu0 0
        %2738 = vmatpush1.bf16.msra.mxu0 0
        %2739 = vmatprep.subr.bf16.mxu0 0
        %2740 = vmatpush1.bf16.msra.mxu0 0
        %2741 = vmatprep.subr.bf16.mxu0 0
        %2742 = vmatpush1.bf16.msra.mxu0 0
        %2743 = vmatprep.mubr.bf16.mxu0 0
        %2744 = vmatmul.mubr.bf16.gmra.mrb[0].mxu0 %v2706
        %v2745 = vpop.f32.mrb[0].mxu0
        %v2746 = vadd.f32 0.0, %v2745
        %v2747 = vpop.f32.mrb[0].mxu0
        %v2748 = vpop.f32.mrb[0].mxu0
        %v2749 = vpop.f32.mrb[0].mxu0
        %2750 = vdwg.mxu0
        %v2752 = vsel %vm1347, %v2612, 0
        %v2755 = vsel %vm1583, %v2380, 0
        %2757 = vmatprep.subr.bf16.mxu0 0
        %2758 = vmatpush1.bf16.msra.mxu0 %v2755
        %2759 = vmatprep.subr.bf16.mxu0 0
        %2760 = vmatpush1.bf16.msra.mxu0 0
        %2761 = vmatprep.subr.bf16.mxu0 0
        %2762 = vmatpush1.bf16.msra.mxu0 0
        %2763 = vmatprep.subr.bf16.mxu0 0
        %2764 = vmatpush1.bf16.msra.mxu0 0
        %2765 = vmatprep.subr.bf16.mxu0 0
        %2766 = vmatpush1.bf16.msra.mxu0 0
        %2767 = vmatprep.subr.bf16.mxu0 0
        %2768 = vmatpush1.bf16.msra.mxu0 0
        %2769 = vmatprep.subr.bf16.mxu0 0
        %2770 = vmatpush1.bf16.msra.mxu0 0
        %2771 = vmatprep.subr.bf16.mxu0 0
        %2772 = vmatpush1.bf16.msra.mxu0 0
        %2773 = vmatprep.subr.bf16.mxu0 0
        %2774 = vmatpush1.bf16.msra.mxu0 0
        %2775 = vmatprep.subr.bf16.mxu0 0
        %2776 = vmatpush1.bf16.msra.mxu0 0
        %2777 = vmatprep.subr.bf16.mxu0 0
        %2778 = vmatpush1.bf16.msra.mxu0 0
        %2779 = vmatprep.subr.bf16.mxu0 0
        %2780 = vmatpush1.bf16.msra.mxu0 0
        %2781 = vmatprep.subr.bf16.mxu0 0
        %2782 = vmatpush1.bf16.msra.mxu0 0
        %2783 = vmatprep.subr.bf16.mxu0 0
        %2784 = vmatpush1.bf16.msra.mxu0 0
        %2785 = vmatprep.subr.bf16.mxu0 0
        %2786 = vmatpush1.bf16.msra.mxu0 0
        %2787 = vmatprep.subr.bf16.mxu0 0
        %2788 = vmatpush1.bf16.msra.mxu0 0
        %2789 = vmatprep.mubr.bf16.mxu0 0
        %2790 = vmatmul.mubr.bf16.gmra.mrb[0].mxu0 %v2752
        %v2791 = vpop.f32.mrb[0].mxu0
        %v2792 = vadd.f32 0.0, %v2791
        %v2793 = vpop.f32.mrb[0].mxu0
        %v2794 = vpop.f32.mrb[0].mxu0
        %v2795 = vpop.f32.mrb[0].mxu0
        %2796 = vdwg.mxu0
        %v2797 = vcombine.low %v2654, %v2746
        %v2798 = vcombine.high %v2654, %v2746
        %v2800 = vunpack.c.l.s4 1983009808
        %v2801 = vunpack.c.0.s8 %v2800
        %v2802 = vlaneseq
        %v2803 = vshrl.u32 %v2802, 7
        %v2804 = vsub.s32 %v2801, %v2803
        %v2805 = vrot.slane %v2797, %v2804
        %v2807 = vunpack.c.l.s4 1983009808
        %v2808 = vunpack.c.0.s8 %v2807
        %v2809 = vlaneseq
        %v2810 = vshrl.u32 %v2809, 7
        %v2811 = vsub.s32 %v2808, %v2810
        %v2812 = vrot.slane %v2798, %v2811
        %v2813 = vcombine.low %v2700, %v2792
        %v2814 = vcombine.high %v2700, %v2792
        %v2816 = vunpack.c.l.s4 1983009808
        %v2817 = vunpack.c.0.s8 %v2816
        %v2818 = vlaneseq
        %v2819 = vshrl.u32 %v2818, 7
        %v2820 = vsub.s32 %v2817, %v2819
        %v2821 = vrot.slane %v2813, %v2820
        %v2823 = vunpack.c.l.s4 1983009808
        %v2824 = vunpack.c.0.s8 %v2823
        %v2825 = vlaneseq
        %v2826 = vshrl.u32 %v2825, 7
        %v2827 = vsub.s32 %v2824, %v2826
        %v2828 = vrot.slane %v2814, %v2827
        %v2829 = vcombine.low %v2805, %v2821
        %v2830 = vcombine.high %v2805, %v2821
        %v2832 = vunpack.c.l.s4 1934713408
        %v2833 = vunpack.c.0.s8 %v2832
        %v2834 = vlaneseq
        %v2835 = vshrl.u32 %v2834, 7
        %v2836 = vsub.s32 %v2833, %v2835
        %v2837 = vrot.slane %v2829, %v2836
        %v2839 = vunpack.c.l.s4 1934713408
        %v2840 = vunpack.c.0.s8 %v2839
        %v2841 = vlaneseq
        %v2842 = vshrl.u32 %v2841, 7
        %v2843 = vsub.s32 %v2840, %v2842
        %v2844 = vrot.slane %v2830, %v2843
        %v2845 = vcombine.low %v2812, %v2828
        %v2846 = vcombine.high %v2812, %v2828
        %v2848 = vunpack.c.l.s4 1934713408
        %v2849 = vunpack.c.0.s8 %v2848
        %v2850 = vlaneseq
        %v2851 = vshrl.u32 %v2850, 7
        %v2852 = vsub.s32 %v2849, %v2851
        %v2853 = vrot.slane %v2845, %v2852
        %v2855 = vunpack.c.l.s4 1934713408
        %v2856 = vunpack.c.0.s8 %v2855
        %v2857 = vlaneseq
        %v2858 = vshrl.u32 %v2857, 7
        %v2859 = vsub.s32 %v2856, %v2858
        %v2860 = vrot.slane %v2846, %v2859
        %v2861 = vcombine.high %v2837, 0.0
        %v2862 = vcombine.high %v2844, 0.0
        %v2863 = vcombine.high %v2853, 0.0
        %v2864 = vcombine.high %v2860, 0.0
        %v2865 = vcombine.low %v2837, %v2844
        %v2867 = vunpack.c.l.s4 1983009808
        %v2868 = vunpack.c.0.s8 %v2867
        %v2869 = vlaneseq
        %v2870 = vshrl.u32 %v2869, 7
        %v2871 = vsub.s32 %v2868, %v2870
        %v2872 = vrot.slane %v2865, %v2871
        %v2873 = vcombine.low %v2861, %v2862
        %v2875 = vunpack.c.l.s4 1983009808
        %v2876 = vunpack.c.0.s8 %v2875
        %v2877 = vlaneseq
        %v2878 = vshrl.u32 %v2877, 7
        %v2879 = vsub.s32 %v2876, %v2878
        %v2880 = vrot.slane %v2873, %v2879
        %v2881 = vcombine.low %v2853, %v2860
        %v2883 = vunpack.c.l.s4 1983009808
        %v2884 = vunpack.c.0.s8 %v2883
        %v2885 = vlaneseq
        %v2886 = vshrl.u32 %v2885, 7
        %v2887 = vsub.s32 %v2884, %v2886
        %v2888 = vrot.slane %v2881, %v2887
        %v2889 = vcombine.low %v2863, %v2864
        %v2891 = vunpack.c.l.s4 1983009808
        %v2892 = vunpack.c.0.s8 %v2891
        %v2893 = vlaneseq
        %v2894 = vshrl.u32 %v2893, 7
        %v2895 = vsub.s32 %v2892, %v2894
        %v2896 = vrot.slane %v2889, %v2895
        %v2897 = vcombine.low %v2872, %v2880
        %v2898 = vcombine.high %v2872, %v2880
        %v2900 = vunpack.c.l.s4 1934713408
        %v2901 = vunpack.c.0.s8 %v2900
        %v2902 = vlaneseq
        %v2903 = vshrl.u32 %v2902, 7
        %v2904 = vsub.s32 %v2901, %v2903
        %v2905 = vrot.slane %v2897, %v2904
        %v2907 = vunpack.c.l.s4 1934713408
        %v2908 = vunpack.c.0.s8 %v2907
        %v2909 = vlaneseq
        %v2910 = vshrl.u32 %v2909, 7
        %v2911 = vsub.s32 %v2908, %v2910
        %v2912 = vrot.slane %v2898, %v2911
        %v2913 = vcombine.low %v2888, %v2896
        %v2914 = vcombine.high %v2888, %v2896
        %v2916 = vunpack.c.l.s4 1934713408
        %v2917 = vunpack.c.0.s8 %v2916
        %v2918 = vlaneseq
        %v2919 = vshrl.u32 %v2918, 7
        %v2920 = vsub.s32 %v2917, %v2919
        %v2921 = vrot.slane %v2913, %v2920
        %v2923 = vunpack.c.l.s4 1934713408
        %v2924 = vunpack.c.0.s8 %v2923
        %v2925 = vlaneseq
        %v2926 = vshrl.u32 %v2925, 7
        %v2927 = vsub.s32 %v2924, %v2926
        %v2928 = vrot.slane %v2914, %v2927
        %v2929 = vcombine.low %v2905, %v2921
        %v2930 = vcombine.high %v2905, %v2921
        %v2931 = vcombine.low %v2912, %v2928
        %v2932 = vcombine.high %v2912, %v2928
        %2934 = vrot.lane.b32.xlu0 %v2930, 8
        %v2935 = vpop.permute.xlu0 %2934
        %2938 = vrot.lane.b32.xlu0 %v2931, 16
        %v2939 = vpop.permute.xlu0 %2938
        %2942 = vrot.lane.b32.xlu0 %v2932, 24
        %v2943 = vpop.permute.xlu0 %2942
        %v2945 = vsel %vm1347, %v2929, %v2935
        %v2946 = vsel %vm1914, %v2945, %v2939
        %v2947 = vsel %vm1916, %v2946, %v2943
        %v2948 = vpack.c.bf16 %v2947, %v1917
        %v2949 = vld [vmem:[%s714] sm:$0xf]
        %v2950 = vld [vmem:[%s714 + $0x4] sm:$0xf]
        %v2951 = vld [vmem:[%s714 + $0x8] sm:$0xf]
        %v2952 = vld [vmem:[%s714 + $0xc] sm:$0xf]
        %v2957 = vunpack.c.l.b16 %v2949
        %v2958 = vunpack.c.l.b16 %v2950
        %v2959 = vunpack.c.l.b16 %v2951
        %v2960 = vunpack.c.l.b16 %v2952
        %v2961 = vpack.c.b16 %v2958, %v2957
        %v2962 = vpack.c.b16 %v2960, %v2959
        %v2966 = vsel %vm773, %v2948, 0
        %2968 = vmatprep.subr.bf16.mxu0 0
        %2969 = vmatpush1.bf16.msra.mxu0 %v2961
        %2970 = vmatprep.subr.bf16.mxu0 0
        %2971 = vmatpush1.bf16.msra.mxu0 %v2962
        %2972 = vmatprep.subr.bf16.mxu0 0
        %2973 = vmatpush1.bf16.msra.mxu0 0
        %2974 = vmatprep.subr.bf16.mxu0 0
        %2975 = vmatpush1.bf16.msra.mxu0 0
        %2976 = vmatprep.subr.bf16.mxu0 0
        %2977 = vmatpush1.bf16.msra.mxu0 0
        %2978 = vmatprep.subr.bf16.mxu0 0
        %2979 = vmatpush1.bf16.msra.mxu0 0
        %2980 = vmatprep.subr.bf16.mxu0 0
        %2981 = vmatpush1.bf16.msra.mxu0 0
        %2982 = vmatprep.subr.bf16.mxu0 0
        %2983 = vmatpush1.bf16.msra.mxu0 0
        %2984 = vmatprep.subr.bf16.mxu0 0
        %2985 = vmatpush1.bf16.msra.mxu0 0
        %2986 = vmatprep.subr.bf16.mxu0 0
        %2987 = vmatpush1.bf16.msra.mxu0 0
        %2988 = vmatprep.subr.bf16.mxu0 0
        %2989 = vmatpush1.bf16.msra.mxu0 0
        %2990 = vmatprep.subr.bf16.mxu0 0
        %2991 = vmatpush1.bf16.msra.mxu0 0
        %2992 = vmatprep.subr.bf16.mxu0 0
        %2993 = vmatpush1.bf16.msra.mxu0 0
        %2994 = vmatprep.subr.bf16.mxu0 0
        %2995 = vmatpush1.bf16.msra.mxu0 0
        %2996 = vmatprep.subr.bf16.mxu0 0
        %2997 = vmatpush1.bf16.msra.mxu0 0
        %2998 = vmatprep.subr.bf16.mxu0 0
        %2999 = vmatpush1.bf16.msra.mxu0 0
        %3000 = vmatprep.mubr.bf16.mxu0 0
        %3001 = vmatmul.mubr.bf16.gmra.mrb[0].mxu0 %v2966
        %v3002 = vpop.f32.mrb[0].mxu0
        %v3003 = vadd.f32 0.0, %v3002
        %v3004 = vpop.f32.mrb[0].mxu0
        %v3005 = vpop.f32.mrb[0].mxu0
        %v3006 = vadd.f32 0.0, %v3005
        %v3007 = vpop.f32.mrb[0].mxu0
        %3008 = vdwg.mxu0
        %v3009 = vadd.f32 %v768, %v3003
        %v3010 = vadd.f32 %v769, %v3006
        %s3011 = sadd.s32 %s770, 1
        %s3012 = sld [smem:[#allocation6 + %s3011]]
        %s3013 = sld [smem:[#allocation11 + %s3011]]
        %v3014 = vsel %vm773, %v3009, 0.0
        %3015 = vadd.xlane.f32.xlu0 %v3014
        %v3016 = vpop.xlane.xlu0 %3015
        %v3017 = vsel %vm773, %v3010, 0.0
        %3018 = vadd.xlane.f32.xlu0 %v3017
        %v3019 = vpop.xlane.xlu0 %3018
        %v3020 = vmul.f32 %v3016, %v780
        %v3021 = vmul.f32 %v3019, %v780
        %v3022 = vsub.f32 %v3009, %v3020
        %v3023 = vsub.f32 %v3010, %v3021
        %v3024 = vmul.f32 %v3022, %v3022
        %v3025 = vmul.f32 %v3023, %v3023
        %v3026 = vsel %vm773, %v3024, 0.0
        %3027 = vadd.xlane.f32.xlu0 %v3026
        %v3028 = vpop.xlane.xlu0 %3027
        %v3029 = vsel %vm773, %v3025, 0.0
        %3030 = vadd.xlane.f32.xlu0 %v3029
        %v3031 = vpop.xlane.xlu0 %3030
        %v3032 = vmul.f32 %v3028, %v793
        %v3033 = vmul.f32 %v3031, %v793
        %v3034 = vrsqrt.pop %v3032
        %v3035 = vmul.f32 %v3032, %v3034
        %vm3036 = vcmp.eq.f32.partialorder %v3032, inf
        %v3037 = vsel %vm3036, %v3032, %v3035
        %vm3038 = vcmp.eq.f32.partialorder %v3032, 0.0
        %v3039 = vand.u32 %v3032, 2147483648
        %v3040 = vsel %vm3038, %v3039, %v3037
        %v3041 = vrsqrt.pop %v3033
        %v3042 = vmul.f32 %v3033, %v3041
        %vm3043 = vcmp.eq.f32.partialorder %v3033, inf
        %v3044 = vsel %vm3043, %v3033, %v3042
        %vm3045 = vcmp.eq.f32.partialorder %v3033, 0.0
        %v3046 = vand.u32 %v3033, 2147483648
        %v3047 = vsel %vm3045, %v3046, %v3044
        %v3048 = vadd.f32 %v3040, 1e-06
        %v3049 = vadd.f32 %v3047, 1e-06
        %v3050 = vrcp.pop %v3048
        %v3051 = vrcp.pop %v3049
        %v3052 = vstv %s3012
        %v3053 = vmul.f32 %v3052, %v3022
        %v3054 = vmul.f32 %v3052, %v3023
        %v3055 = vmul.f32 %v3053, %v3050
        %v3056 = vmul.f32 %v3054, %v3051
        %v3057 = vstv %s3013
        %v3058 = vadd.f32 %v3055, %v3057
        %v3059 = vadd.f32 %v3056, %v3057
        %v3060 = vpack.c.bf16 %v3059, %v3058
        %v3061 = vld [vmem:[%s719] sm:$0xf]
        %v3062 = vld [vmem:[%s719 + $0x4] sm:$0xf]
        %v3063 = vld [vmem:[%s719 + $0x8] sm:$0xf]
        %v3064 = vld [vmem:[%s719 + $0xc] sm:$0xf]
        %v3069 = vunpack.c.l.b16 %v3061
        %v3070 = vunpack.c.l.b16 %v3062
        %v3071 = vunpack.c.l.b16 %v3063
        %v3072 = vunpack.c.l.b16 %v3064
        %v3073 = vpack.c.b16 %v3070, %v3069
        %v3074 = vpack.c.b16 %v3072, %v3071
        %v3078 = vsel %vm773, %v3060, 0
        %3080 = vmatprep.subr.bf16.mxu0 0
        %3081 = vmatpush1.bf16.msra.mxu0 %v3073
        %3082 = vmatprep.subr.bf16.mxu0 0
        %3083 = vmatpush1.bf16.msra.mxu0 %v3074
        %3084 = vmatprep.subr.bf16.mxu0 0
        %3085 = vmatpush1.bf16.msra.mxu0 0
        %3086 = vmatprep.subr.bf16.mxu0 0
        %3087 = vmatpush1.bf16.msra.mxu0 0
        %3088 = vmatprep.subr.bf16.mxu0 0
        %3089 = vmatpush1.bf16.msra.mxu0 0
        %3090 = vmatprep.subr.bf16.mxu0 0
        %3091 = vmatpush1.bf16.msra.mxu0 0
        %3092 = vmatprep.subr.bf16.mxu0 0
        %3093 = vmatpush1.bf16.msra.mxu0 0
        %3094 = vmatprep.subr.bf16.mxu0 0
        %3095 = vmatpush1.bf16.msra.mxu0 0
        %3096 = vmatprep.subr.bf16.mxu0 0
        %3097 = vmatpush1.bf16.msra.mxu0 0
        %3098 = vmatprep.subr.bf16.mxu0 0
        %3099 = vmatpush1.bf16.msra.mxu0 0
        %3100 = vmatprep.subr.bf16.mxu0 0
        %3101 = vmatpush1.bf16.msra.mxu0 0
        %3102 = vmatprep.subr.bf16.mxu0 0
        %3103 = vmatpush1.bf16.msra.mxu0 0
        %3104 = vmatprep.subr.bf16.mxu0 0
        %3105 = vmatpush1.bf16.msra.mxu0 0
        %3106 = vmatprep.subr.bf16.mxu0 0
        %3107 = vmatpush1.bf16.msra.mxu0 0
        %3108 = vmatprep.subr.bf16.mxu0 0
        %3109 = vmatpush1.bf16.msra.mxu0 0
        %3110 = vmatprep.subr.bf16.mxu0 0
        %3111 = vmatpush1.bf16.msra.mxu0 0
        %3112 = vmatprep.mubr.bf16.mxu0 0
        %3113 = vmatmul.mubr.bf16.gmra.mrb[0].mxu0 %v3078
        %v3114 = vpop.f32.mrb[0].mxu0
        %v3115 = vadd.f32 0.0, %v3114
        %v3116 = vpop.f32.mrb[0].mxu0
        %v3117 = vpop.f32.mrb[0].mxu0
        %v3118 = vadd.f32 0.0, %v3117
        %v3119 = vpop.f32.mrb[0].mxu0
        %3120 = vdwg.mxu0
        %v3121 = vmul.f32 %v3115, 0.35355338
        %v3122 = vmul.f32 %v3118, 0.35355338
        %v3123 = vld [vmem:[#allocation3] sm:$0xff]
        %v3124 = vld [vmem:[%s724] sm:$0xf]
        %v3125 = vld [vmem:[%s724 + $0x4] sm:$0xf]
        %v3126 = vld [vmem:[%s724 + $0x8] sm:$0xf]
        %v3127 = vld [vmem:[%s724 + $0xc] sm:$0xf]
        %v3132 = vunpack.c.l.b16 %v3124
        %v3133 = vunpack.c.l.b16 %v3125
        %v3134 = vunpack.c.l.b16 %v3126
        %v3135 = vunpack.c.l.b16 %v3127
        %v3136 = vpack.c.b16 %v3133, %v3132
        %v3137 = vpack.c.b16 %v3135, %v3134
        %v3141 = vsel %vm773, %v3123, 0
        %3143 = vmatprep.subr.bf16.mxu0 0
        %3144 = vmatpush1.bf16.msra.mxu0 %v3136
        %3145 = vmatprep.subr.bf16.mxu0 0
        %3146 = vmatpush1.bf16.msra.mxu0 %v3137
        %3147 = vmatprep.subr.bf16.mxu0 0
        %3148 = vmatpush1.bf16.msra.mxu0 0
        %3149 = vmatprep.subr.bf16.mxu0 0
        %3150 = vmatpush1.bf16.msra.mxu0 0
        %3151 = vmatprep.subr.bf16.mxu0 0
        %3152 = vmatpush1.bf16.msra.mxu0 0
        %3153 = vmatprep.subr.bf16.mxu0 0
        %3154 = vmatpush1.bf16.msra.mxu0 0
        %3155 = vmatprep.subr.bf16.mxu0 0
        %3156 = vmatpush1.bf16.msra.mxu0 0
        %3157 = vmatprep.subr.bf16.mxu0 0
        %3158 = vmatpush1.bf16.msra.mxu0 0
        %3159 = vmatprep.subr.bf16.mxu0 0
        %3160 = vmatpush1.bf16.msra.mxu0 0
        %3161 = vmatprep.subr.bf16.mxu0 0
        %3162 = vmatpush1.bf16.msra.mxu0 0
        %3163 = vmatprep.subr.bf16.mxu0 0
        %3164 = vmatpush1.bf16.msra.mxu0 0
        %3165 = vmatprep.subr.bf16.mxu0 0
        %3166 = vmatpush1.bf16.msra.mxu0 0
        %3167 = vmatprep.subr.bf16.mxu0 0
        %3168 = vmatpush1.bf16.msra.mxu0 0
        %3169 = vmatprep.subr.bf16.mxu0 0
        %3170 = vmatpush1.bf16.msra.mxu0 0
        %3171 = vmatprep.subr.bf16.mxu0 0
        %3172 = vmatpush1.bf16.msra.mxu0 0
        %3173 = vmatprep.subr.bf16.mxu0 0
        %3174 = vmatpush1.bf16.msra.mxu0 0
        %3175 = vmatprep.mubr.bf16.mxu0 0
        %3176 = vmatmul.mubr.bf16.gmra.mrb[0].mxu0 %v3141
        %v3177 = vpop.f32.mrb[0].mxu0
        %v3178 = vadd.f32 0.0, %v3177
        %v3179 = vpop.f32.mrb[0].mxu0
        %v3180 = vpop.f32.mrb[0].mxu0
        %v3181 = vadd.f32 0.0, %v3180
        %v3182 = vpop.f32.mrb[0].mxu0
        %3183 = vdwg.mxu0
        %v3184 = vld [vmem:[#allocation5] sm:$0x1]
        %3186 = vrot.lane.b32.xlu0 %v3121, 120
        %v3187 = vpop.permute.xlu0 %3186
        %3189 = vrot.lane.b32.xlu0 %v3121, 112
        %v3190 = vpop.permute.xlu0 %3189
        %3192 = vrot.lane.b32.xlu0 %v3121, 104
        %v3193 = vpop.permute.xlu0 %3192
        %v3195 = vcombine.low %v3121, %v3190
        %v3196 = vcombine.high %v3121, %v3190
        %v3198 = vunpack.c.l.s4 1983009808
        %v3199 = vunpack.c.0.s8 %v3198
        %v3200 = vlaneseq
        %v3201 = vshrl.u32 %v3200, 7
        %v3202 = vsub.s32 %v3199, %v3201
        %v3203 = vrot.slane %v3195, %v3202
        %v3205 = vunpack.c.l.s4 1983009808
        %v3206 = vunpack.c.0.s8 %v3205
        %v3207 = vlaneseq
        %v3208 = vshrl.u32 %v3207, 7
        %v3209 = vsub.s32 %v3206, %v3208
        %v3210 = vrot.slane %v3196, %v3209
        %v3211 = vcombine.low %v3187, %v3193
        %v3212 = vcombine.high %v3187, %v3193
        %v3214 = vunpack.c.l.s4 1983009808
        %v3215 = vunpack.c.0.s8 %v3214
        %v3216 = vlaneseq
        %v3217 = vshrl.u32 %v3216, 7
        %v3218 = vsub.s32 %v3215, %v3217
        %v3219 = vrot.slane %v3211, %v3218
        %v3221 = vunpack.c.l.s4 1983009808
        %v3222 = vunpack.c.0.s8 %v3221
        %v3223 = vlaneseq
        %v3224 = vshrl.u32 %v3223, 7
        %v3225 = vsub.s32 %v3222, %v3224
        %v3226 = vrot.slane %v3212, %v3225
        %v3227 = vcombine.low %v3203, %v3219
        %v3228 = vcombine.high %v3203, %v3219
        %v3230 = vunpack.c.l.s4 1934713408
        %v3231 = vunpack.c.0.s8 %v3230
        %v3232 = vlaneseq
        %v3233 = vshrl.u32 %v3232, 7
        %v3234 = vsub.s32 %v3231, %v3233
        %v3235 = vrot.slane %v3227, %v3234
        %v3237 = vunpack.c.l.s4 1934713408
        %v3238 = vunpack.c.0.s8 %v3237
        %v3239 = vlaneseq
        %v3240 = vshrl.u32 %v3239, 7
        %v3241 = vsub.s32 %v3238, %v3240
        %v3242 = vrot.slane %v3228, %v3241
        %v3243 = vcombine.low %v3210, %v3226
        %v3244 = vcombine.high %v3210, %v3226
        %v3246 = vunpack.c.l.s4 1934713408
        %v3247 = vunpack.c.0.s8 %v3246
        %v3248 = vlaneseq
        %v3249 = vshrl.u32 %v3248, 7
        %v3250 = vsub.s32 %v3247, %v3249
        %v3251 = vrot.slane %v3243, %v3250
        %v3253 = vunpack.c.l.s4 1934713408
        %v3254 = vunpack.c.0.s8 %v3253
        %v3255 = vlaneseq
        %v3256 = vshrl.u32 %v3255, 7
        %v3257 = vsub.s32 %v3254, %v3256
        %v3258 = vrot.slane %v3244, %v3257
        %v3259 = vcombine.high %v3235, 0.0
        %v3260 = vcombine.high %v3242, 0.0
        %v3261 = vcombine.high %v3251, 0.0
        %v3262 = vcombine.high %v3258, 0.0
        %v3263 = vcombine.low %v3235, %v3242
        %v3265 = vunpack.c.l.s4 1983009808
        %v3266 = vunpack.c.0.s8 %v3265
        %v3267 = vlaneseq
        %v3268 = vshrl.u32 %v3267, 7
        %v3269 = vsub.s32 %v3266, %v3268
        %v3270 = vrot.slane %v3263, %v3269
        %v3271 = vcombine.low %v3259, %v3260
        %v3273 = vunpack.c.l.s4 1983009808
        %v3274 = vunpack.c.0.s8 %v3273
        %v3275 = vlaneseq
        %v3276 = vshrl.u32 %v3275, 7
        %v3277 = vsub.s32 %v3274, %v3276
        %v3278 = vrot.slane %v3271, %v3277
        %v3279 = vcombine.low %v3251, %v3258
        %v3281 = vunpack.c.l.s4 1983009808
        %v3282 = vunpack.c.0.s8 %v3281
        %v3283 = vlaneseq
        %v3284 = vshrl.u32 %v3283, 7
        %v3285 = vsub.s32 %v3282, %v3284
        %v3286 = vrot.slane %v3279, %v3285
        %v3287 = vcombine.low %v3261, %v3262
        %v3289 = vunpack.c.l.s4 1983009808
        %v3290 = vunpack.c.0.s8 %v3289
        %v3291 = vlaneseq
        %v3292 = vshrl.u32 %v3291, 7
        %v3293 = vsub.s32 %v3290, %v3292
        %v3294 = vrot.slane %v3287, %v3293
        %v3295 = vcombine.low %v3270, %v3278
        %v3296 = vcombine.high %v3270, %v3278
        %v3298 = vunpack.c.l.s4 1934713408
        %v3299 = vunpack.c.0.s8 %v3298
        %v3300 = vlaneseq
        %v3301 = vshrl.u32 %v3300, 7
        %v3302 = vsub.s32 %v3299, %v3301
        %v3303 = vrot.slane %v3295, %v3302
        %v3305 = vunpack.c.l.s4 1934713408
        %v3306 = vunpack.c.0.s8 %v3305
        %v3307 = vlaneseq
        %v3308 = vshrl.u32 %v3307, 7
        %v3309 = vsub.s32 %v3306, %v3308
        %v3310 = vrot.slane %v3296, %v3309
        %v3311 = vcombine.low %v3286, %v3294
        %v3312 = vcombine.high %v3286, %v3294
        %v3314 = vunpack.c.l.s4 1934713408
        %v3315 = vunpack.c.0.s8 %v3314
        %v3316 = vlaneseq
        %v3317 = vshrl.u32 %v3316, 7
        %v3318 = vsub.s32 %v3315, %v3317
        %v3319 = vrot.slane %v3311, %v3318
        %v3321 = vunpack.c.l.s4 1934713408
        %v3322 = vunpack.c.0.s8 %v3321
        %v3323 = vlaneseq
        %v3324 = vshrl.u32 %v3323, 7
        %v3325 = vsub.s32 %v3322, %v3324
        %v3326 = vrot.slane %v3312, %v3325
        %v3327 = vcombine.low %v3303, %v3319
        %v3328 = vcombine.high %v3303, %v3319
        %v3329 = vcombine.low %v3310, %v3326
        %v3330 = vcombine.high %v3310, %v3326
        %v3331 = vpack.c.bf16 %v3327, %v3327
        %v3332 = vpack.c.bf16 %v3328, %v3328
        %v3333 = vpack.c.bf16 %v3329, %v3329
        %v3334 = vpack.c.bf16 %v3330, %v3330
        %3336 = vrot.lane.b32.xlu0 %v3178, 120
        %v3337 = vpop.permute.xlu0 %3336
        %3339 = vrot.lane.b32.xlu0 %v3178, 112
        %v3340 = vpop.permute.xlu0 %3339
        %3342 = vrot.lane.b32.xlu0 %v3178, 104
        %v3343 = vpop.permute.xlu0 %3342
        %v3345 = vcombine.low %v3178, %v3340
        %v3346 = vcombine.high %v3178, %v3340
        %v3348 = vunpack.c.l.s4 1983009808
        %v3349 = vunpack.c.0.s8 %v3348
        %v3350 = vlaneseq
        %v3351 = vshrl.u32 %v3350, 7
        %v3352 = vsub.s32 %v3349, %v3351
        %v3353 = vrot.slane %v3345, %v3352
        %v3355 = vunpack.c.l.s4 1983009808
        %v3356 = vunpack.c.0.s8 %v3355
        %v3357 = vlaneseq
        %v3358 = vshrl.u32 %v3357, 7
        %v3359 = vsub.s32 %v3356, %v3358
        %v3360 = vrot.slane %v3346, %v3359
        %v3361 = vcombine.low %v3337, %v3343
        %v3362 = vcombine.high %v3337, %v3343
        %v3364 = vunpack.c.l.s4 1983009808
        %v3365 = vunpack.c.0.s8 %v3364
        %v3366 = vlaneseq
        %v3367 = vshrl.u32 %v3366, 7
        %v3368 = vsub.s32 %v3365, %v3367
        %v3369 = vrot.slane %v3361, %v3368
        %v3371 = vunpack.c.l.s4 1983009808
        %v3372 = vunpack.c.0.s8 %v3371
        %v3373 = vlaneseq
        %v3374 = vshrl.u32 %v3373, 7
        %v3375 = vsub.s32 %v3372, %v3374
        %v3376 = vrot.slane %v3362, %v3375
        %v3377 = vcombine.low %v3353, %v3369
        %v3378 = vcombine.high %v3353, %v3369
        %v3380 = vunpack.c.l.s4 1934713408
        %v3381 = vunpack.c.0.s8 %v3380
        %v3382 = vlaneseq
        %v3383 = vshrl.u32 %v3382, 7
        %v3384 = vsub.s32 %v3381, %v3383
        %v3385 = vrot.slane %v3377, %v3384
        %v3387 = vunpack.c.l.s4 1934713408
        %v3388 = vunpack.c.0.s8 %v3387
        %v3389 = vlaneseq
        %v3390 = vshrl.u32 %v3389, 7
        %v3391 = vsub.s32 %v3388, %v3390
        %v3392 = vrot.slane %v3378, %v3391
        %v3393 = vcombine.low %v3360, %v3376
        %v3394 = vcombine.high %v3360, %v3376
        %v3396 = vunpack.c.l.s4 1934713408
        %v3397 = vunpack.c.0.s8 %v3396
        %v3398 = vlaneseq
        %v3399 = vshrl.u32 %v3398, 7
        %v3400 = vsub.s32 %v3397, %v3399
        %v3401 = vrot.slane %v3393, %v3400
        %v3403 = vunpack.c.l.s4 1934713408
        %v3404 = vunpack.c.0.s8 %v3403
        %v3405 = vlaneseq
        %v3406 = vshrl.u32 %v3405, 7
        %v3407 = vsub.s32 %v3404, %v3406
        %v3408 = vrot.slane %v3394, %v3407
        %v3409 = vcombine.high %v3385, 0.0
        %v3410 = vcombine.high %v3392, 0.0
        %v3411 = vcombine.high %v3401, 0.0
        %v3412 = vcombine.high %v3408, 0.0
        %v3413 = vcombine.low %v3385, %v3392
        %v3415 = vunpack.c.l.s4 1983009808
        %v3416 = vunpack.c.0.s8 %v3415
        %v3417 = vlaneseq
        %v3418 = vshrl.u32 %v3417, 7
        %v3419 = vsub.s32 %v3416, %v3418
        %v3420 = vrot.slane %v3413, %v3419
        %v3421 = vcombine.low %v3409, %v3410
        %v3423 = vunpack.c.l.s4 1983009808
        %v3424 = vunpack.c.0.s8 %v3423
        %v3425 = vlaneseq
        %v3426 = vshrl.u32 %v3425, 7
        %v3427 = vsub.s32 %v3424, %v3426
        %v3428 = vrot.slane %v3421, %v3427
        %v3429 = vcombine.low %v3401, %v3408
        %v3431 = vunpack.c.l.s4 1983009808
        %v3432 = vunpack.c.0.s8 %v3431
        %v3433 = vlaneseq
        %v3434 = vshrl.u32 %v3433, 7
        %v3435 = vsub.s32 %v3432, %v3434
        %v3436 = vrot.slane %v3429, %v3435
        %v3437 = vcombine.low %v3411, %v3412
        %v3439 = vunpack.c.l.s4 1983009808
        %v3440 = vunpack.c.0.s8 %v3439
        %v3441 = vlaneseq
        %v3442 = vshrl.u32 %v3441, 7
        %v3443 = vsub.s32 %v3440, %v3442
        %v3444 = vrot.slane %v3437, %v3443
        %v3445 = vcombine.low %v3420, %v3428
        %v3446 = vcombine.high %v3420, %v3428
        %v3448 = vunpack.c.l.s4 1934713408
        %v3449 = vunpack.c.0.s8 %v3448
        %v3450 = vlaneseq
        %v3451 = vshrl.u32 %v3450, 7
        %v3452 = vsub.s32 %v3449, %v3451
        %v3453 = vrot.slane %v3445, %v3452
        %v3455 = vunpack.c.l.s4 1934713408
        %v3456 = vunpack.c.0.s8 %v3455
        %v3457 = vlaneseq
        %v3458 = vshrl.u32 %v3457, 7
        %v3459 = vsub.s32 %v3456, %v3458
        %v3460 = vrot.slane %v3446, %v3459
        %v3461 = vcombine.low %v3436, %v3444
        %v3462 = vcombine.high %v3436, %v3444
        %v3464 = vunpack.c.l.s4 1934713408
        %v3465 = vunpack.c.0.s8 %v3464
        %v3466 = vlaneseq
        %v3467 = vshrl.u32 %v3466, 7
        %v3468 = vsub.s32 %v3465, %v3467
        %v3469 = vrot.slane %v3461, %v3468
        %v3471 = vunpack.c.l.s4 1934713408
        %v3472 = vunpack.c.0.s8 %v3471
        %v3473 = vlaneseq
        %v3474 = vshrl.u32 %v3473, 7
        %v3475 = vsub.s32 %v3472, %v3474
        %v3476 = vrot.slane %v3462, %v3475
        %v3477 = vcombine.low %v3453, %v3469
        %v3478 = vcombine.high %v3453, %v3469
        %v3479 = vcombine.low %v3460, %v3476
        %v3480 = vcombine.high %v3460, %v3476
        %v3481 = vpack.c.bf16 %v3477, %v3477
        %v3482 = vpack.c.bf16 %v3478, %v3478
        %v3483 = vpack.c.bf16 %v3479, %v3479
        %v3484 = vpack.c.bf16 %v3480, %v3480
        %3485 = vrot.lane.b32.xlu0 %v3178, 96
        %v3486 = vpop.permute.xlu0 %3485
        %3487 = vrot.lane.b32.xlu0 %v3337, 96
        %v3488 = vpop.permute.xlu0 %3487
        %3489 = vrot.lane.b32.xlu0 %v3340, 96
        %v3490 = vpop.permute.xlu0 %3489
        %3491 = vrot.lane.b32.xlu0 %v3343, 96
        %v3492 = vpop.permute.xlu0 %3491
        %v3497 = vcombine.low %v3486, %v3490
        %v3498 = vcombine.high %v3486, %v3490
        %v3500 = vunpack.c.l.s4 1983009808
        %v3501 = vunpack.c.0.s8 %v3500
        %v3502 = vlaneseq
        %v3503 = vshrl.u32 %v3502, 7
        %v3504 = vsub.s32 %v3501, %v3503
        %v3505 = vrot.slane %v3497, %v3504
        %v3507 = vunpack.c.l.s4 1983009808
        %v3508 = vunpack.c.0.s8 %v3507
        %v3509 = vlaneseq
        %v3510 = vshrl.u32 %v3509, 7
        %v3511 = vsub.s32 %v3508, %v3510
        %v3512 = vrot.slane %v3498, %v3511
        %v3513 = vcombine.low %v3488, %v3492
        %v3514 = vcombine.high %v3488, %v3492
        %v3516 = vunpack.c.l.s4 1983009808
        %v3517 = vunpack.c.0.s8 %v3516
        %v3518 = vlaneseq
        %v3519 = vshrl.u32 %v3518, 7
        %v3520 = vsub.s32 %v3517, %v3519
        %v3521 = vrot.slane %v3513, %v3520
        %v3523 = vunpack.c.l.s4 1983009808
        %v3524 = vunpack.c.0.s8 %v3523
        %v3525 = vlaneseq
        %v3526 = vshrl.u32 %v3525, 7
        %v3527 = vsub.s32 %v3524, %v3526
        %v3528 = vrot.slane %v3514, %v3527
        %v3529 = vcombine.low %v3505, %v3521
        %v3530 = vcombine.high %v3505, %v3521
        %v3532 = vunpack.c.l.s4 1934713408
        %v3533 = vunpack.c.0.s8 %v3532
        %v3534 = vlaneseq
        %v3535 = vshrl.u32 %v3534, 7
        %v3536 = vsub.s32 %v3533, %v3535
        %v3537 = vrot.slane %v3529, %v3536
        %v3539 = vunpack.c.l.s4 1934713408
        %v3540 = vunpack.c.0.s8 %v3539
        %v3541 = vlaneseq
        %v3542 = vshrl.u32 %v3541, 7
        %v3543 = vsub.s32 %v3540, %v3542
        %v3544 = vrot.slane %v3530, %v3543
        %v3545 = vcombine.low %v3512, %v3528
        %v3546 = vcombine.high %v3512, %v3528
        %v3548 = vunpack.c.l.s4 1934713408
        %v3549 = vunpack.c.0.s8 %v3548
        %v3550 = vlaneseq
        %v3551 = vshrl.u32 %v3550, 7
        %v3552 = vsub.s32 %v3549, %v3551
        %v3553 = vrot.slane %v3545, %v3552
        %v3555 = vunpack.c.l.s4 1934713408
        %v3556 = vunpack.c.0.s8 %v3555
        %v3557 = vlaneseq
        %v3558 = vshrl.u32 %v3557, 7
        %v3559 = vsub.s32 %v3556, %v3558
        %v3560 = vrot.slane %v3546, %v3559
        %v3561 = vcombine.high %v3537, 0.0
        %v3562 = vcombine.high %v3544, 0.0
        %v3563 = vcombine.high %v3553, 0.0
        %v3564 = vcombine.high %v3560, 0.0
        %v3565 = vcombine.low %v3537, %v3544
        %v3567 = vunpack.c.l.s4 1983009808
        %v3568 = vunpack.c.0.s8 %v3567
        %v3569 = vlaneseq
        %v3570 = vshrl.u32 %v3569, 7
        %v3571 = vsub.s32 %v3568, %v3570
        %v3572 = vrot.slane %v3565, %v3571
        %v3573 = vcombine.low %v3561, %v3562
        %v3575 = vunpack.c.l.s4 1983009808
        %v3576 = vunpack.c.0.s8 %v3575
        %v3577 = vlaneseq
        %v3578 = vshrl.u32 %v3577, 7
        %v3579 = vsub.s32 %v3576, %v3578
        %v3580 = vrot.slane %v3573, %v3579
        %v3581 = vcombine.low %v3553, %v3560
        %v3583 = vunpack.c.l.s4 1983009808
        %v3584 = vunpack.c.0.s8 %v3583
        %v3585 = vlaneseq
        %v3586 = vshrl.u32 %v3585, 7
        %v3587 = vsub.s32 %v3584, %v3586
        %v3588 = vrot.slane %v3581, %v3587
        %v3589 = vcombine.low %v3563, %v3564
        %v3591 = vunpack.c.l.s4 1983009808
        %v3592 = vunpack.c.0.s8 %v3591
        %v3593 = vlaneseq
        %v3594 = vshrl.u32 %v3593, 7
        %v3595 = vsub.s32 %v3592, %v3594
        %v3596 = vrot.slane %v3589, %v3595
        %v3597 = vcombine.low %v3572, %v3580
        %v3598 = vcombine.high %v3572, %v3580
        %v3600 = vunpack.c.l.s4 1934713408
        %v3601 = vunpack.c.0.s8 %v3600
        %v3602 = vlaneseq
        %v3603 = vshrl.u32 %v3602, 7
        %v3604 = vsub.s32 %v3601, %v3603
        %v3605 = vrot.slane %v3597, %v3604
        %v3607 = vunpack.c.l.s4 1934713408
        %v3608 = vunpack.c.0.s8 %v3607
        %v3609 = vlaneseq
        %v3610 = vshrl.u32 %v3609, 7
        %v3611 = vsub.s32 %v3608, %v3610
        %v3612 = vrot.slane %v3598, %v3611
        %v3613 = vcombine.low %v3588, %v3596
        %v3614 = vcombine.high %v3588, %v3596
        %v3616 = vunpack.c.l.s4 1934713408
        %v3617 = vunpack.c.0.s8 %v3616
        %v3618 = vlaneseq
        %v3619 = vshrl.u32 %v3618, 7
        %v3620 = vsub.s32 %v3617, %v3619
        %v3621 = vrot.slane %v3613, %v3620
        %v3623 = vunpack.c.l.s4 1934713408
        %v3624 = vunpack.c.0.s8 %v3623
        %v3625 = vlaneseq
        %v3626 = vshrl.u32 %v3625, 7
        %v3627 = vsub.s32 %v3624, %v3626
        %v3628 = vrot.slane %v3614, %v3627
        %v3629 = vcombine.low %v3605, %v3621
        %v3630 = vcombine.high %v3605, %v3621
        %v3631 = vcombine.low %v3612, %v3628
        %v3632 = vcombine.high %v3612, %v3628
        %v3633 = vpack.c.bf16 %v3629, %v3629
        %v3634 = vpack.c.bf16 %v3630, %v3630
        %v3635 = vpack.c.bf16 %v3631, %v3631
        %v3636 = vpack.c.bf16 %v3632, %v3632
        %v3638 = vlaneseq
        %v3639 = vshrl.u32 %v3638, 7
        %v3640 = vsub.s32 0, %v3639
        %v3641 = vrot.slane %v3184, %v3640
        %v3644 = vsel %vm1347, %v3331, 0
        %v3647 = vsel %vm1347, %v3481, 0
        %3649 = vmatprep.subr.bf16.mxu0 0
        %3650 = vmatpush1.bf16.xpose.msra.mxu0 %v3647
        %3651 = vmatprep.subr.bf16.mxu0 0
        %3652 = vmatpush1.bf16.xpose.msra.mxu0 0
        %3653 = vmatprep.subr.bf16.mxu0 0
        %3654 = vmatpush1.bf16.xpose.msra.mxu0 0
        %3655 = vmatprep.subr.bf16.mxu0 0
        %3656 = vmatpush1.bf16.xpose.msra.mxu0 0
        %3657 = vmatprep.subr.bf16.mxu0 0
        %3658 = vmatpush1.bf16.xpose.msra.mxu0 0
        %3659 = vmatprep.subr.bf16.mxu0 0
        %3660 = vmatpush1.bf16.xpose.msra.mxu0 0
        %3661 = vmatprep.subr.bf16.mxu0 0
        %3662 = vmatpush1.bf16.xpose.msra.mxu0 0
        %3663 = vmatprep.subr.bf16.mxu0 0
        %3664 = vmatpush1.bf16.xpose.msra.mxu0 0
        %3665 = vmatprep.subr.bf16.mxu0 0
        %3666 = vmatpush1.bf16.xpose.msra.mxu0 0
        %3667 = vmatprep.subr.bf16.mxu0 0
        %3668 = vmatpush1.bf16.xpose.msra.mxu0 0
        %3669 = vmatprep.subr.bf16.mxu0 0
        %3670 = vmatpush1.bf16.xpose.msra.mxu0 0
        %3671 = vmatprep.subr.bf16.mxu0 0
        %3672 = vmatpush1.bf16.xpose.msra.mxu0 0
        %3673 = vmatprep.subr.bf16.mxu0 0
        %3674 = vmatpush1.bf16.xpose.msra.mxu0 0
        %3675 = vmatprep.subr.bf16.mxu0 0
        %3676 = vmatpush1.bf16.xpose.msra.mxu0 0
        %3677 = vmatprep.subr.bf16.mxu0 0
        %3678 = vmatpush1.bf16.xpose.msra.mxu0 0
        %3679 = vmatprep.subr.bf16.mxu0 0
        %3680 = vmatpush1.bf16.xpose.msra.mxu0 0
        %3681 = vmatprep.mubr.bf16.mxu0 0
        %3682 = vmatmul.mubr.bf16.gmra.mrb[0].mxu0 %v3644
        %v3683 = vpop.f32.mrb[0].mxu0
        %v3684 = vadd.f32 %v3641, %v3683
        %v3685 = vpop.f32.mrb[0].mxu0
        %v3686 = vpop.f32.mrb[0].mxu0
        %v3687 = vpop.f32.mrb[0].mxu0
        %3688 = vdwg.mxu0
        %v3690 = vsel %vm1347, %v3332, 0
        %v3693 = vsel %vm1347, %v3482, 0
        %3695 = vmatprep.subr.bf16.mxu0 0
        %3696 = vmatpush1.bf16.xpose.msra.mxu0 %v3693
        %3697 = vmatprep.subr.bf16.mxu0 0
        %3698 = vmatpush1.bf16.xpose.msra.mxu0 0
        %3699 = vmatprep.subr.bf16.mxu0 0
        %3700 = vmatpush1.bf16.xpose.msra.mxu0 0
        %3701 = vmatprep.subr.bf16.mxu0 0
        %3702 = vmatpush1.bf16.xpose.msra.mxu0 0
        %3703 = vmatprep.subr.bf16.mxu0 0
        %3704 = vmatpush1.bf16.xpose.msra.mxu0 0
        %3705 = vmatprep.subr.bf16.mxu0 0
        %3706 = vmatpush1.bf16.xpose.msra.mxu0 0
        %3707 = vmatprep.subr.bf16.mxu0 0
        %3708 = vmatpush1.bf16.xpose.msra.mxu0 0
        %3709 = vmatprep.subr.bf16.mxu0 0
        %3710 = vmatpush1.bf16.xpose.msra.mxu0 0
        %3711 = vmatprep.subr.bf16.mxu0 0
        %3712 = vmatpush1.bf16.xpose.msra.mxu0 0
        %3713 = vmatprep.subr.bf16.mxu0 0
        %3714 = vmatpush1.bf16.xpose.msra.mxu0 0
        %3715 = vmatprep.subr.bf16.mxu0 0
        %3716 = vmatpush1.bf16.xpose.msra.mxu0 0
        %3717 = vmatprep.subr.bf16.mxu0 0
        %3718 = vmatpush1.bf16.xpose.msra.mxu0 0
        %3719 = vmatprep.subr.bf16.mxu0 0
        %3720 = vmatpush1.bf16.xpose.msra.mxu0 0
        %3721 = vmatprep.subr.bf16.mxu0 0
        %3722 = vmatpush1.bf16.xpose.msra.mxu0 0
        %3723 = vmatprep.subr.bf16.mxu0 0
        %3724 = vmatpush1.bf16.xpose.msra.mxu0 0
        %3725 = vmatprep.subr.bf16.mxu0 0
        %3726 = vmatpush1.bf16.xpose.msra.mxu0 0
        %3727 = vmatprep.mubr.bf16.mxu0 0
        %3728 = vmatmul.mubr.bf16.gmra.mrb[0].mxu0 %v3690
        %v3729 = vpop.f32.mrb[0].mxu0
        %v3730 = vadd.f32 %v3641, %v3729
        %v3731 = vpop.f32.mrb[0].mxu0
        %v3732 = vpop.f32.mrb[0].mxu0
        %v3733 = vpop.f32.mrb[0].mxu0
        %3734 = vdwg.mxu0
        %v3736 = vsel %vm1347, %v3333, 0
        %v3739 = vsel %vm1347, %v3483, 0
        %3741 = vmatprep.subr.bf16.mxu0 0
        %3742 = vmatpush1.bf16.xpose.msra.mxu0 %v3739
        %3743 = vmatprep.subr.bf16.mxu0 0
        %3744 = vmatpush1.bf16.xpose.msra.mxu0 0
        %3745 = vmatprep.subr.bf16.mxu0 0
        %3746 = vmatpush1.bf16.xpose.msra.mxu0 0
        %3747 = vmatprep.subr.bf16.mxu0 0
        %3748 = vmatpush1.bf16.xpose.msra.mxu0 0
        %3749 = vmatprep.subr.bf16.mxu0 0
        %3750 = vmatpush1.bf16.xpose.msra.mxu0 0
        %3751 = vmatprep.subr.bf16.mxu0 0
        %3752 = vmatpush1.bf16.xpose.msra.mxu0 0
        %3753 = vmatprep.subr.bf16.mxu0 0
        %3754 = vmatpush1.bf16.xpose.msra.mxu0 0
        %3755 = vmatprep.subr.bf16.mxu0 0
        %3756 = vmatpush1.bf16.xpose.msra.mxu0 0
        %3757 = vmatprep.subr.bf16.mxu0 0
        %3758 = vmatpush1.bf16.xpose.msra.mxu0 0
        %3759 = vmatprep.subr.bf16.mxu0 0
        %3760 = vmatpush1.bf16.xpose.msra.mxu0 0
        %3761 = vmatprep.subr.bf16.mxu0 0
        %3762 = vmatpush1.bf16.xpose.msra.mxu0 0
        %3763 = vmatprep.subr.bf16.mxu0 0
        %3764 = vmatpush1.bf16.xpose.msra.mxu0 0
        %3765 = vmatprep.subr.bf16.mxu0 0
        %3766 = vmatpush1.bf16.xpose.msra.mxu0 0
        %3767 = vmatprep.subr.bf16.mxu0 0
        %3768 = vmatpush1.bf16.xpose.msra.mxu0 0
        %3769 = vmatprep.subr.bf16.mxu0 0
        %3770 = vmatpush1.bf16.xpose.msra.mxu0 0
        %3771 = vmatprep.subr.bf16.mxu0 0
        %3772 = vmatpush1.bf16.xpose.msra.mxu0 0
        %3773 = vmatprep.mubr.bf16.mxu0 0
        %3774 = vmatmul.mubr.bf16.gmra.mrb[0].mxu0 %v3736
        %v3775 = vpop.f32.mrb[0].mxu0
        %v3776 = vadd.f32 %v3641, %v3775
        %v3777 = vpop.f32.mrb[0].mxu0
        %v3778 = vpop.f32.mrb[0].mxu0
        %v3779 = vpop.f32.mrb[0].mxu0
        %3780 = vdwg.mxu0
        %v3782 = vsel %vm1347, %v3334, 0
        %v3785 = vsel %vm1347, %v3484, 0
        %3787 = vmatprep.subr.bf16.mxu0 0
        %3788 = vmatpush1.bf16.xpose.msra.mxu0 %v3785
        %3789 = vmatprep.subr.bf16.mxu0 0
        %3790 = vmatpush1.bf16.xpose.msra.mxu0 0
        %3791 = vmatprep.subr.bf16.mxu0 0
        %3792 = vmatpush1.bf16.xpose.msra.mxu0 0
        %3793 = vmatprep.subr.bf16.mxu0 0
        %3794 = vmatpush1.bf16.xpose.msra.mxu0 0
        %3795 = vmatprep.subr.bf16.mxu0 0
        %3796 = vmatpush1.bf16.xpose.msra.mxu0 0
        %3797 = vmatprep.subr.bf16.mxu0 0
        %3798 = vmatpush1.bf16.xpose.msra.mxu0 0
        %3799 = vmatprep.subr.bf16.mxu0 0
        %3800 = vmatpush1.bf16.xpose.msra.mxu0 0
        %3801 = vmatprep.subr.bf16.mxu0 0
        %3802 = vmatpush1.bf16.xpose.msra.mxu0 0
        %3803 = vmatprep.subr.bf16.mxu0 0
        %3804 = vmatpush1.bf16.xpose.msra.mxu0 0
        %3805 = vmatprep.subr.bf16.mxu0 0
        %3806 = vmatpush1.bf16.xpose.msra.mxu0 0
        %3807 = vmatprep.subr.bf16.mxu0 0
        %3808 = vmatpush1.bf16.xpose.msra.mxu0 0
        %3809 = vmatprep.subr.bf16.mxu0 0
        %3810 = vmatpush1.bf16.xpose.msra.mxu0 0
        %3811 = vmatprep.subr.bf16.mxu0 0
        %3812 = vmatpush1.bf16.xpose.msra.mxu0 0
        %3813 = vmatprep.subr.bf16.mxu0 0
        %3814 = vmatpush1.bf16.xpose.msra.mxu0 0
        %3815 = vmatprep.subr.bf16.mxu0 0
        %3816 = vmatpush1.bf16.xpose.msra.mxu0 0
        %3817 = vmatprep.subr.bf16.mxu0 0
        %3818 = vmatpush1.bf16.xpose.msra.mxu0 0
        %3819 = vmatprep.mubr.bf16.mxu0 0
        %3820 = vmatmul.mubr.bf16.gmra.mrb[0].mxu0 %v3782
        %v3821 = vpop.f32.mrb[0].mxu0
        %v3822 = vadd.f32 %v3641, %v3821
        %v3823 = vpop.f32.mrb[0].mxu0
        %v3824 = vpop.f32.mrb[0].mxu0
        %v3825 = vpop.f32.mrb[0].mxu0
        %3826 = vdwg.mxu0
        %v3827 = vsel %vm1347, %v3684, -inf
        %3828 = vmax.xlane.f32.xlu0 %v3827
        %v3829 = vpop.xlane.xlu0 %3828
        %v3830 = vsel %vm1347, %v3730, -inf
        %3831 = vmax.xlane.f32.xlu0 %v3830
        %v3832 = vpop.xlane.xlu0 %3831
        %v3833 = vsel %vm1347, %v3776, -inf
        %3834 = vmax.xlane.f32.xlu0 %v3833
        %v3835 = vpop.xlane.xlu0 %3834
        %v3836 = vsel %vm1347, %v3822, -inf
        %3837 = vmax.xlane.f32.xlu0 %v3836
        %v3838 = vpop.xlane.xlu0 %3837
        %v3839 = vsub.f32 %v3684, %v3829
        %v3840 = vsub.f32 %v3730, %v3832
        %v3841 = vsub.f32 %v3776, %v3835
        %v3842 = vsub.f32 %v3822, %v3838
        %v3843 = vmul.f32 %v3839, 1.442695
        %v3844 = vpow.pop %v3843
        %v3845 = vmul.f32 %v3840, 1.442695
        %v3846 = vpow.pop %v3845
        %v3847 = vmul.f32 %v3841, 1.442695
        %v3848 = vpow.pop %v3847
        %v3849 = vmul.f32 %v3842, 1.442695
        %v3850 = vpow.pop %v3849
        %v3851 = vsel %vm1347, %v3844, 0.0
        %3852 = vadd.xlane.f32.xlu0 %v3851
        %v3853 = vpop.xlane.xlu0 %3852
        %v3854 = vsel %vm1347, %v3846, 0.0
        %3855 = vadd.xlane.f32.xlu0 %v3854
        %v3856 = vpop.xlane.xlu0 %3855
        %v3857 = vsel %vm1347, %v3848, 0.0
        %3858 = vadd.xlane.f32.xlu0 %v3857
        %v3859 = vpop.xlane.xlu0 %3858
        %v3860 = vsel %vm1347, %v3850, 0.0
        %3861 = vadd.xlane.f32.xlu0 %v3860
        %v3862 = vpop.xlane.xlu0 %3861
        %v3863 = vrcp.pop %v3853
        %v3864 = vrcp.pop %v3856
        %v3865 = vrcp.pop %v3859
        %v3866 = vrcp.pop %v3862
        %v3867 = vmul.f32 %v3844, %v3863
        %v3868 = vmul.f32 %v3846, %v3864
        %v3869 = vmul.f32 %v3848, %v3865
        %v3870 = vmul.f32 %v3850, %v3866
        %v3871 = vpack.c.bf16 %v3867, %v3867
        %v3872 = vpack.c.bf16 %v3868, %v3868
        %v3873 = vpack.c.bf16 %v3869, %v3869
        %v3874 = vpack.c.bf16 %v3870, %v3870
        %v3876 = vsel %vm1347, %v3871, 0
        %v3879 = vsel %vm1583, %v3633, 0
        %3881 = vmatprep.subr.bf16.mxu0 0
        %3882 = vmatpush1.bf16.msra.mxu0 %v3879
        %3883 = vmatprep.subr.bf16.mxu0 0
        %3884 = vmatpush1.bf16.msra.mxu0 0
        %3885 = vmatprep.subr.bf16.mxu0 0
        %3886 = vmatpush1.bf16.msra.mxu0 0
        %3887 = vmatprep.subr.bf16.mxu0 0
        %3888 = vmatpush1.bf16.msra.mxu0 0
        %3889 = vmatprep.subr.bf16.mxu0 0
        %3890 = vmatpush1.bf16.msra.mxu0 0
        %3891 = vmatprep.subr.bf16.mxu0 0
        %3892 = vmatpush1.bf16.msra.mxu0 0
        %3893 = vmatprep.subr.bf16.mxu0 0
        %3894 = vmatpush1.bf16.msra.mxu0 0
        %3895 = vmatprep.subr.bf16.mxu0 0
        %3896 = vmatpush1.bf16.msra.mxu0 0
        %3897 = vmatprep.subr.bf16.mxu0 0
        %3898 = vmatpush1.bf16.msra.mxu0 0
        %3899 = vmatprep.subr.bf16.mxu0 0
        %3900 = vmatpush1.bf16.msra.mxu0 0
        %3901 = vmatprep.subr.bf16.mxu0 0
        %3902 = vmatpush1.bf16.msra.mxu0 0
        %3903 = vmatprep.subr.bf16.mxu0 0
        %3904 = vmatpush1.bf16.msra.mxu0 0
        %3905 = vmatprep.subr.bf16.mxu0 0
        %3906 = vmatpush1.bf16.msra.mxu0 0
        %3907 = vmatprep.subr.bf16.mxu0 0
        %3908 = vmatpush1.bf16.msra.mxu0 0
        %3909 = vmatprep.subr.bf16.mxu0 0
        %3910 = vmatpush1.bf16.msra.mxu0 0
        %3911 = vmatprep.subr.bf16.mxu0 0
        %3912 = vmatpush1.bf16.msra.mxu0 0
        %3913 = vmatprep.mubr.bf16.mxu0 0
        %3914 = vmatmul.mubr.bf16.gmra.mrb[0].mxu0 %v3876
        %v3915 = vpop.f32.mrb[0].mxu0
        %v3916 = vadd.f32 0.0, %v3915
        %v3917 = vpop.f32.mrb[0].mxu0
        %v3918 = vpop.f32.mrb[0].mxu0
        %v3919 = vpop.f32.mrb[0].mxu0
        %3920 = vdwg.mxu0
        %v3922 = vsel %vm1347, %v3872, 0
        %v3925 = vsel %vm1583, %v3634, 0
        %3927 = vmatprep.subr.bf16.mxu0 0
        %3928 = vmatpush1.bf16.msra.mxu0 %v3925
        %3929 = vmatprep.subr.bf16.mxu0 0
        %3930 = vmatpush1.bf16.msra.mxu0 0
        %3931 = vmatprep.subr.bf16.mxu0 0
        %3932 = vmatpush1.bf16.msra.mxu0 0
        %3933 = vmatprep.subr.bf16.mxu0 0
        %3934 = vmatpush1.bf16.msra.mxu0 0
        %3935 = vmatprep.subr.bf16.mxu0 0
        %3936 = vmatpush1.bf16.msra.mxu0 0
        %3937 = vmatprep.subr.bf16.mxu0 0
        %3938 = vmatpush1.bf16.msra.mxu0 0
        %3939 = vmatprep.subr.bf16.mxu0 0
        %3940 = vmatpush1.bf16.msra.mxu0 0
        %3941 = vmatprep.subr.bf16.mxu0 0
        %3942 = vmatpush1.bf16.msra.mxu0 0
        %3943 = vmatprep.subr.bf16.mxu0 0
        %3944 = vmatpush1.bf16.msra.mxu0 0
        %3945 = vmatprep.subr.bf16.mxu0 0
        %3946 = vmatpush1.bf16.msra.mxu0 0
        %3947 = vmatprep.subr.bf16.mxu0 0
        %3948 = vmatpush1.bf16.msra.mxu0 0
        %3949 = vmatprep.subr.bf16.mxu0 0
        %3950 = vmatpush1.bf16.msra.mxu0 0
        %3951 = vmatprep.subr.bf16.mxu0 0
        %3952 = vmatpush1.bf16.msra.mxu0 0
        %3953 = vmatprep.subr.bf16.mxu0 0
        %3954 = vmatpush1.bf16.msra.mxu0 0
        %3955 = vmatprep.subr.bf16.mxu0 0
        %3956 = vmatpush1.bf16.msra.mxu0 0
        %3957 = vmatprep.subr.bf16.mxu0 0
        %3958 = vmatpush1.bf16.msra.mxu0 0
        %3959 = vmatprep.mubr.bf16.mxu0 0
        %3960 = vmatmul.mubr.bf16.gmra.mrb[0].mxu0 %v3922
        %v3961 = vpop.f32.mrb[0].mxu0
        %v3962 = vadd.f32 0.0, %v3961
        %v3963 = vpop.f32.mrb[0].mxu0
        %v3964 = vpop.f32.mrb[0].mxu0
        %v3965 = vpop.f32.mrb[0].mxu0
        %3966 = vdwg.mxu0
        %v3968 = vsel %vm1347, %v3873, 0
        %v3971 = vsel %vm1583, %v3635, 0
        %3973 = vmatprep.subr.bf16.mxu0 0
        %3974 = vmatpush1.bf16.msra.mxu0 %v3971
        %3975 = vmatprep.subr.bf16.mxu0 0
        %3976 = vmatpush1.bf16.msra.mxu0 0
        %3977 = vmatprep.subr.bf16.mxu0 0
        %3978 = vmatpush1.bf16.msra.mxu0 0
        %3979 = vmatprep.subr.bf16.mxu0 0
        %3980 = vmatpush1.bf16.msra.mxu0 0
        %3981 = vmatprep.subr.bf16.mxu0 0
        %3982 = vmatpush1.bf16.msra.mxu0 0
        %3983 = vmatprep.subr.bf16.mxu0 0
        %3984 = vmatpush1.bf16.msra.mxu0 0
        %3985 = vmatprep.subr.bf16.mxu0 0
        %3986 = vmatpush1.bf16.msra.mxu0 0
        %3987 = vmatprep.subr.bf16.mxu0 0
        %3988 = vmatpush1.bf16.msra.mxu0 0
        %3989 = vmatprep.subr.bf16.mxu0 0
        %3990 = vmatpush1.bf16.msra.mxu0 0
        %3991 = vmatprep.subr.bf16.mxu0 0
        %3992 = vmatpush1.bf16.msra.mxu0 0
        %3993 = vmatprep.subr.bf16.mxu0 0
        %3994 = vmatpush1.bf16.msra.mxu0 0
        %3995 = vmatprep.subr.bf16.mxu0 0
        %3996 = vmatpush1.bf16.msra.mxu0 0
        %3997 = vmatprep.subr.bf16.mxu0 0
        %3998 = vmatpush1.bf16.msra.mxu0 0
        %3999 = vmatprep.subr.bf16.mxu0 0
        %4000 = vmatpush1.bf16.msra.mxu0 0
        %4001 = vmatprep.subr.bf16.mxu0 0
        %4002 = vmatpush1.bf16.msra.mxu0 0
        %4003 = vmatprep.subr.bf16.mxu0 0
        %4004 = vmatpush1.bf16.msra.mxu0 0
        %4005 = vmatprep.mubr.bf16.mxu0 0
        %4006 = vmatmul.mubr.bf16.gmra.mrb[0].mxu0 %v3968
        %v4007 = vpop.f32.mrb[0].mxu0
        %v4008 = vadd.f32 0.0, %v4007
        %v4009 = vpop.f32.mrb[0].mxu0
        %v4010 = vpop.f32.mrb[0].mxu0
        %v4011 = vpop.f32.mrb[0].mxu0
        %4012 = vdwg.mxu0
        %v4014 = vsel %vm1347, %v3874, 0
        %v4017 = vsel %vm1583, %v3636, 0
        %4019 = vmatprep.subr.bf16.mxu0 0
        %4020 = vmatpush1.bf16.msra.mxu0 %v4017
        %4021 = vmatprep.subr.bf16.mxu0 0
        %4022 = vmatpush1.bf16.msra.mxu0 0
        %4023 = vmatprep.subr.bf16.mxu0 0
        %4024 = vmatpush1.bf16.msra.mxu0 0
        %4025 = vmatprep.subr.bf16.mxu0 0
        %4026 = vmatpush1.bf16.msra.mxu0 0
        %4027 = vmatprep.subr.bf16.mxu0 0
        %4028 = vmatpush1.bf16.msra.mxu0 0
        %4029 = vmatprep.subr.bf16.mxu0 0
        %4030 = vmatpush1.bf16.msra.mxu0 0
        %4031 = vmatprep.subr.bf16.mxu0 0
        %4032 = vmatpush1.bf16.msra.mxu0 0
        %4033 = vmatprep.subr.bf16.mxu0 0
        %4034 = vmatpush1.bf16.msra.mxu0 0
        %4035 = vmatprep.subr.bf16.mxu0 0
        %4036 = vmatpush1.bf16.msra.mxu0 0
        %4037 = vmatprep.subr.bf16.mxu0 0
        %4038 = vmatpush1.bf16.msra.mxu0 0
        %4039 = vmatprep.subr.bf16.mxu0 0
        %4040 = vmatpush1.bf16.msra.mxu0 0
        %4041 = vmatprep.subr.bf16.mxu0 0
        %4042 = vmatpush1.bf16.msra.mxu0 0
        %4043 = vmatprep.subr.bf16.mxu0 0
        %4044 = vmatpush1.bf16.msra.mxu0 0
        %4045 = vmatprep.subr.bf16.mxu0 0
        %4046 = vmatpush1.bf16.msra.mxu0 0
        %4047 = vmatprep.subr.bf16.mxu0 0
        %4048 = vmatpush1.bf16.msra.mxu0 0
        %4049 = vmatprep.subr.bf16.mxu0 0
        %4050 = vmatpush1.bf16.msra.mxu0 0
        %4051 = vmatprep.mubr.bf16.mxu0 0
        %4052 = vmatmul.mubr.bf16.gmra.mrb[0].mxu0 %v4014
        %v4053 = vpop.f32.mrb[0].mxu0
        %v4054 = vadd.f32 0.0, %v4053
        %v4055 = vpop.f32.mrb[0].mxu0
        %v4056 = vpop.f32.mrb[0].mxu0
        %v4057 = vpop.f32.mrb[0].mxu0
        %4058 = vdwg.mxu0
        %v4059 = vcombine.low %v3916, %v4008
        %v4060 = vcombine.high %v3916, %v4008
        %v4062 = vunpack.c.l.s4 1983009808
        %v4063 = vunpack.c.0.s8 %v4062
        %v4064 = vlaneseq
        %v4065 = vshrl.u32 %v4064, 7
        %v4066 = vsub.s32 %v4063, %v4065
        %v4067 = vrot.slane %v4059, %v4066
        %v4069 = vunpack.c.l.s4 1983009808
        %v4070 = vunpack.c.0.s8 %v4069
        %v4071 = vlaneseq
        %v4072 = vshrl.u32 %v4071, 7
        %v4073 = vsub.s32 %v4070, %v4072
        %v4074 = vrot.slane %v4060, %v4073
        %v4075 = vcombine.low %v3962, %v4054
        %v4076 = vcombine.high %v3962, %v4054
        %v4078 = vunpack.c.l.s4 1983009808
        %v4079 = vunpack.c.0.s8 %v4078
        %v4080 = vlaneseq
        %v4081 = vshrl.u32 %v4080, 7
        %v4082 = vsub.s32 %v4079, %v4081
        %v4083 = vrot.slane %v4075, %v4082
        %v4085 = vunpack.c.l.s4 1983009808
        %v4086 = vunpack.c.0.s8 %v4085
        %v4087 = vlaneseq
        %v4088 = vshrl.u32 %v4087, 7
        %v4089 = vsub.s32 %v4086, %v4088
        %v4090 = vrot.slane %v4076, %v4089
        %v4091 = vcombine.low %v4067, %v4083
        %v4092 = vcombine.high %v4067, %v4083
        %v4094 = vunpack.c.l.s4 1934713408
        %v4095 = vunpack.c.0.s8 %v4094
        %v4096 = vlaneseq
        %v4097 = vshrl.u32 %v4096, 7
        %v4098 = vsub.s32 %v4095, %v4097
        %v4099 = vrot.slane %v4091, %v4098
        %v4101 = vunpack.c.l.s4 1934713408
        %v4102 = vunpack.c.0.s8 %v4101
        %v4103 = vlaneseq
        %v4104 = vshrl.u32 %v4103, 7
        %v4105 = vsub.s32 %v4102, %v4104
        %v4106 = vrot.slane %v4092, %v4105
        %v4107 = vcombine.low %v4074, %v4090
        %v4108 = vcombine.high %v4074, %v4090
        %v4110 = vunpack.c.l.s4 1934713408
        %v4111 = vunpack.c.0.s8 %v4110
        %v4112 = vlaneseq
        %v4113 = vshrl.u32 %v4112, 7
        %v4114 = vsub.s32 %v4111, %v4113
        %v4115 = vrot.slane %v4107, %v4114
        %v4117 = vunpack.c.l.s4 1934713408
        %v4118 = vunpack.c.0.s8 %v4117
        %v4119 = vlaneseq
        %v4120 = vshrl.u32 %v4119, 7
        %v4121 = vsub.s32 %v4118, %v4120
        %v4122 = vrot.slane %v4108, %v4121
        %v4123 = vcombine.high %v4099, 0.0
        %v4124 = vcombine.high %v4106, 0.0
        %v4125 = vcombine.high %v4115, 0.0
        %v4126 = vcombine.high %v4122, 0.0
        %v4127 = vcombine.low %v4099, %v4106
        %v4129 = vunpack.c.l.s4 1983009808
        %v4130 = vunpack.c.0.s8 %v4129
        %v4131 = vlaneseq
        %v4132 = vshrl.u32 %v4131, 7
        %v4133 = vsub.s32 %v4130, %v4132
        %v4134 = vrot.slane %v4127, %v4133
        %v4135 = vcombine.low %v4123, %v4124
        %v4137 = vunpack.c.l.s4 1983009808
        %v4138 = vunpack.c.0.s8 %v4137
        %v4139 = vlaneseq
        %v4140 = vshrl.u32 %v4139, 7
        %v4141 = vsub.s32 %v4138, %v4140
        %v4142 = vrot.slane %v4135, %v4141
        %v4143 = vcombine.low %v4115, %v4122
        %v4145 = vunpack.c.l.s4 1983009808
        %v4146 = vunpack.c.0.s8 %v4145
        %v4147 = vlaneseq
        %v4148 = vshrl.u32 %v4147, 7
        %v4149 = vsub.s32 %v4146, %v4148
        %v4150 = vrot.slane %v4143, %v4149
        %v4151 = vcombine.low %v4125, %v4126
        %v4153 = vunpack.c.l.s4 1983009808
        %v4154 = vunpack.c.0.s8 %v4153
        %v4155 = vlaneseq
        %v4156 = vshrl.u32 %v4155, 7
        %v4157 = vsub.s32 %v4154, %v4156
        %v4158 = vrot.slane %v4151, %v4157
        %v4159 = vcombine.low %v4134, %v4142
        %v4160 = vcombine.high %v4134, %v4142
        %v4162 = vunpack.c.l.s4 1934713408
        %v4163 = vunpack.c.0.s8 %v4162
        %v4164 = vlaneseq
        %v4165 = vshrl.u32 %v4164, 7
        %v4166 = vsub.s32 %v4163, %v4165
        %v4167 = vrot.slane %v4159, %v4166
        %v4169 = vunpack.c.l.s4 1934713408
        %v4170 = vunpack.c.0.s8 %v4169
        %v4171 = vlaneseq
        %v4172 = vshrl.u32 %v4171, 7
        %v4173 = vsub.s32 %v4170, %v4172
        %v4174 = vrot.slane %v4160, %v4173
        %v4175 = vcombine.low %v4150, %v4158
        %v4176 = vcombine.high %v4150, %v4158
        %v4178 = vunpack.c.l.s4 1934713408
        %v4179 = vunpack.c.0.s8 %v4178
        %v4180 = vlaneseq
        %v4181 = vshrl.u32 %v4180, 7
        %v4182 = vsub.s32 %v4179, %v4181
        %v4183 = vrot.slane %v4175, %v4182
        %v4185 = vunpack.c.l.s4 1934713408
        %v4186 = vunpack.c.0.s8 %v4185
        %v4187 = vlaneseq
        %v4188 = vshrl.u32 %v4187, 7
        %v4189 = vsub.s32 %v4186, %v4188
        %v4190 = vrot.slane %v4176, %v4189
        %v4191 = vcombine.low %v4167, %v4183
        %v4192 = vcombine.high %v4167, %v4183
        %v4193 = vcombine.low %v4174, %v4190
        %v4194 = vcombine.high %v4174, %v4190
        %4196 = vrot.lane.b32.xlu0 %v4192, 8
        %v4197 = vpop.permute.xlu0 %4196
        %4200 = vrot.lane.b32.xlu0 %v4193, 16
        %v4201 = vpop.permute.xlu0 %4200
        %4204 = vrot.lane.b32.xlu0 %v4194, 24
        %v4205 = vpop.permute.xlu0 %4204
        %v4207 = vsel %vm1347, %v4191, %v4197
        %v4208 = vsel %vm1914, %v4207, %v4201
        %v4209 = vsel %vm1916, %v4208, %v4205
        %s4210 = scalar_lea.vmem [#allocation5], 1
        %v4211 = vld [vmem:[%s4210] sm:$0x1]
        %4213 = vrot.lane.b32.xlu0 %v3122, 120
        %v4214 = vpop.permute.xlu0 %4213
        %4216 = vrot.lane.b32.xlu0 %v3122, 112
        %v4217 = vpop.permute.xlu0 %4216
        %4219 = vrot.lane.b32.xlu0 %v3122, 104
        %v4220 = vpop.permute.xlu0 %4219
        %v4222 = vcombine.low %v3122, %v4217
        %v4223 = vcombine.high %v3122, %v4217
        %v4225 = vunpack.c.l.s4 1983009808
        %v4226 = vunpack.c.0.s8 %v4225
        %v4227 = vlaneseq
        %v4228 = vshrl.u32 %v4227, 7
        %v4229 = vsub.s32 %v4226, %v4228
        %v4230 = vrot.slane %v4222, %v4229
        %v4232 = vunpack.c.l.s4 1983009808
        %v4233 = vunpack.c.0.s8 %v4232
        %v4234 = vlaneseq
        %v4235 = vshrl.u32 %v4234, 7
        %v4236 = vsub.s32 %v4233, %v4235
        %v4237 = vrot.slane %v4223, %v4236
        %v4238 = vcombine.low %v4214, %v4220
        %v4239 = vcombine.high %v4214, %v4220
        %v4241 = vunpack.c.l.s4 1983009808
        %v4242 = vunpack.c.0.s8 %v4241
        %v4243 = vlaneseq
        %v4244 = vshrl.u32 %v4243, 7
        %v4245 = vsub.s32 %v4242, %v4244
        %v4246 = vrot.slane %v4238, %v4245
        %v4248 = vunpack.c.l.s4 1983009808
        %v4249 = vunpack.c.0.s8 %v4248
        %v4250 = vlaneseq
        %v4251 = vshrl.u32 %v4250, 7
        %v4252 = vsub.s32 %v4249, %v4251
        %v4253 = vrot.slane %v4239, %v4252
        %v4254 = vcombine.low %v4230, %v4246
        %v4255 = vcombine.high %v4230, %v4246
        %v4257 = vunpack.c.l.s4 1934713408
        %v4258 = vunpack.c.0.s8 %v4257
        %v4259 = vlaneseq
        %v4260 = vshrl.u32 %v4259, 7
        %v4261 = vsub.s32 %v4258, %v4260
        %v4262 = vrot.slane %v4254, %v4261
        %v4264 = vunpack.c.l.s4 1934713408
        %v4265 = vunpack.c.0.s8 %v4264
        %v4266 = vlaneseq
        %v4267 = vshrl.u32 %v4266, 7
        %v4268 = vsub.s32 %v4265, %v4267
        %v4269 = vrot.slane %v4255, %v4268
        %v4270 = vcombine.low %v4237, %v4253
        %v4271 = vcombine.high %v4237, %v4253
        %v4273 = vunpack.c.l.s4 1934713408
        %v4274 = vunpack.c.0.s8 %v4273
        %v4275 = vlaneseq
        %v4276 = vshrl.u32 %v4275, 7
        %v4277 = vsub.s32 %v4274, %v4276
        %v4278 = vrot.slane %v4270, %v4277
        %v4280 = vunpack.c.l.s4 1934713408
        %v4281 = vunpack.c.0.s8 %v4280
        %v4282 = vlaneseq
        %v4283 = vshrl.u32 %v4282, 7
        %v4284 = vsub.s32 %v4281, %v4283
        %v4285 = vrot.slane %v4271, %v4284
        %v4286 = vcombine.high %v4262, 0.0
        %v4287 = vcombine.high %v4269, 0.0
        %v4288 = vcombine.high %v4278, 0.0
        %v4289 = vcombine.high %v4285, 0.0
        %v4290 = vcombine.low %v4262, %v4269
        %v4292 = vunpack.c.l.s4 1983009808
        %v4293 = vunpack.c.0.s8 %v4292
        %v4294 = vlaneseq
        %v4295 = vshrl.u32 %v4294, 7
        %v4296 = vsub.s32 %v4293, %v4295
        %v4297 = vrot.slane %v4290, %v4296
        %v4298 = vcombine.low %v4286, %v4287
        %v4300 = vunpack.c.l.s4 1983009808
        %v4301 = vunpack.c.0.s8 %v4300
        %v4302 = vlaneseq
        %v4303 = vshrl.u32 %v4302, 7
        %v4304 = vsub.s32 %v4301, %v4303
        %v4305 = vrot.slane %v4298, %v4304
        %v4306 = vcombine.low %v4278, %v4285
        %v4308 = vunpack.c.l.s4 1983009808
        %v4309 = vunpack.c.0.s8 %v4308
        %v4310 = vlaneseq
        %v4311 = vshrl.u32 %v4310, 7
        %v4312 = vsub.s32 %v4309, %v4311
        %v4313 = vrot.slane %v4306, %v4312
        %v4314 = vcombine.low %v4288, %v4289
        %v4316 = vunpack.c.l.s4 1983009808
        %v4317 = vunpack.c.0.s8 %v4316
        %v4318 = vlaneseq
        %v4319 = vshrl.u32 %v4318, 7
        %v4320 = vsub.s32 %v4317, %v4319
        %v4321 = vrot.slane %v4314, %v4320
        %v4322 = vcombine.low %v4297, %v4305
        %v4323 = vcombine.high %v4297, %v4305
        %v4325 = vunpack.c.l.s4 1934713408
        %v4326 = vunpack.c.0.s8 %v4325
        %v4327 = vlaneseq
        %v4328 = vshrl.u32 %v4327, 7
        %v4329 = vsub.s32 %v4326, %v4328
        %v4330 = vrot.slane %v4322, %v4329
        %v4332 = vunpack.c.l.s4 1934713408
        %v4333 = vunpack.c.0.s8 %v4332
        %v4334 = vlaneseq
        %v4335 = vshrl.u32 %v4334, 7
        %v4336 = vsub.s32 %v4333, %v4335
        %v4337 = vrot.slane %v4323, %v4336
        %v4338 = vcombine.low %v4313, %v4321
        %v4339 = vcombine.high %v4313, %v4321
        %v4341 = vunpack.c.l.s4 1934713408
        %v4342 = vunpack.c.0.s8 %v4341
        %v4343 = vlaneseq
        %v4344 = vshrl.u32 %v4343, 7
        %v4345 = vsub.s32 %v4342, %v4344
        %v4346 = vrot.slane %v4338, %v4345
        %v4348 = vunpack.c.l.s4 1934713408
        %v4349 = vunpack.c.0.s8 %v4348
        %v4350 = vlaneseq
        %v4351 = vshrl.u32 %v4350, 7
        %v4352 = vsub.s32 %v4349, %v4351
        %v4353 = vrot.slane %v4339, %v4352
        %v4354 = vcombine.low %v4330, %v4346
        %v4355 = vcombine.high %v4330, %v4346
        %v4356 = vcombine.low %v4337, %v4353
        %v4357 = vcombine.high %v4337, %v4353
        %v4358 = vpack.c.bf16 %v4354, %v4354
        %v4359 = vpack.c.bf16 %v4355, %v4355
        %v4360 = vpack.c.bf16 %v4356, %v4356
        %v4361 = vpack.c.bf16 %v4357, %v4357
        %4363 = vrot.lane.b32.xlu0 %v3181, 120
        %v4364 = vpop.permute.xlu0 %4363
        %4366 = vrot.lane.b32.xlu0 %v3181, 112
        %v4367 = vpop.permute.xlu0 %4366
        %4369 = vrot.lane.b32.xlu0 %v3181, 104
        %v4370 = vpop.permute.xlu0 %4369
        %v4372 = vcombine.low %v3181, %v4367
        %v4373 = vcombine.high %v3181, %v4367
        %v4375 = vunpack.c.l.s4 1983009808
        %v4376 = vunpack.c.0.s8 %v4375
        %v4377 = vlaneseq
        %v4378 = vshrl.u32 %v4377, 7
        %v4379 = vsub.s32 %v4376, %v4378
        %v4380 = vrot.slane %v4372, %v4379
        %v4382 = vunpack.c.l.s4 1983009808
        %v4383 = vunpack.c.0.s8 %v4382
        %v4384 = vlaneseq
        %v4385 = vshrl.u32 %v4384, 7
        %v4386 = vsub.s32 %v4383, %v4385
        %v4387 = vrot.slane %v4373, %v4386
        %v4388 = vcombine.low %v4364, %v4370
        %v4389 = vcombine.high %v4364, %v4370
        %v4391 = vunpack.c.l.s4 1983009808
        %v4392 = vunpack.c.0.s8 %v4391
        %v4393 = vlaneseq
        %v4394 = vshrl.u32 %v4393, 7
        %v4395 = vsub.s32 %v4392, %v4394
        %v4396 = vrot.slane %v4388, %v4395
        %v4398 = vunpack.c.l.s4 1983009808
        %v4399 = vunpack.c.0.s8 %v4398
        %v4400 = vlaneseq
        %v4401 = vshrl.u32 %v4400, 7
        %v4402 = vsub.s32 %v4399, %v4401
        %v4403 = vrot.slane %v4389, %v4402
        %v4404 = vcombine.low %v4380, %v4396
        %v4405 = vcombine.high %v4380, %v4396
        %v4407 = vunpack.c.l.s4 1934713408
        %v4408 = vunpack.c.0.s8 %v4407
        %v4409 = vlaneseq
        %v4410 = vshrl.u32 %v4409, 7
        %v4411 = vsub.s32 %v4408, %v4410
        %v4412 = vrot.slane %v4404, %v4411
        %v4414 = vunpack.c.l.s4 1934713408
        %v4415 = vunpack.c.0.s8 %v4414
        %v4416 = vlaneseq
        %v4417 = vshrl.u32 %v4416, 7
        %v4418 = vsub.s32 %v4415, %v4417
        %v4419 = vrot.slane %v4405, %v4418
        %v4420 = vcombine.low %v4387, %v4403
        %v4421 = vcombine.high %v4387, %v4403
        %v4423 = vunpack.c.l.s4 1934713408
        %v4424 = vunpack.c.0.s8 %v4423
        %v4425 = vlaneseq
        %v4426 = vshrl.u32 %v4425, 7
        %v4427 = vsub.s32 %v4424, %v4426
        %v4428 = vrot.slane %v4420, %v4427
        %v4430 = vunpack.c.l.s4 1934713408
        %v4431 = vunpack.c.0.s8 %v4430
        %v4432 = vlaneseq
        %v4433 = vshrl.u32 %v4432, 7
        %v4434 = vsub.s32 %v4431, %v4433
        %v4435 = vrot.slane %v4421, %v4434
        %v4436 = vcombine.high %v4412, 0.0
        %v4437 = vcombine.high %v4419, 0.0
        %v4438 = vcombine.high %v4428, 0.0
        %v4439 = vcombine.high %v4435, 0.0
        %v4440 = vcombine.low %v4412, %v4419
        %v4442 = vunpack.c.l.s4 1983009808
        %v4443 = vunpack.c.0.s8 %v4442
        %v4444 = vlaneseq
        %v4445 = vshrl.u32 %v4444, 7
        %v4446 = vsub.s32 %v4443, %v4445
        %v4447 = vrot.slane %v4440, %v4446
        %v4448 = vcombine.low %v4436, %v4437
        %v4450 = vunpack.c.l.s4 1983009808
        %v4451 = vunpack.c.0.s8 %v4450
        %v4452 = vlaneseq
        %v4453 = vshrl.u32 %v4452, 7
        %v4454 = vsub.s32 %v4451, %v4453
        %v4455 = vrot.slane %v4448, %v4454
        %v4456 = vcombine.low %v4428, %v4435
        %v4458 = vunpack.c.l.s4 1983009808
        %v4459 = vunpack.c.0.s8 %v4458
        %v4460 = vlaneseq
        %v4461 = vshrl.u32 %v4460, 7
        %v4462 = vsub.s32 %v4459, %v4461
        %v4463 = vrot.slane %v4456, %v4462
        %v4464 = vcombine.low %v4438, %v4439
        %v4466 = vunpack.c.l.s4 1983009808
        %v4467 = vunpack.c.0.s8 %v4466
        %v4468 = vlaneseq
        %v4469 = vshrl.u32 %v4468, 7
        %v4470 = vsub.s32 %v4467, %v4469
        %v4471 = vrot.slane %v4464, %v4470
        %v4472 = vcombine.low %v4447, %v4455
        %v4473 = vcombine.high %v4447, %v4455
        %v4475 = vunpack.c.l.s4 1934713408
        %v4476 = vunpack.c.0.s8 %v4475
        %v4477 = vlaneseq
        %v4478 = vshrl.u32 %v4477, 7
        %v4479 = vsub.s32 %v4476, %v4478
        %v4480 = vrot.slane %v4472, %v4479
        %v4482 = vunpack.c.l.s4 1934713408
        %v4483 = vunpack.c.0.s8 %v4482
        %v4484 = vlaneseq
        %v4485 = vshrl.u32 %v4484, 7
        %v4486 = vsub.s32 %v4483, %v4485
        %v4487 = vrot.slane %v4473, %v4486
        %v4488 = vcombine.low %v4463, %v4471
        %v4489 = vcombine.high %v4463, %v4471
        %v4491 = vunpack.c.l.s4 1934713408
        %v4492 = vunpack.c.0.s8 %v4491
        %v4493 = vlaneseq
        %v4494 = vshrl.u32 %v4493, 7
        %v4495 = vsub.s32 %v4492, %v4494
        %v4496 = vrot.slane %v4488, %v4495
        %v4498 = vunpack.c.l.s4 1934713408
        %v4499 = vunpack.c.0.s8 %v4498
        %v4500 = vlaneseq
        %v4501 = vshrl.u32 %v4500, 7
        %v4502 = vsub.s32 %v4499, %v4501
        %v4503 = vrot.slane %v4489, %v4502
        %v4504 = vcombine.low %v4480, %v4496
        %v4505 = vcombine.high %v4480, %v4496
        %v4506 = vcombine.low %v4487, %v4503
        %v4507 = vcombine.high %v4487, %v4503
        %v4508 = vpack.c.bf16 %v4504, %v4504
        %v4509 = vpack.c.bf16 %v4505, %v4505
        %v4510 = vpack.c.bf16 %v4506, %v4506
        %v4511 = vpack.c.bf16 %v4507, %v4507
        %4512 = vrot.lane.b32.xlu0 %v3181, 96
        %v4513 = vpop.permute.xlu0 %4512
        %4514 = vrot.lane.b32.xlu0 %v4364, 96
        %v4515 = vpop.permute.xlu0 %4514
        %4516 = vrot.lane.b32.xlu0 %v4367, 96
        %v4517 = vpop.permute.xlu0 %4516
        %4518 = vrot.lane.b32.xlu0 %v4370, 96
        %v4519 = vpop.permute.xlu0 %4518
        %v4524 = vcombine.low %v4513, %v4517
        %v4525 = vcombine.high %v4513, %v4517
        %v4527 = vunpack.c.l.s4 1983009808
        %v4528 = vunpack.c.0.s8 %v4527
        %v4529 = vlaneseq
        %v4530 = vshrl.u32 %v4529, 7
        %v4531 = vsub.s32 %v4528, %v4530
        %v4532 = vrot.slane %v4524, %v4531
        %v4534 = vunpack.c.l.s4 1983009808
        %v4535 = vunpack.c.0.s8 %v4534
        %v4536 = vlaneseq
        %v4537 = vshrl.u32 %v4536, 7
        %v4538 = vsub.s32 %v4535, %v4537
        %v4539 = vrot.slane %v4525, %v4538
        %v4540 = vcombine.low %v4515, %v4519
        %v4541 = vcombine.high %v4515, %v4519
        %v4543 = vunpack.c.l.s4 1983009808
        %v4544 = vunpack.c.0.s8 %v4543
        %v4545 = vlaneseq
        %v4546 = vshrl.u32 %v4545, 7
        %v4547 = vsub.s32 %v4544, %v4546
        %v4548 = vrot.slane %v4540, %v4547
        %v4550 = vunpack.c.l.s4 1983009808
        %v4551 = vunpack.c.0.s8 %v4550
        %v4552 = vlaneseq
        %v4553 = vshrl.u32 %v4552, 7
        %v4554 = vsub.s32 %v4551, %v4553
        %v4555 = vrot.slane %v4541, %v4554
        %v4556 = vcombine.low %v4532, %v4548
        %v4557 = vcombine.high %v4532, %v4548
        %v4559 = vunpack.c.l.s4 1934713408
        %v4560 = vunpack.c.0.s8 %v4559
        %v4561 = vlaneseq
        %v4562 = vshrl.u32 %v4561, 7
        %v4563 = vsub.s32 %v4560, %v4562
        %v4564 = vrot.slane %v4556, %v4563
        %v4566 = vunpack.c.l.s4 1934713408
        %v4567 = vunpack.c.0.s8 %v4566
        %v4568 = vlaneseq
        %v4569 = vshrl.u32 %v4568, 7
        %v4570 = vsub.s32 %v4567, %v4569
        %v4571 = vrot.slane %v4557, %v4570
        %v4572 = vcombine.low %v4539, %v4555
        %v4573 = vcombine.high %v4539, %v4555
        %v4575 = vunpack.c.l.s4 1934713408
        %v4576 = vunpack.c.0.s8 %v4575
        %v4577 = vlaneseq
        %v4578 = vshrl.u32 %v4577, 7
        %v4579 = vsub.s32 %v4576, %v4578
        %v4580 = vrot.slane %v4572, %v4579
        %v4582 = vunpack.c.l.s4 1934713408
        %v4583 = vunpack.c.0.s8 %v4582
        %v4584 = vlaneseq
        %v4585 = vshrl.u32 %v4584, 7
        %v4586 = vsub.s32 %v4583, %v4585
        %v4587 = vrot.slane %v4573, %v4586
        %v4588 = vcombine.high %v4564, 0.0
        %v4589 = vcombine.high %v4571, 0.0
        %v4590 = vcombine.high %v4580, 0.0
        %v4591 = vcombine.high %v4587, 0.0
        %v4592 = vcombine.low %v4564, %v4571
        %v4594 = vunpack.c.l.s4 1983009808
        %v4595 = vunpack.c.0.s8 %v4594
        %v4596 = vlaneseq
        %v4597 = vshrl.u32 %v4596, 7
        %v4598 = vsub.s32 %v4595, %v4597
        %v4599 = vrot.slane %v4592, %v4598
        %v4600 = vcombine.low %v4588, %v4589
        %v4602 = vunpack.c.l.s4 1983009808
        %v4603 = vunpack.c.0.s8 %v4602
        %v4604 = vlaneseq
        %v4605 = vshrl.u32 %v4604, 7
        %v4606 = vsub.s32 %v4603, %v4605
        %v4607 = vrot.slane %v4600, %v4606
        %v4608 = vcombine.low %v4580, %v4587
        %v4610 = vunpack.c.l.s4 1983009808
        %v4611 = vunpack.c.0.s8 %v4610
        %v4612 = vlaneseq
        %v4613 = vshrl.u32 %v4612, 7
        %v4614 = vsub.s32 %v4611, %v4613
        %v4615 = vrot.slane %v4608, %v4614
        %v4616 = vcombine.low %v4590, %v4591
        %v4618 = vunpack.c.l.s4 1983009808
        %v4619 = vunpack.c.0.s8 %v4618
        %v4620 = vlaneseq
        %v4621 = vshrl.u32 %v4620, 7
        %v4622 = vsub.s32 %v4619, %v4621
        %v4623 = vrot.slane %v4616, %v4622
        %v4624 = vcombine.low %v4599, %v4607
        %v4625 = vcombine.high %v4599, %v4607
        %v4627 = vunpack.c.l.s4 1934713408
        %v4628 = vunpack.c.0.s8 %v4627
        %v4629 = vlaneseq
        %v4630 = vshrl.u32 %v4629, 7
        %v4631 = vsub.s32 %v4628, %v4630
        %v4632 = vrot.slane %v4624, %v4631
        %v4634 = vunpack.c.l.s4 1934713408
        %v4635 = vunpack.c.0.s8 %v4634
        %v4636 = vlaneseq
        %v4637 = vshrl.u32 %v4636, 7
        %v4638 = vsub.s32 %v4635, %v4637
        %v4639 = vrot.slane %v4625, %v4638
        %v4640 = vcombine.low %v4615, %v4623
        %v4641 = vcombine.high %v4615, %v4623
        %v4643 = vunpack.c.l.s4 1934713408
        %v4644 = vunpack.c.0.s8 %v4643
        %v4645 = vlaneseq
        %v4646 = vshrl.u32 %v4645, 7
        %v4647 = vsub.s32 %v4644, %v4646
        %v4648 = vrot.slane %v4640, %v4647
        %v4650 = vunpack.c.l.s4 1934713408
        %v4651 = vunpack.c.0.s8 %v4650
        %v4652 = vlaneseq
        %v4653 = vshrl.u32 %v4652, 7
        %v4654 = vsub.s32 %v4651, %v4653
        %v4655 = vrot.slane %v4641, %v4654
        %v4656 = vcombine.low %v4632, %v4648
        %v4657 = vcombine.high %v4632, %v4648
        %v4658 = vcombine.low %v4639, %v4655
        %v4659 = vcombine.high %v4639, %v4655
        %v4660 = vpack.c.bf16 %v4656, %v4656
        %v4661 = vpack.c.bf16 %v4657, %v4657
        %v4662 = vpack.c.bf16 %v4658, %v4658
        %v4663 = vpack.c.bf16 %v4659, %v4659
        %v4665 = vlaneseq
        %v4666 = vshrl.u32 %v4665, 7
        %v4667 = vsub.s32 0, %v4666
        %v4668 = vrot.slane %v4211, %v4667
        %v4671 = vsel %vm1347, %v4358, 0
        %v4674 = vsel %vm1347, %v4508, 0
        %4676 = vmatprep.subr.bf16.mxu0 0
        %4677 = vmatpush1.bf16.xpose.msra.mxu0 %v4674
        %4678 = vmatprep.subr.bf16.mxu0 0
        %4679 = vmatpush1.bf16.xpose.msra.mxu0 0
        %4680 = vmatprep.subr.bf16.mxu0 0
        %4681 = vmatpush1.bf16.xpose.msra.mxu0 0
        %4682 = vmatprep.subr.bf16.mxu0 0
        %4683 = vmatpush1.bf16.xpose.msra.mxu0 0
        %4684 = vmatprep.subr.bf16.mxu0 0
        %4685 = vmatpush1.bf16.xpose.msra.mxu0 0
        %4686 = vmatprep.subr.bf16.mxu0 0
        %4687 = vmatpush1.bf16.xpose.msra.mxu0 0
        %4688 = vmatprep.subr.bf16.mxu0 0
        %4689 = vmatpush1.bf16.xpose.msra.mxu0 0
        %4690 = vmatprep.subr.bf16.mxu0 0
        %4691 = vmatpush1.bf16.xpose.msra.mxu0 0
        %4692 = vmatprep.subr.bf16.mxu0 0
        %4693 = vmatpush1.bf16.xpose.msra.mxu0 0
        %4694 = vmatprep.subr.bf16.mxu0 0
        %4695 = vmatpush1.bf16.xpose.msra.mxu0 0
        %4696 = vmatprep.subr.bf16.mxu0 0
        %4697 = vmatpush1.bf16.xpose.msra.mxu0 0
        %4698 = vmatprep.subr.bf16.mxu0 0
        %4699 = vmatpush1.bf16.xpose.msra.mxu0 0
        %4700 = vmatprep.subr.bf16.mxu0 0
        %4701 = vmatpush1.bf16.xpose.msra.mxu0 0
        %4702 = vmatprep.subr.bf16.mxu0 0
        %4703 = vmatpush1.bf16.xpose.msra.mxu0 0
        %4704 = vmatprep.subr.bf16.mxu0 0
        %4705 = vmatpush1.bf16.xpose.msra.mxu0 0
        %4706 = vmatprep.subr.bf16.mxu0 0
        %4707 = vmatpush1.bf16.xpose.msra.mxu0 0
        %4708 = vmatprep.mubr.bf16.mxu0 0
        %4709 = vmatmul.mubr.bf16.gmra.mrb[0].mxu0 %v4671
        %v4710 = vpop.f32.mrb[0].mxu0
        %v4711 = vadd.f32 %v4668, %v4710
        %v4712 = vpop.f32.mrb[0].mxu0
        %v4713 = vpop.f32.mrb[0].mxu0
        %v4714 = vpop.f32.mrb[0].mxu0
        %4715 = vdwg.mxu0
        %v4717 = vsel %vm1347, %v4359, 0
        %v4720 = vsel %vm1347, %v4509, 0
        %4722 = vmatprep.subr.bf16.mxu0 0
        %4723 = vmatpush1.bf16.xpose.msra.mxu0 %v4720
        %4724 = vmatprep.subr.bf16.mxu0 0
        %4725 = vmatpush1.bf16.xpose.msra.mxu0 0
        %4726 = vmatprep.subr.bf16.mxu0 0
        %4727 = vmatpush1.bf16.xpose.msra.mxu0 0
        %4728 = vmatprep.subr.bf16.mxu0 0
        %4729 = vmatpush1.bf16.xpose.msra.mxu0 0
        %4730 = vmatprep.subr.bf16.mxu0 0
        %4731 = vmatpush1.bf16.xpose.msra.mxu0 0
        %4732 = vmatprep.subr.bf16.mxu0 0
        %4733 = vmatpush1.bf16.xpose.msra.mxu0 0
        %4734 = vmatprep.subr.bf16.mxu0 0
        %4735 = vmatpush1.bf16.xpose.msra.mxu0 0
        %4736 = vmatprep.subr.bf16.mxu0 0
        %4737 = vmatpush1.bf16.xpose.msra.mxu0 0
        %4738 = vmatprep.subr.bf16.mxu0 0
        %4739 = vmatpush1.bf16.xpose.msra.mxu0 0
        %4740 = vmatprep.subr.bf16.mxu0 0
        %4741 = vmatpush1.bf16.xpose.msra.mxu0 0
        %4742 = vmatprep.subr.bf16.mxu0 0
        %4743 = vmatpush1.bf16.xpose.msra.mxu0 0
        %4744 = vmatprep.subr.bf16.mxu0 0
        %4745 = vmatpush1.bf16.xpose.msra.mxu0 0
        %4746 = vmatprep.subr.bf16.mxu0 0
        %4747 = vmatpush1.bf16.xpose.msra.mxu0 0
        %4748 = vmatprep.subr.bf16.mxu0 0
        %4749 = vmatpush1.bf16.xpose.msra.mxu0 0
        %4750 = vmatprep.subr.bf16.mxu0 0
        %4751 = vmatpush1.bf16.xpose.msra.mxu0 0
        %4752 = vmatprep.subr.bf16.mxu0 0
        %4753 = vmatpush1.bf16.xpose.msra.mxu0 0
        %4754 = vmatprep.mubr.bf16.mxu0 0
        %4755 = vmatmul.mubr.bf16.gmra.mrb[0].mxu0 %v4717
        %v4756 = vpop.f32.mrb[0].mxu0
        %v4757 = vadd.f32 %v4668, %v4756
        %v4758 = vpop.f32.mrb[0].mxu0
        %v4759 = vpop.f32.mrb[0].mxu0
        %v4760 = vpop.f32.mrb[0].mxu0
        %4761 = vdwg.mxu0
        %v4763 = vsel %vm1347, %v4360, 0
        %v4766 = vsel %vm1347, %v4510, 0
        %4768 = vmatprep.subr.bf16.mxu0 0
        %4769 = vmatpush1.bf16.xpose.msra.mxu0 %v4766
        %4770 = vmatprep.subr.bf16.mxu0 0
        %4771 = vmatpush1.bf16.xpose.msra.mxu0 0
        %4772 = vmatprep.subr.bf16.mxu0 0
        %4773 = vmatpush1.bf16.xpose.msra.mxu0 0
        %4774 = vmatprep.subr.bf16.mxu0 0
        %4775 = vmatpush1.bf16.xpose.msra.mxu0 0
        %4776 = vmatprep.subr.bf16.mxu0 0
        %4777 = vmatpush1.bf16.xpose.msra.mxu0 0
        %4778 = vmatprep.subr.bf16.mxu0 0
        %4779 = vmatpush1.bf16.xpose.msra.mxu0 0
        %4780 = vmatprep.subr.bf16.mxu0 0
        %4781 = vmatpush1.bf16.xpose.msra.mxu0 0
        %4782 = vmatprep.subr.bf16.mxu0 0
        %4783 = vmatpush1.bf16.xpose.msra.mxu0 0
        %4784 = vmatprep.subr.bf16.mxu0 0
        %4785 = vmatpush1.bf16.xpose.msra.mxu0 0
        %4786 = vmatprep.subr.bf16.mxu0 0
        %4787 = vmatpush1.bf16.xpose.msra.mxu0 0
        %4788 = vmatprep.subr.bf16.mxu0 0
        %4789 = vmatpush1.bf16.xpose.msra.mxu0 0
        %4790 = vmatprep.subr.bf16.mxu0 0
        %4791 = vmatpush1.bf16.xpose.msra.mxu0 0
        %4792 = vmatprep.subr.bf16.mxu0 0
        %4793 = vmatpush1.bf16.xpose.msra.mxu0 0
        %4794 = vmatprep.subr.bf16.mxu0 0
        %4795 = vmatpush1.bf16.xpose.msra.mxu0 0
        %4796 = vmatprep.subr.bf16.mxu0 0
        %4797 = vmatpush1.bf16.xpose.msra.mxu0 0
        %4798 = vmatprep.subr.bf16.mxu0 0
        %4799 = vmatpush1.bf16.xpose.msra.mxu0 0
        %4800 = vmatprep.mubr.bf16.mxu0 0
        %4801 = vmatmul.mubr.bf16.gmra.mrb[0].mxu0 %v4763
        %v4802 = vpop.f32.mrb[0].mxu0
        %v4803 = vadd.f32 %v4668, %v4802
        %v4804 = vpop.f32.mrb[0].mxu0
        %v4805 = vpop.f32.mrb[0].mxu0
        %v4806 = vpop.f32.mrb[0].mxu0
        %4807 = vdwg.mxu0
        %v4809 = vsel %vm1347, %v4361, 0
        %v4812 = vsel %vm1347, %v4511, 0
        %4814 = vmatprep.subr.bf16.mxu0 0
        %4815 = vmatpush1.bf16.xpose.msra.mxu0 %v4812
        %4816 = vmatprep.subr.bf16.mxu0 0
        %4817 = vmatpush1.bf16.xpose.msra.mxu0 0
        %4818 = vmatprep.subr.bf16.mxu0 0
        %4819 = vmatpush1.bf16.xpose.msra.mxu0 0
        %4820 = vmatprep.subr.bf16.mxu0 0
        %4821 = vmatpush1.bf16.xpose.msra.mxu0 0
        %4822 = vmatprep.subr.bf16.mxu0 0
        %4823 = vmatpush1.bf16.xpose.msra.mxu0 0
        %4824 = vmatprep.subr.bf16.mxu0 0
        %4825 = vmatpush1.bf16.xpose.msra.mxu0 0
        %4826 = vmatprep.subr.bf16.mxu0 0
        %4827 = vmatpush1.bf16.xpose.msra.mxu0 0
        %4828 = vmatprep.subr.bf16.mxu0 0
        %4829 = vmatpush1.bf16.xpose.msra.mxu0 0
        %4830 = vmatprep.subr.bf16.mxu0 0
        %4831 = vmatpush1.bf16.xpose.msra.mxu0 0
        %4832 = vmatprep.subr.bf16.mxu0 0
        %4833 = vmatpush1.bf16.xpose.msra.mxu0 0
        %4834 = vmatprep.subr.bf16.mxu0 0
        %4835 = vmatpush1.bf16.xpose.msra.mxu0 0
        %4836 = vmatprep.subr.bf16.mxu0 0
        %4837 = vmatpush1.bf16.xpose.msra.mxu0 0
        %4838 = vmatprep.subr.bf16.mxu0 0
        %4839 = vmatpush1.bf16.xpose.msra.mxu0 0
        %4840 = vmatprep.subr.bf16.mxu0 0
        %4841 = vmatpush1.bf16.xpose.msra.mxu0 0
        %4842 = vmatprep.subr.bf16.mxu0 0
        %4843 = vmatpush1.bf16.xpose.msra.mxu0 0
        %4844 = vmatprep.subr.bf16.mxu0 0
        %4845 = vmatpush1.bf16.xpose.msra.mxu0 0
        %4846 = vmatprep.mubr.bf16.mxu0 0
        %4847 = vmatmul.mubr.bf16.gmra.mrb[0].mxu0 %v4809
        %v4848 = vpop.f32.mrb[0].mxu0
        %v4849 = vadd.f32 %v4668, %v4848
        %v4850 = vpop.f32.mrb[0].mxu0
        %v4851 = vpop.f32.mrb[0].mxu0
        %v4852 = vpop.f32.mrb[0].mxu0
        %4853 = vdwg.mxu0
        %v4854 = vsel %vm1347, %v4711, -inf
        %4855 = vmax.xlane.f32.xlu0 %v4854
        %v4856 = vpop.xlane.xlu0 %4855
        %v4857 = vsel %vm1347, %v4757, -inf
        %4858 = vmax.xlane.f32.xlu0 %v4857
        %v4859 = vpop.xlane.xlu0 %4858
        %v4860 = vsel %vm1347, %v4803, -inf
        %4861 = vmax.xlane.f32.xlu0 %v4860
        %v4862 = vpop.xlane.xlu0 %4861
        %v4863 = vsel %vm1347, %v4849, -inf
        %4864 = vmax.xlane.f32.xlu0 %v4863
        %v4865 = vpop.xlane.xlu0 %4864
        %v4866 = vsub.f32 %v4711, %v4856
        %v4867 = vsub.f32 %v4757, %v4859
        %v4868 = vsub.f32 %v4803, %v4862
        %v4869 = vsub.f32 %v4849, %v4865
        %v4870 = vmul.f32 %v4866, 1.442695
        %v4871 = vpow.pop %v4870
        %v4872 = vmul.f32 %v4867, 1.442695
        %v4873 = vpow.pop %v4872
        %v4874 = vmul.f32 %v4868, 1.442695
        %v4875 = vpow.pop %v4874
        %v4876 = vmul.f32 %v4869, 1.442695
        %v4877 = vpow.pop %v4876
        %v4878 = vsel %vm1347, %v4871, 0.0
        %4879 = vadd.xlane.f32.xlu0 %v4878
        %v4880 = vpop.xlane.xlu0 %4879
        %v4881 = vsel %vm1347, %v4873, 0.0
        %4882 = vadd.xlane.f32.xlu0 %v4881
        %v4883 = vpop.xlane.xlu0 %4882
        %v4884 = vsel %vm1347, %v4875, 0.0
        %4885 = vadd.xlane.f32.xlu0 %v4884
        %v4886 = vpop.xlane.xlu0 %4885
        %v4887 = vsel %vm1347, %v4877, 0.0
        %4888 = vadd.xlane.f32.xlu0 %v4887
        %v4889 = vpop.xlane.xlu0 %4888
        %v4890 = vrcp.pop %v4880
        %v4891 = vrcp.pop %v4883
        %v4892 = vrcp.pop %v4886
        %v4893 = vrcp.pop %v4889
        %v4894 = vmul.f32 %v4871, %v4890
        %v4895 = vmul.f32 %v4873, %v4891
        %v4896 = vmul.f32 %v4875, %v4892
        %v4897 = vmul.f32 %v4877, %v4893
        %v4898 = vpack.c.bf16 %v4894, %v4894
        %v4899 = vpack.c.bf16 %v4895, %v4895
        %v4900 = vpack.c.bf16 %v4896, %v4896
        %v4901 = vpack.c.bf16 %v4897, %v4897
        %v4903 = vsel %vm1347, %v4898, 0
        %v4906 = vsel %vm1583, %v4660, 0
        %4908 = vmatprep.subr.bf16.mxu0 0
        %4909 = vmatpush1.bf16.msra.mxu0 %v4906
        %4910 = vmatprep.subr.bf16.mxu0 0
        %4911 = vmatpush1.bf16.msra.mxu0 0
        %4912 = vmatprep.subr.bf16.mxu0 0
        %4913 = vmatpush1.bf16.msra.mxu0 0
        %4914 = vmatprep.subr.bf16.mxu0 0
        %4915 = vmatpush1.bf16.msra.mxu0 0
        %4916 = vmatprep.subr.bf16.mxu0 0
        %4917 = vmatpush1.bf16.msra.mxu0 0
        %4918 = vmatprep.subr.bf16.mxu0 0
        %4919 = vmatpush1.bf16.msra.mxu0 0
        %4920 = vmatprep.subr.bf16.mxu0 0
        %4921 = vmatpush1.bf16.msra.mxu0 0
        %4922 = vmatprep.subr.bf16.mxu0 0
        %4923 = vmatpush1.bf16.msra.mxu0 0
        %4924 = vmatprep.subr.bf16.mxu0 0
        %4925 = vmatpush1.bf16.msra.mxu0 0
        %4926 = vmatprep.subr.bf16.mxu0 0
        %4927 = vmatpush1.bf16.msra.mxu0 0
        %4928 = vmatprep.subr.bf16.mxu0 0
        %4929 = vmatpush1.bf16.msra.mxu0 0
        %4930 = vmatprep.subr.bf16.mxu0 0
        %4931 = vmatpush1.bf16.msra.mxu0 0
        %4932 = vmatprep.subr.bf16.mxu0 0
        %4933 = vmatpush1.bf16.msra.mxu0 0
        %4934 = vmatprep.subr.bf16.mxu0 0
        %4935 = vmatpush1.bf16.msra.mxu0 0
        %4936 = vmatprep.subr.bf16.mxu0 0
        %4937 = vmatpush1.bf16.msra.mxu0 0
        %4938 = vmatprep.subr.bf16.mxu0 0
        %4939 = vmatpush1.bf16.msra.mxu0 0
        %4940 = vmatprep.mubr.bf16.mxu0 0
        %4941 = vmatmul.mubr.bf16.gmra.mrb[0].mxu0 %v4903
        %v4942 = vpop.f32.mrb[0].mxu0
        %v4943 = vadd.f32 0.0, %v4942
        %v4944 = vpop.f32.mrb[0].mxu0
        %v4945 = vpop.f32.mrb[0].mxu0
        %v4946 = vpop.f32.mrb[0].mxu0
        %4947 = vdwg.mxu0
        %v4949 = vsel %vm1347, %v4899, 0
        %v4952 = vsel %vm1583, %v4661, 0
        %4954 = vmatprep.subr.bf16.mxu0 0
        %4955 = vmatpush1.bf16.msra.mxu0 %v4952
        %4956 = vmatprep.subr.bf16.mxu0 0
        %4957 = vmatpush1.bf16.msra.mxu0 0
        %4958 = vmatprep.subr.bf16.mxu0 0
        %4959 = vmatpush1.bf16.msra.mxu0 0
        %4960 = vmatprep.subr.bf16.mxu0 0
        %4961 = vmatpush1.bf16.msra.mxu0 0
        %4962 = vmatprep.subr.bf16.mxu0 0
        %4963 = vmatpush1.bf16.msra.mxu0 0
        %4964 = vmatprep.subr.bf16.mxu0 0
        %4965 = vmatpush1.bf16.msra.mxu0 0
        %4966 = vmatprep.subr.bf16.mxu0 0
        %4967 = vmatpush1.bf16.msra.mxu0 0
        %4968 = vmatprep.subr.bf16.mxu0 0
        %4969 = vmatpush1.bf16.msra.mxu0 0
        %4970 = vmatprep.subr.bf16.mxu0 0
        %4971 = vmatpush1.bf16.msra.mxu0 0
        %4972 = vmatprep.subr.bf16.mxu0 0
        %4973 = vmatpush1.bf16.msra.mxu0 0
        %4974 = vmatprep.subr.bf16.mxu0 0
        %4975 = vmatpush1.bf16.msra.mxu0 0
        %4976 = vmatprep.subr.bf16.mxu0 0
        %4977 = vmatpush1.bf16.msra.mxu0 0
        %4978 = vmatprep.subr.bf16.mxu0 0
        %4979 = vmatpush1.bf16.msra.mxu0 0
        %4980 = vmatprep.subr.bf16.mxu0 0
        %4981 = vmatpush1.bf16.msra.mxu0 0
        %4982 = vmatprep.subr.bf16.mxu0 0
        %4983 = vmatpush1.bf16.msra.mxu0 0
        %4984 = vmatprep.subr.bf16.mxu0 0
        %4985 = vmatpush1.bf16.msra.mxu0 0
        %4986 = vmatprep.mubr.bf16.mxu0 0
        %4987 = vmatmul.mubr.bf16.gmra.mrb[0].mxu0 %v4949
        %v4988 = vpop.f32.mrb[0].mxu0
        %v4989 = vadd.f32 0.0, %v4988
        %v4990 = vpop.f32.mrb[0].mxu0
        %v4991 = vpop.f32.mrb[0].mxu0
        %v4992 = vpop.f32.mrb[0].mxu0
        %4993 = vdwg.mxu0
        %v4995 = vsel %vm1347, %v4900, 0
        %v4998 = vsel %vm1583, %v4662, 0
        %5000 = vmatprep.subr.bf16.mxu0 0
        %5001 = vmatpush1.bf16.msra.mxu0 %v4998
        %5002 = vmatprep.subr.bf16.mxu0 0
        %5003 = vmatpush1.bf16.msra.mxu0 0
        %5004 = vmatprep.subr.bf16.mxu0 0
        %5005 = vmatpush1.bf16.msra.mxu0 0
        %5006 = vmatprep.subr.bf16.mxu0 0
        %5007 = vmatpush1.bf16.msra.mxu0 0
        %5008 = vmatprep.subr.bf16.mxu0 0
        %5009 = vmatpush1.bf16.msra.mxu0 0
        %5010 = vmatprep.subr.bf16.mxu0 0
        %5011 = vmatpush1.bf16.msra.mxu0 0
        %5012 = vmatprep.subr.bf16.mxu0 0
        %5013 = vmatpush1.bf16.msra.mxu0 0
        %5014 = vmatprep.subr.bf16.mxu0 0
        %5015 = vmatpush1.bf16.msra.mxu0 0
        %5016 = vmatprep.subr.bf16.mxu0 0
        %5017 = vmatpush1.bf16.msra.mxu0 0
        %5018 = vmatprep.subr.bf16.mxu0 0
        %5019 = vmatpush1.bf16.msra.mxu0 0
        %5020 = vmatprep.subr.bf16.mxu0 0
        %5021 = vmatpush1.bf16.msra.mxu0 0
        %5022 = vmatprep.subr.bf16.mxu0 0
        %5023 = vmatpush1.bf16.msra.mxu0 0
        %5024 = vmatprep.subr.bf16.mxu0 0
        %5025 = vmatpush1.bf16.msra.mxu0 0
        %5026 = vmatprep.subr.bf16.mxu0 0
        %5027 = vmatpush1.bf16.msra.mxu0 0
        %5028 = vmatprep.subr.bf16.mxu0 0
        %5029 = vmatpush1.bf16.msra.mxu0 0
        %5030 = vmatprep.subr.bf16.mxu0 0
        %5031 = vmatpush1.bf16.msra.mxu0 0
        %5032 = vmatprep.mubr.bf16.mxu0 0
        %5033 = vmatmul.mubr.bf16.gmra.mrb[0].mxu0 %v4995
        %v5034 = vpop.f32.mrb[0].mxu0
        %v5035 = vadd.f32 0.0, %v5034
        %v5036 = vpop.f32.mrb[0].mxu0
        %v5037 = vpop.f32.mrb[0].mxu0
        %v5038 = vpop.f32.mrb[0].mxu0
        %5039 = vdwg.mxu0
        %v5041 = vsel %vm1347, %v4901, 0
        %v5044 = vsel %vm1583, %v4663, 0
        %5046 = vmatprep.subr.bf16.mxu0 0
        %5047 = vmatpush1.bf16.msra.mxu0 %v5044
        %5048 = vmatprep.subr.bf16.mxu0 0
        %5049 = vmatpush1.bf16.msra.mxu0 0
        %5050 = vmatprep.subr.bf16.mxu0 0
        %5051 = vmatpush1.bf16.msra.mxu0 0
        %5052 = vmatprep.subr.bf16.mxu0 0
        %5053 = vmatpush1.bf16.msra.mxu0 0
        %5054 = vmatprep.subr.bf16.mxu0 0
        %5055 = vmatpush1.bf16.msra.mxu0 0
        %5056 = vmatprep.subr.bf16.mxu0 0
        %5057 = vmatpush1.bf16.msra.mxu0 0
        %5058 = vmatprep.subr.bf16.mxu0 0
        %5059 = vmatpush1.bf16.msra.mxu0 0
        %5060 = vmatprep.subr.bf16.mxu0 0
        %5061 = vmatpush1.bf16.msra.mxu0 0
        %5062 = vmatprep.subr.bf16.mxu0 0
        %5063 = vmatpush1.bf16.msra.mxu0 0
        %5064 = vmatprep.subr.bf16.mxu0 0
        %5065 = vmatpush1.bf16.msra.mxu0 0
        %5066 = vmatprep.subr.bf16.mxu0 0
        %5067 = vmatpush1.bf16.msra.mxu0 0
        %5068 = vmatprep.subr.bf16.mxu0 0
        %5069 = vmatpush1.bf16.msra.mxu0 0
        %5070 = vmatprep.subr.bf16.mxu0 0
        %5071 = vmatpush1.bf16.msra.mxu0 0
        %5072 = vmatprep.subr.bf16.mxu0 0
        %5073 = vmatpush1.bf16.msra.mxu0 0
        %5074 = vmatprep.subr.bf16.mxu0 0
        %5075 = vmatpush1.bf16.msra.mxu0 0
        %5076 = vmatprep.subr.bf16.mxu0 0
        %5077 = vmatpush1.bf16.msra.mxu0 0
        %5078 = vmatprep.mubr.bf16.mxu0 0
        %5079 = vmatmul.mubr.bf16.gmra.mrb[0].mxu0 %v5041
        %v5080 = vpop.f32.mrb[0].mxu0
        %v5081 = vadd.f32 0.0, %v5080
        %v5082 = vpop.f32.mrb[0].mxu0
        %v5083 = vpop.f32.mrb[0].mxu0
        %v5084 = vpop.f32.mrb[0].mxu0
        %5085 = vdwg.mxu0
        %v5086 = vcombine.low %v4943, %v5035
        %v5087 = vcombine.high %v4943, %v5035
        %v5089 = vunpack.c.l.s4 1983009808
        %v5090 = vunpack.c.0.s8 %v5089
        %v5091 = vlaneseq
        %v5092 = vshrl.u32 %v5091, 7
        %v5093 = vsub.s32 %v5090, %v5092
        %v5094 = vrot.slane %v5086, %v5093
        %v5096 = vunpack.c.l.s4 1983009808
        %v5097 = vunpack.c.0.s8 %v5096
        %v5098 = vlaneseq
        %v5099 = vshrl.u32 %v5098, 7
        %v5100 = vsub.s32 %v5097, %v5099
        %v5101 = vrot.slane %v5087, %v5100
        %v5102 = vcombine.low %v4989, %v5081
        %v5103 = vcombine.high %v4989, %v5081
        %v5105 = vunpack.c.l.s4 1983009808
        %v5106 = vunpack.c.0.s8 %v5105
        %v5107 = vlaneseq
        %v5108 = vshrl.u32 %v5107, 7
        %v5109 = vsub.s32 %v5106, %v5108
        %v5110 = vrot.slane %v5102, %v5109
        %v5112 = vunpack.c.l.s4 1983009808
        %v5113 = vunpack.c.0.s8 %v5112
        %v5114 = vlaneseq
        %v5115 = vshrl.u32 %v5114, 7
        %v5116 = vsub.s32 %v5113, %v5115
        %v5117 = vrot.slane %v5103, %v5116
        %v5118 = vcombine.low %v5094, %v5110
        %v5119 = vcombine.high %v5094, %v5110
        %v5121 = vunpack.c.l.s4 1934713408
        %v5122 = vunpack.c.0.s8 %v5121
        %v5123 = vlaneseq
        %v5124 = vshrl.u32 %v5123, 7
        %v5125 = vsub.s32 %v5122, %v5124
        %v5126 = vrot.slane %v5118, %v5125
        %v5128 = vunpack.c.l.s4 1934713408
        %v5129 = vunpack.c.0.s8 %v5128
        %v5130 = vlaneseq
        %v5131 = vshrl.u32 %v5130, 7
        %v5132 = vsub.s32 %v5129, %v5131
        %v5133 = vrot.slane %v5119, %v5132
        %v5134 = vcombine.low %v5101, %v5117
        %v5135 = vcombine.high %v5101, %v5117
        %v5137 = vunpack.c.l.s4 1934713408
        %v5138 = vunpack.c.0.s8 %v5137
        %v5139 = vlaneseq
        %v5140 = vshrl.u32 %v5139, 7
        %v5141 = vsub.s32 %v5138, %v5140
        %v5142 = vrot.slane %v5134, %v5141
        %v5144 = vunpack.c.l.s4 1934713408
        %v5145 = vunpack.c.0.s8 %v5144
        %v5146 = vlaneseq
        %v5147 = vshrl.u32 %v5146, 7
        %v5148 = vsub.s32 %v5145, %v5147
        %v5149 = vrot.slane %v5135, %v5148
        %v5150 = vcombine.high %v5126, 0.0
        %v5151 = vcombine.high %v5133, 0.0
        %v5152 = vcombine.high %v5142, 0.0
        %v5153 = vcombine.high %v5149, 0.0
        %v5154 = vcombine.low %v5126, %v5133
        %v5156 = vunpack.c.l.s4 1983009808
        %v5157 = vunpack.c.0.s8 %v5156
        %v5158 = vlaneseq
        %v5159 = vshrl.u32 %v5158, 7
        %v5160 = vsub.s32 %v5157, %v5159
        %v5161 = vrot.slane %v5154, %v5160
        %v5162 = vcombine.low %v5150, %v5151
        %v5164 = vunpack.c.l.s4 1983009808
        %v5165 = vunpack.c.0.s8 %v5164
        %v5166 = vlaneseq
        %v5167 = vshrl.u32 %v5166, 7
        %v5168 = vsub.s32 %v5165, %v5167
        %v5169 = vrot.slane %v5162, %v5168
        %v5170 = vcombine.low %v5142, %v5149
        %v5172 = vunpack.c.l.s4 1983009808
        %v5173 = vunpack.c.0.s8 %v5172
        %v5174 = vlaneseq
        %v5175 = vshrl.u32 %v5174, 7
        %v5176 = vsub.s32 %v5173, %v5175
        %v5177 = vrot.slane %v5170, %v5176
        %v5178 = vcombine.low %v5152, %v5153
        %v5180 = vunpack.c.l.s4 1983009808
        %v5181 = vunpack.c.0.s8 %v5180
        %v5182 = vlaneseq
        %v5183 = vshrl.u32 %v5182, 7
        %v5184 = vsub.s32 %v5181, %v5183
        %v5185 = vrot.slane %v5178, %v5184
        %v5186 = vcombine.low %v5161, %v5169
        %v5187 = vcombine.high %v5161, %v5169
        %v5189 = vunpack.c.l.s4 1934713408
        %v5190 = vunpack.c.0.s8 %v5189
        %v5191 = vlaneseq
        %v5192 = vshrl.u32 %v5191, 7
        %v5193 = vsub.s32 %v5190, %v5192
        %v5194 = vrot.slane %v5186, %v5193
        %v5196 = vunpack.c.l.s4 1934713408
        %v5197 = vunpack.c.0.s8 %v5196
        %v5198 = vlaneseq
        %v5199 = vshrl.u32 %v5198, 7
        %v5200 = vsub.s32 %v5197, %v5199
        %v5201 = vrot.slane %v5187, %v5200
        %v5202 = vcombine.low %v5177, %v5185
        %v5203 = vcombine.high %v5177, %v5185
        %v5205 = vunpack.c.l.s4 1934713408
        %v5206 = vunpack.c.0.s8 %v5205
        %v5207 = vlaneseq
        %v5208 = vshrl.u32 %v5207, 7
        %v5209 = vsub.s32 %v5206, %v5208
        %v5210 = vrot.slane %v5202, %v5209
        %v5212 = vunpack.c.l.s4 1934713408
        %v5213 = vunpack.c.0.s8 %v5212
        %v5214 = vlaneseq
        %v5215 = vshrl.u32 %v5214, 7
        %v5216 = vsub.s32 %v5213, %v5215
        %v5217 = vrot.slane %v5203, %v5216
        %v5218 = vcombine.low %v5194, %v5210
        %v5219 = vcombine.high %v5194, %v5210
        %v5220 = vcombine.low %v5201, %v5217
        %v5221 = vcombine.high %v5201, %v5217
        %5223 = vrot.lane.b32.xlu0 %v5219, 8
        %v5224 = vpop.permute.xlu0 %5223
        %5227 = vrot.lane.b32.xlu0 %v5220, 16
        %v5228 = vpop.permute.xlu0 %5227
        %5231 = vrot.lane.b32.xlu0 %v5221, 24
        %v5232 = vpop.permute.xlu0 %5231
        %v5234 = vsel %vm1347, %v5218, %v5224
        %v5235 = vsel %vm1914, %v5234, %v5228
        %v5236 = vsel %vm1916, %v5235, %v5232
        %v5237 = vpack.c.bf16 %v5236, %v4209
        %v5238 = vld [vmem:[%s612] sm:$0xf]
        %v5239 = vld [vmem:[%s612 + $0x4] sm:$0xf]
        %v5240 = vld [vmem:[%s612 + $0x8] sm:$0xf]
        %v5241 = vld [vmem:[%s612 + $0xc] sm:$0xf]
        %v5246 = vunpack.c.l.b16 %v5238
        %v5247 = vunpack.c.l.b16 %v5239
        %v5248 = vunpack.c.l.b16 %v5240
        %v5249 = vunpack.c.l.b16 %v5241
        %v5250 = vpack.c.b16 %v5247, %v5246
        %v5251 = vpack.c.b16 %v5249, %v5248
        %v5255 = vsel %vm773, %v5237, 0
        %5257 = vmatprep.subr.bf16.mxu0 0
        %5258 = vmatpush1.bf16.msra.mxu0 %v5250
        %5259 = vmatprep.subr.bf16.mxu0 0
        %5260 = vmatpush1.bf16.msra.mxu0 %v5251
        %5261 = vmatprep.subr.bf16.mxu0 0
        %5262 = vmatpush1.bf16.msra.mxu0 0
        %5263 = vmatprep.subr.bf16.mxu0 0
        %5264 = vmatpush1.bf16.msra.mxu0 0
        %5265 = vmatprep.subr.bf16.mxu0 0
        %5266 = vmatpush1.bf16.msra.mxu0 0
        %5267 = vmatprep.subr.bf16.mxu0 0
        %5268 = vmatpush1.bf16.msra.mxu0 0
        %5269 = vmatprep.subr.bf16.mxu0 0
        %5270 = vmatpush1.bf16.msra.mxu0 0
        %5271 = vmatprep.subr.bf16.mxu0 0
        %5272 = vmatpush1.bf16.msra.mxu0 0
        %5273 = vmatprep.subr.bf16.mxu0 0
        %5274 = vmatpush1.bf16.msra.mxu0 0
        %5275 = vmatprep.subr.bf16.mxu0 0
        %5276 = vmatpush1.bf16.msra.mxu0 0
        %5277 = vmatprep.subr.bf16.mxu0 0
        %5278 = vmatpush1.bf16.msra.mxu0 0
        %5279 = vmatprep.subr.bf16.mxu0 0
        %5280 = vmatpush1.bf16.msra.mxu0 0
        %5281 = vmatprep.subr.bf16.mxu0 0
        %5282 = vmatpush1.bf16.msra.mxu0 0
        %5283 = vmatprep.subr.bf16.mxu0 0
        %5284 = vmatpush1.bf16.msra.mxu0 0
        %5285 = vmatprep.subr.bf16.mxu0 0
        %5286 = vmatpush1.bf16.msra.mxu0 0
        %5287 = vmatprep.subr.bf16.mxu0 0
        %5288 = vmatpush1.bf16.msra.mxu0 0
        %5289 = vmatprep.mubr.bf16.mxu0 0
        %5290 = vmatmul.mubr.bf16.gmra.mrb[0].mxu0 %v5255
        %v5291 = vpop.f32.mrb[0].mxu0
        %v5292 = vadd.f32 0.0, %v5291
        %v5293 = vpop.f32.mrb[0].mxu0
        %v5294 = vpop.f32.mrb[0].mxu0
        %v5295 = vadd.f32 0.0, %v5294
        %v5296 = vpop.f32.mrb[0].mxu0
        %5297 = vdwg.mxu0
        %v5298 = vadd.f32 %v3009, %v5292
        %v5299 = vadd.f32 %v3010, %v5295
        %s5300 = sadd.s32 %s770, 2
        %s5301 = sld [smem:[#allocation6 + %s5300]]
        %s5302 = sld [smem:[#allocation11 + %s5300]]
        %v5303 = vsel %vm773, %v5298, 0.0
        %5304 = vadd.xlane.f32.xlu0 %v5303
        %v5305 = vpop.xlane.xlu0 %5304
        %v5306 = vsel %vm773, %v5299, 0.0
        %5307 = vadd.xlane.f32.xlu0 %v5306
        %v5308 = vpop.xlane.xlu0 %5307
        %v5309 = vmul.f32 %v5305, %v780
        %v5310 = vmul.f32 %v5308, %v780
        %v5311 = vsub.f32 %v5298, %v5309
        %v5312 = vsub.f32 %v5299, %v5310
        %v5313 = vmul.f32 %v5311, %v5311
        %v5314 = vmul.f32 %v5312, %v5312
        %v5315 = vsel %vm773, %v5313, 0.0
        %5316 = vadd.xlane.f32.xlu0 %v5315
        %v5317 = vpop.xlane.xlu0 %5316
        %v5318 = vsel %vm773, %v5314, 0.0
        %5319 = vadd.xlane.f32.xlu0 %v5318
        %v5320 = vpop.xlane.xlu0 %5319
        %v5321 = vmul.f32 %v5317, %v793
        %v5322 = vmul.f32 %v5320, %v793
        %v5323 = vrsqrt.pop %v5321
        %v5324 = vmul.f32 %v5321, %v5323
        %vm5325 = vcmp.eq.f32.partialorder %v5321, inf
        %v5326 = vsel %vm5325, %v5321, %v5324
        %vm5327 = vcmp.eq.f32.partialorder %v5321, 0.0
        %v5328 = vand.u32 %v5321, 2147483648
        %v5329 = vsel %vm5327, %v5328, %v5326
        %v5330 = vrsqrt.pop %v5322
        %v5331 = vmul.f32 %v5322, %v5330
        %vm5332 = vcmp.eq.f32.partialorder %v5322, inf
        %v5333 = vsel %vm5332, %v5322, %v5331
        %vm5334 = vcmp.eq.f32.partialorder %v5322, 0.0
        %v5335 = vand.u32 %v5322, 2147483648
        %v5336 = vsel %vm5334, %v5335, %v5333
        %v5337 = vadd.f32 %v5329, 1e-06
        %v5338 = vadd.f32 %v5336, 1e-06
        %v5339 = vrcp.pop %v5337
        %v5340 = vrcp.pop %v5338
        %v5341 = vstv %s5301
        %v5342 = vmul.f32 %v5341, %v5311
        %v5343 = vmul.f32 %v5341, %v5312
        %v5344 = vmul.f32 %v5342, %v5339
        %v5345 = vmul.f32 %v5343, %v5340
        %v5346 = vstv %s5302
        %v5347 = vadd.f32 %v5344, %v5346
        %v5348 = vadd.f32 %v5345, %v5346
        %v5349 = vld [vmem:[%s729] sm:$0xf]
        %v5350 = vld [vmem:[%s729 + $0x4] sm:$0xf]
        %v5351 = vld [vmem:[%s729 + $0x8] sm:$0xf]
        %v5352 = vld [vmem:[%s729 + $0xc] sm:$0xf]
        %v5353 = vld [vmem:[%s729 + $0x10] sm:$0x1]
        %v5354 = vld [vmem:[%s734] sm:$0xf]
        %v5355 = vld [vmem:[%s734 + $0x4] sm:$0xf]
        %v5356 = vld [vmem:[%s734 + $0x8] sm:$0xf]
        %v5357 = vld [vmem:[%s734 + $0xc] sm:$0xf]
        %v5358 = vld [vmem:[%s734 + $0x10] sm:$0xf]
        %v5359 = vld [vmem:[%s734 + $0x14] sm:$0xf]
        %v5360 = vld [vmem:[%s734 + $0x18] sm:$0xf]
        %v5361 = vld [vmem:[%s734 + $0x1c] sm:$0xf]
        %v5362 = vld [vmem:[%s734 + $0x20] sm:$0x1]
        %v5363 = vpack.c.bf16 %v5348, %v5347
        %v5364 = vunpack.c.l.bf16 %v5353
        %v5365 = vlaneseq
        %v5366 = vshrl.u32 %v5365, 7
        %v5367 = vsub.s32 0, %v5366
        %v5368 = vrot.slane %v5364, %v5367
        %v5373 = vunpack.c.l.b16 %v5349
        %v5374 = vunpack.c.l.b16 %v5350
        %v5375 = vunpack.c.l.b16 %v5351
        %v5376 = vunpack.c.l.b16 %v5352
        %v5377 = vpack.c.b16 %v5374, %v5373
        %v5378 = vpack.c.b16 %v5376, %v5375
        %v5382 = vsel %vm773, %v5363, 0
        %5384 = vmatprep.subr.bf16.mxu0 0
        %5385 = vmatpush1.bf16.msra.mxu0 %v5377
        %5386 = vmatprep.subr.bf16.mxu0 0
        %5387 = vmatpush1.bf16.msra.mxu0 %v5378
        %5388 = vmatprep.subr.bf16.mxu0 0
        %5389 = vmatpush1.bf16.msra.mxu0 0
        %5390 = vmatprep.subr.bf16.mxu0 0
        %5391 = vmatpush1.bf16.msra.mxu0 0
        %5392 = vmatprep.subr.bf16.mxu0 0
        %5393 = vmatpush1.bf16.msra.mxu0 0
        %5394 = vmatprep.subr.bf16.mxu0 0
        %5395 = vmatpush1.bf16.msra.mxu0 0
        %5396 = vmatprep.subr.bf16.mxu0 0
        %5397 = vmatpush1.bf16.msra.mxu0 0
        %5398 = vmatprep.subr.bf16.mxu0 0
        %5399 = vmatpush1.bf16.msra.mxu0 0
        %5400 = vmatprep.subr.bf16.mxu0 0
        %5401 = vmatpush1.bf16.msra.mxu0 0
        %5402 = vmatprep.subr.bf16.mxu0 0
        %5403 = vmatpush1.bf16.msra.mxu0 0
        %5404 = vmatprep.subr.bf16.mxu0 0
        %5405 = vmatpush1.bf16.msra.mxu0 0
        %5406 = vmatprep.subr.bf16.mxu0 0
        %5407 = vmatpush1.bf16.msra.mxu0 0
        %5408 = vmatprep.subr.bf16.mxu0 0
        %5409 = vmatpush1.bf16.msra.mxu0 0
        %5410 = vmatprep.subr.bf16.mxu0 0
        %5411 = vmatpush1.bf16.msra.mxu0 0
        %5412 = vmatprep.subr.bf16.mxu0 0
        %5413 = vmatpush1.bf16.msra.mxu0 0
        %5414 = vmatprep.subr.bf16.mxu0 0
        %5415 = vmatpush1.bf16.msra.mxu0 0
        %5416 = vmatprep.mubr.bf16.mxu0 0
        %5417 = vmatmul.mubr.bf16.gmra.mrb[0].mxu0 %v5382
        %v5418 = vpop.f32.mrb[0].mxu0
        %v5419 = vadd.f32 %v5368, %v5418
        %v5420 = vpop.f32.mrb[0].mxu0
        %v5421 = vpop.f32.mrb[0].mxu0
        %v5422 = vadd.f32 %v5368, %v5421
        %v5423 = vpop.f32.mrb[0].mxu0
        %5424 = vdwg.mxu0
        %v5425 = vmax.f32 %v5419, 0.0
        %v5426 = vmax.f32 %v5422, 0.0
        %v5427 = vpack.c.bf16 %v5426, %v5425
        %v5428 = vunpack.c.l.bf16 %v5362
        %v5429 = vlaneseq
        %v5430 = vshrl.u32 %v5429, 7
        %v5431 = vsub.s32 0, %v5430
        %v5432 = vrot.slane %v5428, %v5431
        %v5441 = vunpack.c.l.b16 %v5354
        %v5442 = vunpack.c.l.b16 %v5355
        %v5443 = vunpack.c.l.b16 %v5356
        %v5444 = vunpack.c.l.b16 %v5357
        %v5445 = vunpack.c.l.b16 %v5358
        %v5446 = vunpack.c.l.b16 %v5359
        %v5447 = vunpack.c.l.b16 %v5360
        %v5448 = vunpack.c.l.b16 %v5361
        %v5449 = vpack.c.b16 %v5442, %v5441
        %v5450 = vpack.c.b16 %v5444, %v5443
        %v5451 = vpack.c.b16 %v5446, %v5445
        %v5452 = vpack.c.b16 %v5448, %v5447
        %vm5457 = vcmask 523264
        %v5459 = vsel %vm5457, %v5427, 0
        %5461 = vmatprep.subr.bf16.mxu0 0
        %5462 = vmatpush1.bf16.msra.mxu0 %v5449
        %5463 = vmatprep.subr.bf16.mxu0 0
        %5464 = vmatpush1.bf16.msra.mxu0 %v5450
        %5465 = vmatprep.subr.bf16.mxu0 0
        %5466 = vmatpush1.bf16.msra.mxu0 %v5451
        %5467 = vmatprep.subr.bf16.mxu0 0
        %5468 = vmatpush1.bf16.msra.mxu0 %v5452
        %5469 = vmatprep.subr.bf16.mxu0 0
        %5470 = vmatpush1.bf16.msra.mxu0 0
        %5471 = vmatprep.subr.bf16.mxu0 0
        %5472 = vmatpush1.bf16.msra.mxu0 0
        %5473 = vmatprep.subr.bf16.mxu0 0
        %5474 = vmatpush1.bf16.msra.mxu0 0
        %5475 = vmatprep.subr.bf16.mxu0 0
        %5476 = vmatpush1.bf16.msra.mxu0 0
        %5477 = vmatprep.subr.bf16.mxu0 0
        %5478 = vmatpush1.bf16.msra.mxu0 0
        %5479 = vmatprep.subr.bf16.mxu0 0
        %5480 = vmatpush1.bf16.msra.mxu0 0
        %5481 = vmatprep.subr.bf16.mxu0 0
        %5482 = vmatpush1.bf16.msra.mxu0 0
        %5483 = vmatprep.subr.bf16.mxu0 0
        %5484 = vmatpush1.bf16.msra.mxu0 0
        %5485 = vmatprep.subr.bf16.mxu0 0
        %5486 = vmatpush1.bf16.msra.mxu0 0
        %5487 = vmatprep.subr.bf16.mxu0 0
        %5488 = vmatpush1.bf16.msra.mxu0 0
        %5489 = vmatprep.subr.bf16.mxu0 0
        %5490 = vmatpush1.bf16.msra.mxu0 0
        %5491 = vmatprep.subr.bf16.mxu0 0
        %5492 = vmatpush1.bf16.msra.mxu0 0
        %5493 = vmatprep.mubr.bf16.mxu0 0
        %5494 = vmatmul.mubr.bf16.gmra.mrb[0].mxu0 %v5459
        %v5495 = vpop.f32.mrb[0].mxu0
        %v5496 = vadd.f32 %v5432, %v5495
        %v5497 = vpop.f32.mrb[0].mxu0
        %v5498 = vpop.f32.mrb[0].mxu0
        %v5499 = vadd.f32 %v5432, %v5498
        %v5500 = vpop.f32.mrb[0].mxu0
        %5501 = vdwg.mxu0
        %v5502 = vadd.f32 %v5298, %v5496
        %v5503 = vadd.f32 %v5299, %v5499
        %5504 = vst.msk [vmem:[#allocation2] sm:$0xff] %vm773, %v5502
        %5505 = vst.msk [vmem:[#allocation2 + $0x8] sm:$0xff] %vm773, %v5503
        %p5506 = scmp.eq.s32.totalorder %s36, 1
        // Predicated region
        $region105: #{tpu_custom_call.1} parent=75 // pred_check
          %p5507 = pneg %p5506
        $region106: #{tpu_custom_call.1} parent=75 // pred_check_branch
          %5509 = sbr.rel (%p5507) target = $region108
        $region107: #{tpu_custom_call.1} parent=75 // pred_region
          %s5510 = sld [smem:[#allocation12]]
          %s5511 = sld [smem:[#allocation12 + $0x1]]
          %v5512 = vsel %vm773, %v5502, 0.0
          %5513 = vadd.xlane.f32.xlu0 %v5512
          %v5514 = vpop.xlane.xlu0 %5513
          %v5515 = vsel %vm773, %v5503, 0.0
          %5516 = vadd.xlane.f32.xlu0 %v5515
          %v5517 = vpop.xlane.xlu0 %5516
          %v5518 = vmul.f32 %v5514, %v780
          %v5519 = vmul.f32 %v5517, %v780
          %v5520 = vsub.f32 %v5502, %v5518
          %v5521 = vsub.f32 %v5503, %v5519
          %v5522 = vmul.f32 %v5520, %v5520
          %v5523 = vmul.f32 %v5521, %v5521
          %v5524 = vsel %vm773, %v5522, 0.0
          %5525 = vadd.xlane.f32.xlu0 %v5524
          %v5526 = vpop.xlane.xlu0 %5525
          %v5527 = vsel %vm773, %v5523, 0.0
          %5528 = vadd.xlane.f32.xlu0 %v5527
          %v5529 = vpop.xlane.xlu0 %5528
          %v5530 = vmul.f32 %v5526, %v793
          %v5531 = vmul.f32 %v5529, %v793
          %v5532 = vrsqrt.pop %v5530
          %v5533 = vmul.f32 %v5530, %v5532
          %vm5534 = vcmp.eq.f32.partialorder %v5530, inf
          %v5535 = vsel %vm5534, %v5530, %v5533
          %vm5536 = vcmp.eq.f32.partialorder %v5530, 0.0
          %v5537 = vand.u32 %v5530, 2147483648
          %v5538 = vsel %vm5536, %v5537, %v5535
          %v5539 = vrsqrt.pop %v5531
          %v5540 = vmul.f32 %v5531, %v5539
          %vm5541 = vcmp.eq.f32.partialorder %v5531, inf
          %v5542 = vsel %vm5541, %v5531, %v5540
          %vm5543 = vcmp.eq.f32.partialorder %v5531, 0.0
          %v5544 = vand.u32 %v5531, 2147483648
          %v5545 = vsel %vm5543, %v5544, %v5542
          %v5546 = vadd.f32 %v5538, 1e-06
          %v5547 = vadd.f32 %v5545, 1e-06
          %v5548 = vrcp.pop %v5546
          %v5549 = vrcp.pop %v5547
          %v5550 = vstv %s5510
          %v5551 = vmul.f32 %v5550, %v5520
          %v5552 = vmul.f32 %v5550, %v5521
          %v5553 = vmul.f32 %v5551, %v5548
          %v5554 = vmul.f32 %v5552, %v5549
          %v5555 = vstv %s5511
          %v5556 = vadd.f32 %v5553, %v5555
          %v5557 = vadd.f32 %v5554, %v5555
          %5558 = vst.msk [vmem:[#allocation18] sm:$0xff] %vm773, %v5556
          %5559 = vst.msk [vmem:[#allocation18 + $0x8] sm:$0xff] %vm773, %v5557
        $region108: #{tpu_custom_call.1} parent=75 // pred_fallthru
          _
        // Predicated region
        $region109: #{tpu_custom_call.1} parent=75 // pred_check
          %p5560 = pneg %p410
        $region110: #{tpu_custom_call.1} parent=75 // pred_check_branch
          %5562 = sbr.rel (%p5560) target = $region112
        $region111: #{tpu_custom_call.1} parent=75 // pred_region
          %s5563 = smul.u32 2, %s35
          %s5565 = ssub.s32 256, 256
          %5566 = vsyncadd [#allocation8], %s5565
          %s5567 = smul.addr %s5563, 128
          %s5568 = scalar_lea.hbm %s14, %s5567
          %s5569 = sshll.u32 [#allocation18], 4
          %s5570 = int_to_ptr.vmem [resolvable:$true] %s5569
          %5575 = dma.vmem_to_hbm [thread:$0]  %s5570, 256, %s5568, [#allocation8], 128, 128, 8
        $region112: #{tpu_custom_call.1} parent=75 // pred_fallthru
          _
        // Predicated region
        $region113: #{tpu_custom_call.1} parent=75 // pred_check
          %p5576 = pneg %p410
        $region114: #{tpu_custom_call.1} parent=75 // pred_check_branch
          %5578 = sbr.rel (%p5576) target = $region116
        $region115: #{tpu_custom_call.1} parent=75 // pred_region
          %5579 = dma.done [#allocation8], 256
        $region116: #{tpu_custom_call.1} parent=75 // pred_fallthru
          _
      $region76: #{tpu_custom_call.1} parent=5 // pred_fallthru
        _
      %p5580 = scmp.le.s32.totalorder 2, %s26
      // Predicated region
      $region117: #{tpu_custom_call.1} parent=5 // pred_check
        %p5581 = pneg %p5580
      $region118: #{tpu_custom_call.1} parent=5 // pred_check_branch
        %5583 = sbr.rel (%p5581) target = $region120
      $region119: #{tpu_custom_call.1} parent=5 // pred_region
        %s5584 = ssub.s32 %s26, 2
      $region120: #{tpu_custom_call.1} parent=5 // pred_fallthru
        _
    $region6: #{tpu_custom_call.1} parent=1 // loop_footer
      %s30 = sadd.s32 1, %s26
    $region7: #{tpu_custom_call.1} parent=1 // loop_footer_branch
      %25 = sbr.rel target = $region3
    $region8: #{tpu_custom_call.1} parent=1 // loop_exit
      _
    %5585 = vsyncpa [#allocation7], 1
    %s5586 = scalar_lea.sflag [#allocation7], 1
    %5587 = vsyncpa %s5586, 1
    %5588 = vsyncpa [#allocation16], 1
    %5589 = vsyncpa [#allocation8], 1
    %s5590 = scalar_lea.sflag [#allocation8], 1
    %5591 = vsyncpa %s5590, 1
    %5592 = vsyncpa [#allocation9], 1
    %s5593 = scalar_lea.sflag [#allocation9], 1
    %5594 = vsyncpa %s5593, 1
    %5595 = vsyncpa [#allocation10], 1
    %s5596 = scalar_lea.sflag [#allocation10], 1
    %5597 = vsyncpa %s5596, 1
    %5598 = vsyncpa [#allocation13], 1

</llo_original>
